<compile_context>
chip_gen: v7x
topology: tpu7x:2x2x1
jax: 0.10.0
libtpu: 0.0.40
codegen_flags: <defaults>
</compile_context>

<pallas_src>
import functools

import jax
import jax.numpy as jnp
from jax.experimental import pallas as pl
from jax.experimental.pallas import tpu as pltpu

EPS = 1e-5  # PyTorch LayerNorm default eps


# ---------------------------------------------------------------- helpers ----
def _layernorm(x, gamma, beta):
    mu = jnp.mean(x, axis=-1, keepdims=True)
    var = jnp.mean((x - mu) ** 2, axis=-1, keepdims=True)
    return (x - mu) * jax.lax.rsqrt(var + EPS) * gamma + beta


def _gelu(x):
    # tanh-approximate GELU (tanh executes on the EUP slot).
    # ~1e-3 abs deviation from nn.GELU()'s exact erf form.
    c = 0.7978845608028654  # sqrt(2/pi)
    return 0.5 * x * (1.0 + jnp.tanh(c * (x + 0.044715 * x * x * x)))


def _multihead_attention(q, k, v, num_heads):
    """Scaled-dot-product MHA for ONE batch element.

    q: (Lq, D), k/v: (Lk, D). Returns (Lq, D). num_heads is a static Python
    int -> the head loop unrolls at trace time.
    """
    d = q.shape[-1]
    hd = d // num_heads
    scale = 1.0 / float(hd) ** 0.5
    heads = []
    for h in range(num_heads):
        qh = q[:, h * hd:(h + 1) * hd]
        kh = k[:, h * hd:(h + 1) * hd]
        vh = v[:, h * hd:(h + 1) * hd]
        s = jax.lax.dot_general(qh, kh, (((1,), (1,)), ((), ())),
                                preferred_element_type=jnp.float32) * scale
        s = s - jnp.max(s, axis=-1, keepdims=True)
        p = jnp.exp(s)
        p = p * pl.reciprocal(jnp.sum(p, axis=-1, keepdims=True), approx=True)
        heads.append(jnp.dot(p, vh, preferred_element_type=jnp.float32))
    return jnp.concatenate(heads, axis=-1)


def _encoder_layer(q_raw, Q, K, V, num_heads,
                   wo, w1, b1, w2, b2, ln1w, ln1b, ln2w, ln2b):
    """MHA + AddNorm + FFN(GELU) + AddNorm on one batch element's rows."""
    attn = _multihead_attention(Q, K, V, num_heads)
    attn = jnp.dot(attn, wo, preferred_element_type=jnp.float32)
    y = _layernorm(q_raw + attn, ln1w, ln1b)
    h = _gelu(jnp.dot(y, w1, preferred_element_type=jnp.float32) + b1)
    ffn = jnp.dot(h, w2, preferred_element_type=jnp.float32) + b2
    return _layernorm(y + ffn, ln2w, ln2b)


# ----------------------------------------------------------------- kernel ----
def hmcan_fused_kernel(left_ref, right_ref, pe_ref, ing_ref, inb_ref,
                       lwqkv_ref, lwo_ref, lw1_ref, lb1_ref, lw2_ref, lb2_ref,
                       lln1w_ref, lln1b_ref, lln2w_ref, lln2b_ref,
                       rwq_ref, rwkv_ref, rwo_ref, rw1_ref, rb1_ref, rw2_ref,
                       rb2_ref, rln1w_ref, rln1b_ref, rln2w_ref, rln2b_ref,
                       out_ref, *, left_heads, right_heads):
    # Squeezed batch dim: left_ref (Ll, D), right_ref (Lr, D), out_ref (1, 2D)
    d = left_ref.shape[-1]

    # ---- input LayerNorm + positional encoding (left branch only) ----------
    xl = left_ref[...].astype(jnp.float32)                       # (Ll, d)
    xl = _layernorm(xl, ing_ref[...], inb_ref[...]) + pe_ref[...]

    # ---- left contextual transformer (only last layer matters) -------------
    qkv = jnp.dot(xl, lwqkv_ref[...], preferred_element_type=jnp.float32)
    left_out = _encoder_layer(
        xl, qkv[:, :d], qkv[:, d:2 * d], qkv[:, 2 * d:], left_heads,
        lwo_ref[...], lw1_ref[...], lb1_ref[...], lw2_ref[...], lb2_ref[...],
        lln1w_ref[...], lln1b_ref[...], lln2w_ref[...], lln2b_ref[...])
    left_pooled = jnp.mean(left_out, axis=0, keepdims=True)       # (1, d)

    # ---- right contextual transformer: q = raw right, k/v = left_out -------
    qr = right_ref[...].astype(jnp.float32)                       # (Lr, d)
    Qr = jnp.dot(qr, rwq_ref[...], preferred_element_type=jnp.float32)
    kv = jnp.dot(left_out, rwkv_ref[...], preferred_element_type=jnp.float32)
    right_out = _encoder_layer(
        qr, Qr, kv[:, :d], kv[:, d:], right_heads,
        rwo_ref[...], rw1_ref[...], rb1_ref[...], rw2_ref[...], rb2_ref[...],
        rln1w_ref[...], rln1b_ref[...], rln2w_ref[...], rln2b_ref[...])
    right_pooled = jnp.mean(right_out, axis=0, keepdims=True)     # (1, d)

    out_ref[...] = jnp.concatenate([left_pooled, right_pooled],
                                   axis=-1).astype(out_ref.dtype)


# ---------------------------------------------------------------- wrapper ----
def text_image_transformer(params, left_features, right_features,
                           left_heads, right_heads):
    B, Ll, D = left_features.shape
    _, Lr, _ = right_features.shape

    # Only the LAST layer of each encoder contributes to the output (faknow's
    # _TransformerEncoder overwrites `sources` every iteration); skip the rest.
    lp = params["left"][-1]
    rp = params["right"][-1]
    lwqkv = jnp.concatenate([lp["wq"], lp["wk"], lp["wv"]], axis=1)  # (D, 3D)
    rwkv = jnp.concatenate([rp["wk"], rp["wv"]], axis=1)             # (D, 2D)
    Hf = lp["w1"].shape[1]
    Hfr = rp["w1"].shape[1]

    kernel = functools.partial(hmcan_fused_kernel,
                               left_heads=left_heads, right_heads=right_heads)

    # Activations: one batch element per grid step (batch dim squeezed).
    def act(L):
        return pl.BlockSpec((None, L, D), lambda b: (b, 0, 0))

    # Weights / PE / LN params: full array, constant index map -> DMA'd once,
    # VMEM-resident across the whole batch loop.
    def wgt(r, c):
        return pl.BlockSpec((r, c), lambda b: (0, 0))

    in_specs = [
        act(Ll),                                              # left features
        act(Lr),                                              # right features
        wgt(Ll, D),                                           # positional enc.
        wgt(1, D), wgt(1, D),                                 # input LN g / b
        wgt(D, 3 * D), wgt(D, D),                             # left W_qkv, W_o
        wgt(D, Hf), wgt(1, Hf), wgt(Hf, D), wgt(1, D),        # left FFN
        wgt(1, D), wgt(1, D), wgt(1, D), wgt(1, D),           # left LN1 / LN2
        wgt(D, D), wgt(D, 2 * D), wgt(D, D),                  # right Wq, Wkv, Wo
        wgt(D, Hfr), wgt(1, Hfr), wgt(Hfr, D), wgt(1, D),     # right FFN
        wgt(1, D), wgt(1, D), wgt(1, D), wgt(1, D),           # right LN1 / LN2
    ]

    out = pl.pallas_call(
        kernel,
        out_shape=jax.ShapeDtypeStruct((B, 1, 2 * D), jnp.float32),
        grid=(B,),
        in_specs=in_specs,
        out_specs=pl.BlockSpec((None, 1, 2 * D), lambda b: (b, 0, 0)),
        compiler_params=pltpu.CompilerParams(
            dimension_semantics=("parallel",)),
    )(left_features, right_features, params["pe"][:Ll],
      params["in_gamma"], params["in_beta"],
      lwqkv, lp["wo"], lp["w1"], lp["b1"], lp["w2"], lp["b2"],
      lp["ln1w"], lp["ln1b"], lp["ln2w"], lp["ln2b"],
      rp["wq"], rwkv, rp["wo"], rp["w1"], rp["b1"], rp["w2"], rp["b2"],
      rp["ln1w"], rp["ln1b"], rp["ln2w"], rp["ln2b"])
    return out.reshape(B, 2 * D)


# ----------------------------------------------------------- param helpers ---
def sinusoidal_pe(max_len, d):
    # d2l / faknow PositionalEncoding table
    pos = jnp.arange(max_len, dtype=jnp.float32)[:, None]
    div = jnp.power(10000.0, jnp.arange(0, d, 2, dtype=jnp.float32) / d)
    X = pos / div
    pe = jnp.zeros((max_len, d), dtype=jnp.float32)
    pe = pe.at[:, 0::2].set(jnp.sin(X))
    pe = pe.at[:, 1::2].set(jnp.cos(X))
    return pe


def init_layer_params(key, d, ffn_hidden):
    ks = jax.random.split(key, 6)
    s = 0.05
    return {
        "wq": jax.random.normal(ks[0], (d, d), jnp.float32) * s,
        "wk": jax.random.normal(ks[1], (d, d), jnp.float32) * s,
        "wv": jax.random.normal(ks[2], (d, d), jnp.float32) * s,
        "wo": jax.random.normal(ks[3], (d, d), jnp.float32) * s,
        "w1": jax.random.normal(ks[4], (d, ffn_hidden), jnp.float32) * s,
        "b1": jnp.zeros((1, ffn_hidden), jnp.float32),
        "w2": jax.random.normal(ks[5], (ffn_hidden, d), jnp.float32) * s,
        "b2": jnp.zeros((1, d), jnp.float32),
        "ln1w": jnp.ones((1, d), jnp.float32),
        "ln1b": jnp.zeros((1, d), jnp.float32),
        "ln2w": jnp.ones((1, d), jnp.float32),
        "ln2b": jnp.zeros((1, d), jnp.float32),
    }


def init_params(key, left_layers, right_layers, d):
    keys = jax.random.split(key, left_layers + right_layers)
    return {
        "in_gamma": jnp.ones((1, d), jnp.float32),
        "in_beta": jnp.zeros((1, d), jnp.float32),
        "pe": sinusoidal_pe(1000, d),
        "left": [init_layer_params(keys[i], d, d) for i in range(left_layers)],
        "right": [init_layer_params(keys[left_layers + i], d, d)
                  for i in range(right_layers)],
    }


# ------------------------------------------------------------------- main ----
if __name__ == "__main__":
    B, L, D = 2, 8, 32
    LEFT_LAYERS, LEFT_HEADS = 2, 4
    RIGHT_LAYERS, RIGHT_HEADS = 2, 4

    root = jax.random.PRNGKey(0)
    k_param, k_left, k_right = jax.random.split(root, 3)

    params = init_params(k_param, LEFT_LAYERS, RIGHT_LAYERS, D)
    left_features = jax.random.normal(k_left, (B, L, D), jnp.float32)
    right_features = jax.random.normal(k_right, (B, L, D), jnp.float32)

    forward = jax.jit(text_image_transformer, static_argnums=(3, 4))
    out = forward(params, left_features, right_features,
                  LEFT_HEADS, RIGHT_HEADS)
    out = jax.block_until_ready(out)

    assert out.shape == (B, 2 * D), out.shape
    assert bool(jnp.all(jnp.isfinite(out)))
    print("KERNEL_OK")
</pallas_src>

<mosaic_0001>
module attributes {stable_mosaic.version = 11 : i64} {
  func.func @hmcan_fused_kernel(%arg0: i32, %arg1: memref<1x8x32xf32, #tpu.memory_space<vmem>>, %arg2: memref<1x8x32xf32, #tpu.memory_space<vmem>>, %arg3: memref<8x32xf32, #tpu.memory_space<vmem>>, %arg4: memref<1x32xf32, #tpu.memory_space<vmem>>, %arg5: memref<1x32xf32, #tpu.memory_space<vmem>>, %arg6: memref<32x96xf32, #tpu.memory_space<vmem>>, %arg7: memref<32x32xf32, #tpu.memory_space<vmem>>, %arg8: memref<32x32xf32, #tpu.memory_space<vmem>>, %arg9: memref<1x32xf32, #tpu.memory_space<vmem>>, %arg10: memref<32x32xf32, #tpu.memory_space<vmem>>, %arg11: memref<1x32xf32, #tpu.memory_space<vmem>>, %arg12: memref<1x32xf32, #tpu.memory_space<vmem>>, %arg13: memref<1x32xf32, #tpu.memory_space<vmem>>, %arg14: memref<1x32xf32, #tpu.memory_space<vmem>>, %arg15: memref<1x32xf32, #tpu.memory_space<vmem>>, %arg16: memref<32x32xf32, #tpu.memory_space<vmem>>, %arg17: memref<32x64xf32, #tpu.memory_space<vmem>>, %arg18: memref<32x32xf32, #tpu.memory_space<vmem>>, %arg19: memref<32x32xf32, #tpu.memory_space<vmem>>, %arg20: memref<1x32xf32, #tpu.memory_space<vmem>>, %arg21: memref<32x32xf32, #tpu.memory_space<vmem>>, %arg22: memref<1x32xf32, #tpu.memory_space<vmem>>, %arg23: memref<1x32xf32, #tpu.memory_space<vmem>>, %arg24: memref<1x32xf32, #tpu.memory_space<vmem>>, %arg25: memref<1x32xf32, #tpu.memory_space<vmem>>, %arg26: memref<1x32xf32, #tpu.memory_space<vmem>>, %arg27: memref<1x1x64xf32, #tpu.memory_space<vmem>>) attributes {dimension_semantics = [#tpu.dimension_semantics<parallel>], iteration_bounds = array<i64: 2>, scalar_prefetch = 0 : i64, scratch_operands = 0 : i64, tpu.core_type = #tpu.core_type<tc>, window_params = [{transform_indices = @transform_0, window_bounds = array<i64: 1, 8, 32>}, {transform_indices = @transform_1, window_bounds = array<i64: 1, 8, 32>}, {pipeline_mode = #tpu.pipeline_mode<synchronous>, transform_indices = @transform_2, window_bounds = array<i64: 8, 32>}, {pipeline_mode = #tpu.pipeline_mode<synchronous>, transform_indices = @transform_3, window_bounds = array<i64: 1, 32>}, {pipeline_mode = #tpu.pipeline_mode<synchronous>, transform_indices = @transform_4, window_bounds = array<i64: 1, 32>}, {pipeline_mode = #tpu.pipeline_mode<synchronous>, transform_indices = @transform_5, window_bounds = array<i64: 32, 96>}, {pipeline_mode = #tpu.pipeline_mode<synchronous>, transform_indices = @transform_6, window_bounds = array<i64: 32, 32>}, {pipeline_mode = #tpu.pipeline_mode<synchronous>, transform_indices = @transform_7, window_bounds = array<i64: 32, 32>}, {pipeline_mode = #tpu.pipeline_mode<synchronous>, transform_indices = @transform_8, window_bounds = array<i64: 1, 32>}, {pipeline_mode = #tpu.pipeline_mode<synchronous>, transform_indices = @transform_9, window_bounds = array<i64: 32, 32>}, {pipeline_mode = #tpu.pipeline_mode<synchronous>, transform_indices = @transform_10, window_bounds = array<i64: 1, 32>}, {pipeline_mode = #tpu.pipeline_mode<synchronous>, transform_indices = @transform_11, window_bounds = array<i64: 1, 32>}, {pipeline_mode = #tpu.pipeline_mode<synchronous>, transform_indices = @transform_12, window_bounds = array<i64: 1, 32>}, {pipeline_mode = #tpu.pipeline_mode<synchronous>, transform_indices = @transform_13, window_bounds = array<i64: 1, 32>}, {pipeline_mode = #tpu.pipeline_mode<synchronous>, transform_indices = @transform_14, window_bounds = array<i64: 1, 32>}, {pipeline_mode = #tpu.pipeline_mode<synchronous>, transform_indices = @transform_15, window_bounds = array<i64: 32, 32>}, {pipeline_mode = #tpu.pipeline_mode<synchronous>, transform_indices = @transform_16, window_bounds = array<i64: 32, 64>}, {pipeline_mode = #tpu.pipeline_mode<synchronous>, transform_indices = @transform_17, window_bounds = array<i64: 32, 32>}, {pipeline_mode = #tpu.pipeline_mode<synchronous>, transform_indices = @transform_18, window_bounds = array<i64: 32, 32>}, {pipeline_mode = #tpu.pipeline_mode<synchronous>, transform_indices = @transform_19, window_bounds = array<i64: 1, 32>}, {pipeline_mode = #tpu.pipeline_mode<synchronous>, transform_indices = @transform_20, window_bounds = array<i64: 32, 32>}, {pipeline_mode = #tpu.pipeline_mode<synchronous>, transform_indices = @transform_21, window_bounds = array<i64: 1, 32>}, {pipeline_mode = #tpu.pipeline_mode<synchronous>, transform_indices = @transform_22, window_bounds = array<i64: 1, 32>}, {pipeline_mode = #tpu.pipeline_mode<synchronous>, transform_indices = @transform_23, window_bounds = array<i64: 1, 32>}, {pipeline_mode = #tpu.pipeline_mode<synchronous>, transform_indices = @transform_24, window_bounds = array<i64: 1, 32>}, {pipeline_mode = #tpu.pipeline_mode<synchronous>, transform_indices = @transform_25, window_bounds = array<i64: 1, 32>}, {transform_indices = @transform_26, window_bounds = array<i64: 1, 1, 64>}]} {
    %c0 = arith.constant 0 : index
    %c0_0 = arith.constant 0 : index
    %c0_1 = arith.constant 0 : index
    %0 = vector.load %arg1[%c0, %c0_0, %c0_1] : memref<1x8x32xf32, #tpu.memory_space<vmem>>, vector<1x8x32xf32>
    %1 = vector.shape_cast %0 : vector<1x8x32xf32> to vector<8x32xf32>
    %c0_2 = arith.constant 0 : index
    %c0_3 = arith.constant 0 : index
    %2 = vector.load %arg4[%c0_2, %c0_3] : memref<1x32xf32, #tpu.memory_space<vmem>>, vector<1x32xf32>
    %c0_4 = arith.constant 0 : index
    %c0_5 = arith.constant 0 : index
    %3 = vector.load %arg5[%c0_4, %c0_5] : memref<1x32xf32, #tpu.memory_space<vmem>>, vector<1x32xf32>
    %cst = arith.constant dense<0.000000e+00> : vector<8xf32>
    %4 = vector.multi_reduction <add>, %1, %cst [1] : vector<8x32xf32> to vector<8xf32>
    %5 = vector.shape_cast %4 : vector<8xf32> to vector<8x1xf32>
    %cst_6 = arith.constant 3.200000e+01 : f32
    %6 = vector.broadcast %cst_6 : f32 to vector<8x1xf32>
    %7 = arith.divf %5, %6 : vector<8x1xf32>
    %8 = vector.broadcast %7 : vector<8x1xf32> to vector<8x32xf32>
    %9 = arith.subf %1, %8 : vector<8x32xf32>
    %10 = arith.mulf %9, %9 : vector<8x32xf32>
    %cst_7 = arith.constant dense<0.000000e+00> : vector<8xf32>
    %11 = vector.multi_reduction <add>, %10, %cst_7 [1] : vector<8x32xf32> to vector<8xf32>
    %12 = vector.shape_cast %11 : vector<8xf32> to vector<8x1xf32>
    %cst_8 = arith.constant 3.200000e+01 : f32
    %13 = vector.broadcast %cst_8 : f32 to vector<8x1xf32>
    %14 = arith.divf %12, %13 : vector<8x1xf32>
    %15 = vector.broadcast %7 : vector<8x1xf32> to vector<8x32xf32>
    %16 = arith.subf %1, %15 : vector<8x32xf32>
    %cst_9 = arith.constant 9.99999974E-6 : f32
    %17 = vector.broadcast %cst_9 : f32 to vector<8x1xf32>
    %18 = arith.addf %14, %17 : vector<8x1xf32>
    %19 = math.rsqrt %18 : vector<8x1xf32>
    %20 = vector.broadcast %19 : vector<8x1xf32> to vector<8x32xf32>
    %21 = arith.mulf %16, %20 : vector<8x32xf32>
    %22 = vector.broadcast %2 : vector<1x32xf32> to vector<8x32xf32>
    %23 = arith.mulf %21, %22 : vector<8x32xf32>
    %24 = vector.broadcast %3 : vector<1x32xf32> to vector<8x32xf32>
    %25 = arith.addf %23, %24 : vector<8x32xf32>
    %c0_10 = arith.constant 0 : index
    %c0_11 = arith.constant 0 : index
    %26 = vector.load %arg3[%c0_10, %c0_11] : memref<8x32xf32, #tpu.memory_space<vmem>>, vector<8x32xf32>
    %27 = arith.addf %25, %26 : vector<8x32xf32>
    %c0_12 = arith.constant 0 : index
    %c0_13 = arith.constant 0 : index
    %28 = vector.load %arg6[%c0_12, %c0_13] : memref<32x96xf32, #tpu.memory_space<vmem>>, vector<32x96xf32>
    %cst_14 = arith.constant dense<0.000000e+00> : vector<8x96xf32>
    %29 = tpu.matmul %27, %28, %cst_14 {dimension_numbers = #tpu.dot_dimension_numbers<[1], [0], [0], [1], [0, 0, 1, 1], [], []>} : vector<8x32xf32>, vector<32x96xf32>, vector<8x96xf32> -> vector<8x96xf32>
    %30 = vector.extract_strided_slice %29 {offsets = [0, 0], sizes = [8, 32], strides = [1, 1]} : vector<8x96xf32> to vector<8x32xf32>
    %31 = vector.extract_strided_slice %29 {offsets = [0, 32], sizes = [8, 32], strides = [1, 1]} : vector<8x96xf32> to vector<8x32xf32>
    %32 = vector.extract_strided_slice %29 {offsets = [0, 64], sizes = [8, 32], strides = [1, 1]} : vector<8x96xf32> to vector<8x32xf32>
    %c0_15 = arith.constant 0 : index
    %c0_16 = arith.constant 0 : index
    %33 = vector.load %arg7[%c0_15, %c0_16] : memref<32x32xf32, #tpu.memory_space<vmem>>, vector<32x32xf32>
    %c0_17 = arith.constant 0 : index
    %c0_18 = arith.constant 0 : index
    %34 = vector.load %arg8[%c0_17, %c0_18] : memref<32x32xf32, #tpu.memory_space<vmem>>, vector<32x32xf32>
    %c0_19 = arith.constant 0 : index
    %c0_20 = arith.constant 0 : index
    %35 = vector.load %arg9[%c0_19, %c0_20] : memref<1x32xf32, #tpu.memory_space<vmem>>, vector<1x32xf32>
    %c0_21 = arith.constant 0 : index
    %c0_22 = arith.constant 0 : index
    %36 = vector.load %arg10[%c0_21, %c0_22] : memref<32x32xf32, #tpu.memory_space<vmem>>, vector<32x32xf32>
    %c0_23 = arith.constant 0 : index
    %c0_24 = arith.constant 0 : index
    %37 = vector.load %arg11[%c0_23, %c0_24] : memref<1x32xf32, #tpu.memory_space<vmem>>, vector<1x32xf32>
    %c0_25 = arith.constant 0 : index
    %c0_26 = arith.constant 0 : index
    %38 = vector.load %arg12[%c0_25, %c0_26] : memref<1x32xf32, #tpu.memory_space<vmem>>, vector<1x32xf32>
    %c0_27 = arith.constant 0 : index
    %c0_28 = arith.constant 0 : index
    %39 = vector.load %arg13[%c0_27, %c0_28] : memref<1x32xf32, #tpu.memory_space<vmem>>, vector<1x32xf32>
    %c0_29 = arith.constant 0 : index
    %c0_30 = arith.constant 0 : index
    %40 = vector.load %arg14[%c0_29, %c0_30] : memref<1x32xf32, #tpu.memory_space<vmem>>, vector<1x32xf32>
    %c0_31 = arith.constant 0 : index
    %c0_32 = arith.constant 0 : index
    %41 = vector.load %arg15[%c0_31, %c0_32] : memref<1x32xf32, #tpu.memory_space<vmem>>, vector<1x32xf32>
    %42 = vector.extract_strided_slice %30 {offsets = [0, 0], sizes = [8, 8], strides = [1, 1]} : vector<8x32xf32> to vector<8x8xf32>
    %43 = vector.extract_strided_slice %31 {offsets = [0, 0], sizes = [8, 8], strides = [1, 1]} : vector<8x32xf32> to vector<8x8xf32>
    %44 = vector.extract_strided_slice %32 {offsets = [0, 0], sizes = [8, 8], strides = [1, 1]} : vector<8x32xf32> to vector<8x8xf32>
    %cst_33 = arith.constant dense<0.000000e+00> : vector<8x8xf32>
    %45 = tpu.matmul %42, %43, %cst_33 {dimension_numbers = #tpu.dot_dimension_numbers<[1], [1], [0], [0], [0, 0, 1, 0], [], []>} : vector<8x8xf32>, vector<8x8xf32>, vector<8x8xf32> -> vector<8x8xf32>
    %cst_34 = arith.constant 0.353553385 : f32
    %46 = vector.broadcast %cst_34 : f32 to vector<8x8xf32>
    %47 = arith.mulf %45, %46 : vector<8x8xf32>
    %cst_35 = arith.constant dense<0xFF800000> : vector<8xf32>
    %48 = vector.multi_reduction <maximumf>, %47, %cst_35 [1] : vector<8x8xf32> to vector<8xf32>
    %49 = vector.shape_cast %48 : vector<8xf32> to vector<8x1xf32>
    %50 = vector.broadcast %49 : vector<8x1xf32> to vector<8x8xf32>
    %51 = arith.subf %47, %50 : vector<8x8xf32>
    %52 = math.exp %51 : vector<8x8xf32>
    %cst_36 = arith.constant dense<0.000000e+00> : vector<8xf32>
    %53 = vector.multi_reduction <add>, %52, %cst_36 [1] : vector<8x8xf32> to vector<8xf32>
    %54 = vector.shape_cast %53 : vector<8xf32> to vector<8x1xf32>
    %55 = tpu.reciprocal %54 {approx = true} : vector<8x1xf32> -> vector<8x1xf32>
    %56 = vector.broadcast %55 : vector<8x1xf32> to vector<8x8xf32>
    %57 = arith.mulf %52, %56 : vector<8x8xf32>
    %cst_37 = arith.constant dense<0.000000e+00> : vector<8x8xf32>
    %58 = tpu.matmul %57, %44, %cst_37 {dimension_numbers = #tpu.dot_dimension_numbers<[1], [0], [0], [1], [0, 0, 1, 1], [], []>} : vector<8x8xf32>, vector<8x8xf32>, vector<8x8xf32> -> vector<8x8xf32>
    %59 = vector.extract_strided_slice %30 {offsets = [0, 8], sizes = [8, 8], strides = [1, 1]} : vector<8x32xf32> to vector<8x8xf32>
    %60 = vector.extract_strided_slice %31 {offsets = [0, 8], sizes = [8, 8], strides = [1, 1]} : vector<8x32xf32> to vector<8x8xf32>
    %61 = vector.extract_strided_slice %32 {offsets = [0, 8], sizes = [8, 8], strides = [1, 1]} : vector<8x32xf32> to vector<8x8xf32>
    %cst_38 = arith.constant dense<0.000000e+00> : vector<8x8xf32>
    %62 = tpu.matmul %59, %60, %cst_38 {dimension_numbers = #tpu.dot_dimension_numbers<[1], [1], [0], [0], [0, 0, 1, 0], [], []>} : vector<8x8xf32>, vector<8x8xf32>, vector<8x8xf32> -> vector<8x8xf32>
    %cst_39 = arith.constant 0.353553385 : f32
    %63 = vector.broadcast %cst_39 : f32 to vector<8x8xf32>
    %64 = arith.mulf %62, %63 : vector<8x8xf32>
    %cst_40 = arith.constant dense<0xFF800000> : vector<8xf32>
    %65 = vector.multi_reduction <maximumf>, %64, %cst_40 [1] : vector<8x8xf32> to vector<8xf32>
    %66 = vector.shape_cast %65 : vector<8xf32> to vector<8x1xf32>
    %67 = vector.broadcast %66 : vector<8x1xf32> to vector<8x8xf32>
    %68 = arith.subf %64, %67 : vector<8x8xf32>
    %69 = math.exp %68 : vector<8x8xf32>
    %cst_41 = arith.constant dense<0.000000e+00> : vector<8xf32>
    %70 = vector.multi_reduction <add>, %69, %cst_41 [1] : vector<8x8xf32> to vector<8xf32>
    %71 = vector.shape_cast %70 : vector<8xf32> to vector<8x1xf32>
    %72 = tpu.reciprocal %71 {approx = true} : vector<8x1xf32> -> vector<8x1xf32>
    %73 = vector.broadcast %72 : vector<8x1xf32> to vector<8x8xf32>
    %74 = arith.mulf %69, %73 : vector<8x8xf32>
    %cst_42 = arith.constant dense<0.000000e+00> : vector<8x8xf32>
    %75 = tpu.matmul %74, %61, %cst_42 {dimension_numbers = #tpu.dot_dimension_numbers<[1], [0], [0], [1], [0, 0, 1, 1], [], []>} : vector<8x8xf32>, vector<8x8xf32>, vector<8x8xf32> -> vector<8x8xf32>
    %76 = vector.extract_strided_slice %30 {offsets = [0, 16], sizes = [8, 8], strides = [1, 1]} : vector<8x32xf32> to vector<8x8xf32>
    %77 = vector.extract_strided_slice %31 {offsets = [0, 16], sizes = [8, 8], strides = [1, 1]} : vector<8x32xf32> to vector<8x8xf32>
    %78 = vector.extract_strided_slice %32 {offsets = [0, 16], sizes = [8, 8], strides = [1, 1]} : vector<8x32xf32> to vector<8x8xf32>
    %cst_43 = arith.constant dense<0.000000e+00> : vector<8x8xf32>
    %79 = tpu.matmul %76, %77, %cst_43 {dimension_numbers = #tpu.dot_dimension_numbers<[1], [1], [0], [0], [0, 0, 1, 0], [], []>} : vector<8x8xf32>, vector<8x8xf32>, vector<8x8xf32> -> vector<8x8xf32>
    %cst_44 = arith.constant 0.353553385 : f32
    %80 = vector.broadcast %cst_44 : f32 to vector<8x8xf32>
    %81 = arith.mulf %79, %80 : vector<8x8xf32>
    %cst_45 = arith.constant dense<0xFF800000> : vector<8xf32>
    %82 = vector.multi_reduction <maximumf>, %81, %cst_45 [1] : vector<8x8xf32> to vector<8xf32>
    %83 = vector.shape_cast %82 : vector<8xf32> to vector<8x1xf32>
    %84 = vector.broadcast %83 : vector<8x1xf32> to vector<8x8xf32>
    %85 = arith.subf %81, %84 : vector<8x8xf32>
    %86 = math.exp %85 : vector<8x8xf32>
    %cst_46 = arith.constant dense<0.000000e+00> : vector<8xf32>
    %87 = vector.multi_reduction <add>, %86, %cst_46 [1] : vector<8x8xf32> to vector<8xf32>
    %88 = vector.shape_cast %87 : vector<8xf32> to vector<8x1xf32>
    %89 = tpu.reciprocal %88 {approx = true} : vector<8x1xf32> -> vector<8x1xf32>
    %90 = vector.broadcast %89 : vector<8x1xf32> to vector<8x8xf32>
    %91 = arith.mulf %86, %90 : vector<8x8xf32>
    %cst_47 = arith.constant dense<0.000000e+00> : vector<8x8xf32>
    %92 = tpu.matmul %91, %78, %cst_47 {dimension_numbers = #tpu.dot_dimension_numbers<[1], [0], [0], [1], [0, 0, 1, 1], [], []>} : vector<8x8xf32>, vector<8x8xf32>, vector<8x8xf32> -> vector<8x8xf32>
    %93 = vector.extract_strided_slice %30 {offsets = [0, 24], sizes = [8, 8], strides = [1, 1]} : vector<8x32xf32> to vector<8x8xf32>
    %94 = vector.extract_strided_slice %31 {offsets = [0, 24], sizes = [8, 8], strides = [1, 1]} : vector<8x32xf32> to vector<8x8xf32>
    %95 = vector.extract_strided_slice %32 {offsets = [0, 24], sizes = [8, 8], strides = [1, 1]} : vector<8x32xf32> to vector<8x8xf32>
    %cst_48 = arith.constant dense<0.000000e+00> : vector<8x8xf32>
    %96 = tpu.matmul %93, %94, %cst_48 {dimension_numbers = #tpu.dot_dimension_numbers<[1], [1], [0], [0], [0, 0, 1, 0], [], []>} : vector<8x8xf32>, vector<8x8xf32>, vector<8x8xf32> -> vector<8x8xf32>
    %cst_49 = arith.constant 0.353553385 : f32
    %97 = vector.broadcast %cst_49 : f32 to vector<8x8xf32>
    %98 = arith.mulf %96, %97 : vector<8x8xf32>
    %cst_50 = arith.constant dense<0xFF800000> : vector<8xf32>
    %99 = vector.multi_reduction <maximumf>, %98, %cst_50 [1] : vector<8x8xf32> to vector<8xf32>
    %100 = vector.shape_cast %99 : vector<8xf32> to vector<8x1xf32>
    %101 = vector.broadcast %100 : vector<8x1xf32> to vector<8x8xf32>
    %102 = arith.subf %98, %101 : vector<8x8xf32>
    %103 = math.exp %102 : vector<8x8xf32>
    %cst_51 = arith.constant dense<0.000000e+00> : vector<8xf32>
    %104 = vector.multi_reduction <add>, %103, %cst_51 [1] : vector<8x8xf32> to vector<8xf32>
    %105 = vector.shape_cast %104 : vector<8xf32> to vector<8x1xf32>
    %106 = tpu.reciprocal %105 {approx = true} : vector<8x1xf32> -> vector<8x1xf32>
    %107 = vector.broadcast %106 : vector<8x1xf32> to vector<8x8xf32>
    %108 = arith.mulf %103, %107 : vector<8x8xf32>
    %cst_52 = arith.constant dense<0.000000e+00> : vector<8x8xf32>
    %109 = tpu.matmul %108, %95, %cst_52 {dimension_numbers = #tpu.dot_dimension_numbers<[1], [0], [0], [1], [0, 0, 1, 1], [], []>} : vector<8x8xf32>, vector<8x8xf32>, vector<8x8xf32> -> vector<8x8xf32>
    %110 = tpu.concatenate %58, %75, %92, %109 in 1 : vector<8x8xf32>, vector<8x8xf32>, vector<8x8xf32>, vector<8x8xf32> -> vector<8x32xf32>
    %cst_53 = arith.constant dense<0.000000e+00> : vector<8x32xf32>
    %111 = tpu.matmul %110, %33, %cst_53 {dimension_numbers = #tpu.dot_dimension_numbers<[1], [0], [0], [1], [0, 0, 1, 1], [], []>} : vector<8x32xf32>, vector<32x32xf32>, vector<8x32xf32> -> vector<8x32xf32>
    %112 = arith.addf %27, %111 : vector<8x32xf32>
    %cst_54 = arith.constant dense<0.000000e+00> : vector<8xf32>
    %113 = vector.multi_reduction <add>, %112, %cst_54 [1] : vector<8x32xf32> to vector<8xf32>
    %114 = vector.shape_cast %113 : vector<8xf32> to vector<8x1xf32>
    %cst_55 = arith.constant 3.200000e+01 : f32
    %115 = vector.broadcast %cst_55 : f32 to vector<8x1xf32>
    %116 = arith.divf %114, %115 : vector<8x1xf32>
    %117 = vector.broadcast %116 : vector<8x1xf32> to vector<8x32xf32>
    %118 = arith.subf %112, %117 : vector<8x32xf32>
    %119 = arith.mulf %118, %118 : vector<8x32xf32>
    %cst_56 = arith.constant dense<0.000000e+00> : vector<8xf32>
    %120 = vector.multi_reduction <add>, %119, %cst_56 [1] : vector<8x32xf32> to vector<8xf32>
    %121 = vector.shape_cast %120 : vector<8xf32> to vector<8x1xf32>
    %cst_57 = arith.constant 3.200000e+01 : f32
    %122 = vector.broadcast %cst_57 : f32 to vector<8x1xf32>
    %123 = arith.divf %121, %122 : vector<8x1xf32>
    %124 = vector.broadcast %116 : vector<8x1xf32> to vector<8x32xf32>
    %125 = arith.subf %112, %124 : vector<8x32xf32>
    %cst_58 = arith.constant 9.99999974E-6 : f32
    %126 = vector.broadcast %cst_58 : f32 to vector<8x1xf32>
    %127 = arith.addf %123, %126 : vector<8x1xf32>
    %128 = math.rsqrt %127 : vector<8x1xf32>
    %129 = vector.broadcast %128 : vector<8x1xf32> to vector<8x32xf32>
    %130 = arith.mulf %125, %129 : vector<8x32xf32>
    %131 = vector.broadcast %38 : vector<1x32xf32> to vector<8x32xf32>
    %132 = arith.mulf %130, %131 : vector<8x32xf32>
    %133 = vector.broadcast %39 : vector<1x32xf32> to vector<8x32xf32>
    %134 = arith.addf %132, %133 : vector<8x32xf32>
    %cst_59 = arith.constant dense<0.000000e+00> : vector<8x32xf32>
    %135 = tpu.matmul %134, %34, %cst_59 {dimension_numbers = #tpu.dot_dimension_numbers<[1], [0], [0], [1], [0, 0, 1, 1], [], []>} : vector<8x32xf32>, vector<32x32xf32>, vector<8x32xf32> -> vector<8x32xf32>
    %136 = vector.broadcast %35 : vector<1x32xf32> to vector<8x32xf32>
    %137 = arith.addf %135, %136 : vector<8x32xf32>
    %cst_60 = arith.constant 5.000000e-01 : f32
    %138 = vector.broadcast %cst_60 : f32 to vector<8x32xf32>
    %139 = arith.mulf %138, %137 : vector<8x32xf32>
    %cst_61 = arith.constant 4.471500e-02 : f32
    %140 = vector.broadcast %cst_61 : f32 to vector<8x32xf32>
    %141 = arith.mulf %140, %137 : vector<8x32xf32>
    %142 = arith.mulf %141, %137 : vector<8x32xf32>
    %143 = arith.mulf %142, %137 : vector<8x32xf32>
    %144 = arith.addf %137, %143 : vector<8x32xf32>
    %cst_62 = arith.constant 0.797884583 : f32
    %145 = vector.broadcast %cst_62 : f32 to vector<8x32xf32>
    %146 = arith.mulf %145, %144 : vector<8x32xf32>
    %147 = math.tanh %146 : vector<8x32xf32>
    %cst_63 = arith.constant 1.000000e+00 : f32
    %148 = vector.broadcast %cst_63 : f32 to vector<8x32xf32>
    %149 = arith.addf %148, %147 : vector<8x32xf32>
    %150 = arith.mulf %139, %149 : vector<8x32xf32>
    %cst_64 = arith.constant dense<0.000000e+00> : vector<8x32xf32>
    %151 = tpu.matmul %150, %36, %cst_64 {dimension_numbers = #tpu.dot_dimension_numbers<[1], [0], [0], [1], [0, 0, 1, 1], [], []>} : vector<8x32xf32>, vector<32x32xf32>, vector<8x32xf32> -> vector<8x32xf32>
    %152 = vector.broadcast %37 : vector<1x32xf32> to vector<8x32xf32>
    %153 = arith.addf %151, %152 : vector<8x32xf32>
    %154 = arith.addf %134, %153 : vector<8x32xf32>
    %cst_65 = arith.constant dense<0.000000e+00> : vector<8xf32>
    %155 = vector.multi_reduction <add>, %154, %cst_65 [1] : vector<8x32xf32> to vector<8xf32>
    %156 = vector.shape_cast %155 : vector<8xf32> to vector<8x1xf32>
    %cst_66 = arith.constant 3.200000e+01 : f32
    %157 = vector.broadcast %cst_66 : f32 to vector<8x1xf32>
    %158 = arith.divf %156, %157 : vector<8x1xf32>
    %159 = vector.broadcast %158 : vector<8x1xf32> to vector<8x32xf32>
    %160 = arith.subf %154, %159 : vector<8x32xf32>
    %161 = arith.mulf %160, %160 : vector<8x32xf32>
    %cst_67 = arith.constant dense<0.000000e+00> : vector<8xf32>
    %162 = vector.multi_reduction <add>, %161, %cst_67 [1] : vector<8x32xf32> to vector<8xf32>
    %163 = vector.shape_cast %162 : vector<8xf32> to vector<8x1xf32>
    %cst_68 = arith.constant 3.200000e+01 : f32
    %164 = vector.broadcast %cst_68 : f32 to vector<8x1xf32>
    %165 = arith.divf %163, %164 : vector<8x1xf32>
    %166 = vector.broadcast %158 : vector<8x1xf32> to vector<8x32xf32>
    %167 = arith.subf %154, %166 : vector<8x32xf32>
    %cst_69 = arith.constant 9.99999974E-6 : f32
    %168 = vector.broadcast %cst_69 : f32 to vector<8x1xf32>
    %169 = arith.addf %165, %168 : vector<8x1xf32>
    %170 = math.rsqrt %169 : vector<8x1xf32>
    %171 = vector.broadcast %170 : vector<8x1xf32> to vector<8x32xf32>
    %172 = arith.mulf %167, %171 : vector<8x32xf32>
    %173 = vector.broadcast %40 : vector<1x32xf32> to vector<8x32xf32>
    %174 = arith.mulf %172, %173 : vector<8x32xf32>
    %175 = vector.broadcast %41 : vector<1x32xf32> to vector<8x32xf32>
    %176 = arith.addf %174, %175 : vector<8x32xf32>
    %cst_70 = arith.constant dense<0.000000e+00> : vector<32xf32>
    %177 = vector.multi_reduction <add>, %176, %cst_70 [0] : vector<8x32xf32> to vector<32xf32>
    %178 = vector.shape_cast %177 : vector<32xf32> to vector<1x32xf32>
    %cst_71 = arith.constant 8.000000e+00 : f32
    %179 = vector.broadcast %cst_71 : f32 to vector<1x32xf32>
    %180 = arith.divf %178, %179 : vector<1x32xf32>
    %c0_72 = arith.constant 0 : index
    %c0_73 = arith.constant 0 : index
    %c0_74 = arith.constant 0 : index
    %181 = vector.load %arg2[%c0_72, %c0_73, %c0_74] : memref<1x8x32xf32, #tpu.memory_space<vmem>>, vector<1x8x32xf32>
    %182 = vector.shape_cast %181 : vector<1x8x32xf32> to vector<8x32xf32>
    %c0_75 = arith.constant 0 : index
    %c0_76 = arith.constant 0 : index
    %183 = vector.load %arg16[%c0_75, %c0_76] : memref<32x32xf32, #tpu.memory_space<vmem>>, vector<32x32xf32>
    %cst_77 = arith.constant dense<0.000000e+00> : vector<8x32xf32>
    %184 = tpu.matmul %182, %183, %cst_77 {dimension_numbers = #tpu.dot_dimension_numbers<[1], [0], [0], [1], [0, 0, 1, 1], [], []>} : vector<8x32xf32>, vector<32x32xf32>, vector<8x32xf32> -> vector<8x32xf32>
    %c0_78 = arith.constant 0 : index
    %c0_79 = arith.constant 0 : index
    %185 = vector.load %arg17[%c0_78, %c0_79] : memref<32x64xf32, #tpu.memory_space<vmem>>, vector<32x64xf32>
    %cst_80 = arith.constant dense<0.000000e+00> : vector<8x64xf32>
    %186 = tpu.matmul %176, %185, %cst_80 {dimension_numbers = #tpu.dot_dimension_numbers<[1], [0], [0], [1], [0, 0, 1, 1], [], []>} : vector<8x32xf32>, vector<32x64xf32>, vector<8x64xf32> -> vector<8x64xf32>
    %187 = vector.extract_strided_slice %186 {offsets = [0, 0], sizes = [8, 32], strides = [1, 1]} : vector<8x64xf32> to vector<8x32xf32>
    %188 = vector.extract_strided_slice %186 {offsets = [0, 32], sizes = [8, 32], strides = [1, 1]} : vector<8x64xf32> to vector<8x32xf32>
    %c0_81 = arith.constant 0 : index
    %c0_82 = arith.constant 0 : index
    %189 = vector.load %arg18[%c0_81, %c0_82] : memref<32x32xf32, #tpu.memory_space<vmem>>, vector<32x32xf32>
    %c0_83 = arith.constant 0 : index
    %c0_84 = arith.constant 0 : index
    %190 = vector.load %arg19[%c0_83, %c0_84] : memref<32x32xf32, #tpu.memory_space<vmem>>, vector<32x32xf32>
    %c0_85 = arith.constant 0 : index
    %c0_86 = arith.constant 0 : index
    %191 = vector.load %arg20[%c0_85, %c0_86] : memref<1x32xf32, #tpu.memory_space<vmem>>, vector<1x32xf32>
    %c0_87 = arith.constant 0 : index
    %c0_88 = arith.constant 0 : index
    %192 = vector.load %arg21[%c0_87, %c0_88] : memref<32x32xf32, #tpu.memory_space<vmem>>, vector<32x32xf32>
    %c0_89 = arith.constant 0 : index
    %c0_90 = arith.constant 0 : index
    %193 = vector.load %arg22[%c0_89, %c0_90] : memref<1x32xf32, #tpu.memory_space<vmem>>, vector<1x32xf32>
    %c0_91 = arith.constant 0 : index
    %c0_92 = arith.constant 0 : index
    %194 = vector.load %arg23[%c0_91, %c0_92] : memref<1x32xf32, #tpu.memory_space<vmem>>, vector<1x32xf32>
    %c0_93 = arith.constant 0 : index
    %c0_94 = arith.constant 0 : index
    %195 = vector.load %arg24[%c0_93, %c0_94] : memref<1x32xf32, #tpu.memory_space<vmem>>, vector<1x32xf32>
    %c0_95 = arith.constant 0 : index
    %c0_96 = arith.constant 0 : index
    %196 = vector.load %arg25[%c0_95, %c0_96] : memref<1x32xf32, #tpu.memory_space<vmem>>, vector<1x32xf32>
    %c0_97 = arith.constant 0 : index
    %c0_98 = arith.constant 0 : index
    %197 = vector.load %arg26[%c0_97, %c0_98] : memref<1x32xf32, #tpu.memory_space<vmem>>, vector<1x32xf32>
    %198 = vector.extract_strided_slice %184 {offsets = [0, 0], sizes = [8, 8], strides = [1, 1]} : vector<8x32xf32> to vector<8x8xf32>
    %199 = vector.extract_strided_slice %187 {offsets = [0, 0], sizes = [8, 8], strides = [1, 1]} : vector<8x32xf32> to vector<8x8xf32>
    %200 = vector.extract_strided_slice %188 {offsets = [0, 0], sizes = [8, 8], strides = [1, 1]} : vector<8x32xf32> to vector<8x8xf32>
    %cst_99 = arith.constant dense<0.000000e+00> : vector<8x8xf32>
    %201 = tpu.matmul %198, %199, %cst_99 {dimension_numbers = #tpu.dot_dimension_numbers<[1], [1], [0], [0], [0, 0, 1, 0], [], []>} : vector<8x8xf32>, vector<8x8xf32>, vector<8x8xf32> -> vector<8x8xf32>
    %cst_100 = arith.constant 0.353553385 : f32
    %202 = vector.broadcast %cst_100 : f32 to vector<8x8xf32>
    %203 = arith.mulf %201, %202 : vector<8x8xf32>
    %cst_101 = arith.constant dense<0xFF800000> : vector<8xf32>
    %204 = vector.multi_reduction <maximumf>, %203, %cst_101 [1] : vector<8x8xf32> to vector<8xf32>
    %205 = vector.shape_cast %204 : vector<8xf32> to vector<8x1xf32>
    %206 = vector.broadcast %205 : vector<8x1xf32> to vector<8x8xf32>
    %207 = arith.subf %203, %206 : vector<8x8xf32>
    %208 = math.exp %207 : vector<8x8xf32>
    %cst_102 = arith.constant dense<0.000000e+00> : vector<8xf32>
    %209 = vector.multi_reduction <add>, %208, %cst_102 [1] : vector<8x8xf32> to vector<8xf32>
    %210 = vector.shape_cast %209 : vector<8xf32> to vector<8x1xf32>
    %211 = tpu.reciprocal %210 {approx = true} : vector<8x1xf32> -> vector<8x1xf32>
    %212 = vector.broadcast %211 : vector<8x1xf32> to vector<8x8xf32>
    %213 = arith.mulf %208, %212 : vector<8x8xf32>
    %cst_103 = arith.constant dense<0.000000e+00> : vector<8x8xf32>
    %214 = tpu.matmul %213, %200, %cst_103 {dimension_numbers = #tpu.dot_dimension_numbers<[1], [0], [0], [1], [0, 0, 1, 1], [], []>} : vector<8x8xf32>, vector<8x8xf32>, vector<8x8xf32> -> vector<8x8xf32>
    %215 = vector.extract_strided_slice %184 {offsets = [0, 8], sizes = [8, 8], strides = [1, 1]} : vector<8x32xf32> to vector<8x8xf32>
    %216 = vector.extract_strided_slice %187 {offsets = [0, 8], sizes = [8, 8], strides = [1, 1]} : vector<8x32xf32> to vector<8x8xf32>
    %217 = vector.extract_strided_slice %188 {offsets = [0, 8], sizes = [8, 8], strides = [1, 1]} : vector<8x32xf32> to vector<8x8xf32>
    %cst_104 = arith.constant dense<0.000000e+00> : vector<8x8xf32>
    %218 = tpu.matmul %215, %216, %cst_104 {dimension_numbers = #tpu.dot_dimension_numbers<[1], [1], [0], [0], [0, 0, 1, 0], [], []>} : vector<8x8xf32>, vector<8x8xf32>, vector<8x8xf32> -> vector<8x8xf32>
    %cst_105 = arith.constant 0.353553385 : f32
    %219 = vector.broadcast %cst_105 : f32 to vector<8x8xf32>
    %220 = arith.mulf %218, %219 : vector<8x8xf32>
    %cst_106 = arith.constant dense<0xFF800000> : vector<8xf32>
    %221 = vector.multi_reduction <maximumf>, %220, %cst_106 [1] : vector<8x8xf32> to vector<8xf32>
    %222 = vector.shape_cast %221 : vector<8xf32> to vector<8x1xf32>
    %223 = vector.broadcast %222 : vector<8x1xf32> to vector<8x8xf32>
    %224 = arith.subf %220, %223 : vector<8x8xf32>
    %225 = math.exp %224 : vector<8x8xf32>
    %cst_107 = arith.constant dense<0.000000e+00> : vector<8xf32>
    %226 = vector.multi_reduction <add>, %225, %cst_107 [1] : vector<8x8xf32> to vector<8xf32>
    %227 = vector.shape_cast %226 : vector<8xf32> to vector<8x1xf32>
    %228 = tpu.reciprocal %227 {approx = true} : vector<8x1xf32> -> vector<8x1xf32>
    %229 = vector.broadcast %228 : vector<8x1xf32> to vector<8x8xf32>
    %230 = arith.mulf %225, %229 : vector<8x8xf32>
    %cst_108 = arith.constant dense<0.000000e+00> : vector<8x8xf32>
    %231 = tpu.matmul %230, %217, %cst_108 {dimension_numbers = #tpu.dot_dimension_numbers<[1], [0], [0], [1], [0, 0, 1, 1], [], []>} : vector<8x8xf32>, vector<8x8xf32>, vector<8x8xf32> -> vector<8x8xf32>
    %232 = vector.extract_strided_slice %184 {offsets = [0, 16], sizes = [8, 8], strides = [1, 1]} : vector<8x32xf32> to vector<8x8xf32>
    %233 = vector.extract_strided_slice %187 {offsets = [0, 16], sizes = [8, 8], strides = [1, 1]} : vector<8x32xf32> to vector<8x8xf32>
    %234 = vector.extract_strided_slice %188 {offsets = [0, 16], sizes = [8, 8], strides = [1, 1]} : vector<8x32xf32> to vector<8x8xf32>
    %cst_109 = arith.constant dense<0.000000e+00> : vector<8x8xf32>
    %235 = tpu.matmul %232, %233, %cst_109 {dimension_numbers = #tpu.dot_dimension_numbers<[1], [1], [0], [0], [0, 0, 1, 0], [], []>} : vector<8x8xf32>, vector<8x8xf32>, vector<8x8xf32> -> vector<8x8xf32>
    %cst_110 = arith.constant 0.353553385 : f32
    %236 = vector.broadcast %cst_110 : f32 to vector<8x8xf32>
    %237 = arith.mulf %235, %236 : vector<8x8xf32>
    %cst_111 = arith.constant dense<0xFF800000> : vector<8xf32>
    %238 = vector.multi_reduction <maximumf>, %237, %cst_111 [1] : vector<8x8xf32> to vector<8xf32>
    %239 = vector.shape_cast %238 : vector<8xf32> to vector<8x1xf32>
    %240 = vector.broadcast %239 : vector<8x1xf32> to vector<8x8xf32>
    %241 = arith.subf %237, %240 : vector<8x8xf32>
    %242 = math.exp %241 : vector<8x8xf32>
    %cst_112 = arith.constant dense<0.000000e+00> : vector<8xf32>
    %243 = vector.multi_reduction <add>, %242, %cst_112 [1] : vector<8x8xf32> to vector<8xf32>
    %244 = vector.shape_cast %243 : vector<8xf32> to vector<8x1xf32>
    %245 = tpu.reciprocal %244 {approx = true} : vector<8x1xf32> -> vector<8x1xf32>
    %246 = vector.broadcast %245 : vector<8x1xf32> to vector<8x8xf32>
    %247 = arith.mulf %242, %246 : vector<8x8xf32>
    %cst_113 = arith.constant dense<0.000000e+00> : vector<8x8xf32>
    %248 = tpu.matmul %247, %234, %cst_113 {dimension_numbers = #tpu.dot_dimension_numbers<[1], [0], [0], [1], [0, 0, 1, 1], [], []>} : vector<8x8xf32>, vector<8x8xf32>, vector<8x8xf32> -> vector<8x8xf32>
    %249 = vector.extract_strided_slice %184 {offsets = [0, 24], sizes = [8, 8], strides = [1, 1]} : vector<8x32xf32> to vector<8x8xf32>
    %250 = vector.extract_strided_slice %187 {offsets = [0, 24], sizes = [8, 8], strides = [1, 1]} : vector<8x32xf32> to vector<8x8xf32>
    %251 = vector.extract_strided_slice %188 {offsets = [0, 24], sizes = [8, 8], strides = [1, 1]} : vector<8x32xf32> to vector<8x8xf32>
    %cst_114 = arith.constant dense<0.000000e+00> : vector<8x8xf32>
    %252 = tpu.matmul %249, %250, %cst_114 {dimension_numbers = #tpu.dot_dimension_numbers<[1], [1], [0], [0], [0, 0, 1, 0], [], []>} : vector<8x8xf32>, vector<8x8xf32>, vector<8x8xf32> -> vector<8x8xf32>
    %cst_115 = arith.constant 0.353553385 : f32
    %253 = vector.broadcast %cst_115 : f32 to vector<8x8xf32>
    %254 = arith.mulf %252, %253 : vector<8x8xf32>
    %cst_116 = arith.constant dense<0xFF800000> : vector<8xf32>
    %255 = vector.multi_reduction <maximumf>, %254, %cst_116 [1] : vector<8x8xf32> to vector<8xf32>
    %256 = vector.shape_cast %255 : vector<8xf32> to vector<8x1xf32>
    %257 = vector.broadcast %256 : vector<8x1xf32> to vector<8x8xf32>
    %258 = arith.subf %254, %257 : vector<8x8xf32>
    %259 = math.exp %258 : vector<8x8xf32>
    %cst_117 = arith.constant dense<0.000000e+00> : vector<8xf32>
    %260 = vector.multi_reduction <add>, %259, %cst_117 [1] : vector<8x8xf32> to vector<8xf32>
    %261 = vector.shape_cast %260 : vector<8xf32> to vector<8x1xf32>
    %262 = tpu.reciprocal %261 {approx = true} : vector<8x1xf32> -> vector<8x1xf32>
    %263 = vector.broadcast %262 : vector<8x1xf32> to vector<8x8xf32>
    %264 = arith.mulf %259, %263 : vector<8x8xf32>
    %cst_118 = arith.constant dense<0.000000e+00> : vector<8x8xf32>
    %265 = tpu.matmul %264, %251, %cst_118 {dimension_numbers = #tpu.dot_dimension_numbers<[1], [0], [0], [1], [0, 0, 1, 1], [], []>} : vector<8x8xf32>, vector<8x8xf32>, vector<8x8xf32> -> vector<8x8xf32>
    %266 = tpu.concatenate %214, %231, %248, %265 in 1 : vector<8x8xf32>, vector<8x8xf32>, vector<8x8xf32>, vector<8x8xf32> -> vector<8x32xf32>
    %cst_119 = arith.constant dense<0.000000e+00> : vector<8x32xf32>
    %267 = tpu.matmul %266, %189, %cst_119 {dimension_numbers = #tpu.dot_dimension_numbers<[1], [0], [0], [1], [0, 0, 1, 1], [], []>} : vector<8x32xf32>, vector<32x32xf32>, vector<8x32xf32> -> vector<8x32xf32>
    %268 = arith.addf %182, %267 : vector<8x32xf32>
    %cst_120 = arith.constant dense<0.000000e+00> : vector<8xf32>
    %269 = vector.multi_reduction <add>, %268, %cst_120 [1] : vector<8x32xf32> to vector<8xf32>
    %270 = vector.shape_cast %269 : vector<8xf32> to vector<8x1xf32>
    %cst_121 = arith.constant 3.200000e+01 : f32
    %271 = vector.broadcast %cst_121 : f32 to vector<8x1xf32>
    %272 = arith.divf %270, %271 : vector<8x1xf32>
    %273 = vector.broadcast %272 : vector<8x1xf32> to vector<8x32xf32>
    %274 = arith.subf %268, %273 : vector<8x32xf32>
    %275 = arith.mulf %274, %274 : vector<8x32xf32>
    %cst_122 = arith.constant dense<0.000000e+00> : vector<8xf32>
    %276 = vector.multi_reduction <add>, %275, %cst_122 [1] : vector<8x32xf32> to vector<8xf32>
    %277 = vector.shape_cast %276 : vector<8xf32> to vector<8x1xf32>
    %cst_123 = arith.constant 3.200000e+01 : f32
    %278 = vector.broadcast %cst_123 : f32 to vector<8x1xf32>
    %279 = arith.divf %277, %278 : vector<8x1xf32>
    %280 = vector.broadcast %272 : vector<8x1xf32> to vector<8x32xf32>
    %281 = arith.subf %268, %280 : vector<8x32xf32>
    %cst_124 = arith.constant 9.99999974E-6 : f32
    %282 = vector.broadcast %cst_124 : f32 to vector<8x1xf32>
    %283 = arith.addf %279, %282 : vector<8x1xf32>
    %284 = math.rsqrt %283 : vector<8x1xf32>
    %285 = vector.broadcast %284 : vector<8x1xf32> to vector<8x32xf32>
    %286 = arith.mulf %281, %285 : vector<8x32xf32>
    %287 = vector.broadcast %194 : vector<1x32xf32> to vector<8x32xf32>
    %288 = arith.mulf %286, %287 : vector<8x32xf32>
    %289 = vector.broadcast %195 : vector<1x32xf32> to vector<8x32xf32>
    %290 = arith.addf %288, %289 : vector<8x32xf32>
    %cst_125 = arith.constant dense<0.000000e+00> : vector<8x32xf32>
    %291 = tpu.matmul %290, %190, %cst_125 {dimension_numbers = #tpu.dot_dimension_numbers<[1], [0], [0], [1], [0, 0, 1, 1], [], []>} : vector<8x32xf32>, vector<32x32xf32>, vector<8x32xf32> -> vector<8x32xf32>
    %292 = vector.broadcast %191 : vector<1x32xf32> to vector<8x32xf32>
    %293 = arith.addf %291, %292 : vector<8x32xf32>
    %cst_126 = arith.constant 5.000000e-01 : f32
    %294 = vector.broadcast %cst_126 : f32 to vector<8x32xf32>
    %295 = arith.mulf %294, %293 : vector<8x32xf32>
    %cst_127 = arith.constant 4.471500e-02 : f32
    %296 = vector.broadcast %cst_127 : f32 to vector<8x32xf32>
    %297 = arith.mulf %296, %293 : vector<8x32xf32>
    %298 = arith.mulf %297, %293 : vector<8x32xf32>
    %299 = arith.mulf %298, %293 : vector<8x32xf32>
    %300 = arith.addf %293, %299 : vector<8x32xf32>
    %cst_128 = arith.constant 0.797884583 : f32
    %301 = vector.broadcast %cst_128 : f32 to vector<8x32xf32>
    %302 = arith.mulf %301, %300 : vector<8x32xf32>
    %303 = math.tanh %302 : vector<8x32xf32>
    %cst_129 = arith.constant 1.000000e+00 : f32
    %304 = vector.broadcast %cst_129 : f32 to vector<8x32xf32>
    %305 = arith.addf %304, %303 : vector<8x32xf32>
    %306 = arith.mulf %295, %305 : vector<8x32xf32>
    %cst_130 = arith.constant dense<0.000000e+00> : vector<8x32xf32>
    %307 = tpu.matmul %306, %192, %cst_130 {dimension_numbers = #tpu.dot_dimension_numbers<[1], [0], [0], [1], [0, 0, 1, 1], [], []>} : vector<8x32xf32>, vector<32x32xf32>, vector<8x32xf32> -> vector<8x32xf32>
    %308 = vector.broadcast %193 : vector<1x32xf32> to vector<8x32xf32>
    %309 = arith.addf %307, %308 : vector<8x32xf32>
    %310 = arith.addf %290, %309 : vector<8x32xf32>
    %cst_131 = arith.constant dense<0.000000e+00> : vector<8xf32>
    %311 = vector.multi_reduction <add>, %310, %cst_131 [1] : vector<8x32xf32> to vector<8xf32>
    %312 = vector.shape_cast %311 : vector<8xf32> to vector<8x1xf32>
    %cst_132 = arith.constant 3.200000e+01 : f32
    %313 = vector.broadcast %cst_132 : f32 to vector<8x1xf32>
    %314 = arith.divf %312, %313 : vector<8x1xf32>
    %315 = vector.broadcast %314 : vector<8x1xf32> to vector<8x32xf32>
    %316 = arith.subf %310, %315 : vector<8x32xf32>
    %317 = arith.mulf %316, %316 : vector<8x32xf32>
    %cst_133 = arith.constant dense<0.000000e+00> : vector<8xf32>
    %318 = vector.multi_reduction <add>, %317, %cst_133 [1] : vector<8x32xf32> to vector<8xf32>
    %319 = vector.shape_cast %318 : vector<8xf32> to vector<8x1xf32>
    %cst_134 = arith.constant 3.200000e+01 : f32
    %320 = vector.broadcast %cst_134 : f32 to vector<8x1xf32>
    %321 = arith.divf %319, %320 : vector<8x1xf32>
    %322 = vector.broadcast %314 : vector<8x1xf32> to vector<8x32xf32>
    %323 = arith.subf %310, %322 : vector<8x32xf32>
    %cst_135 = arith.constant 9.99999974E-6 : f32
    %324 = vector.broadcast %cst_135 : f32 to vector<8x1xf32>
    %325 = arith.addf %321, %324 : vector<8x1xf32>
    %326 = math.rsqrt %325 : vector<8x1xf32>
    %327 = vector.broadcast %326 : vector<8x1xf32> to vector<8x32xf32>
    %328 = arith.mulf %323, %327 : vector<8x32xf32>
    %329 = vector.broadcast %196 : vector<1x32xf32> to vector<8x32xf32>
    %330 = arith.mulf %328, %329 : vector<8x32xf32>
    %331 = vector.broadcast %197 : vector<1x32xf32> to vector<8x32xf32>
    %332 = arith.addf %330, %331 : vector<8x32xf32>
    %cst_136 = arith.constant dense<0.000000e+00> : vector<32xf32>
    %333 = vector.multi_reduction <add>, %332, %cst_136 [0] : vector<8x32xf32> to vector<32xf32>
    %334 = vector.shape_cast %333 : vector<32xf32> to vector<1x32xf32>
    %cst_137 = arith.constant 8.000000e+00 : f32
    %335 = vector.broadcast %cst_137 : f32 to vector<1x32xf32>
    %336 = arith.divf %334, %335 : vector<1x32xf32>
    %337 = tpu.concatenate %180, %336 in 1 : vector<1x32xf32>, vector<1x32xf32> -> vector<1x64xf32>
    %c0_138 = arith.constant 0 : index
    %c0_139 = arith.constant 0 : index
    %c0_140 = arith.constant 0 : index
    %338 = vector.load %arg27[%c0_138, %c0_139, %c0_140] : memref<1x1x64xf32, #tpu.memory_space<vmem>>, vector<1x1x64xf32>
    %339 = vector.shape_cast %338 : vector<1x1x64xf32> to vector<1x64xf32>
    %340 = vector.shape_cast %337 : vector<1x64xf32> to vector<1x1x64xf32>
    tpu.vector_store %arg27[%c0_138, %c0_139, %c0_140], %340 {strides = array<i32>} : memref<1x1x64xf32, #tpu.memory_space<vmem>>, vector<1x1x64xf32>,
    return
  }
  func.func @transform_0(%arg0: i32) -> (i32, i32, i32) {
    %c0_i32 = arith.constant 0 : i32
    %c0_i32_0 = arith.constant 0 : i32
    %c0_i32_1 = arith.constant 0 : i32
    return %arg0, %c0_i32, %c0_i32_0 : i32, i32, i32
  }
  func.func @transform_1(%arg0: i32) -> (i32, i32, i32) {
    %c0_i32 = arith.constant 0 : i32
    %c0_i32_0 = arith.constant 0 : i32
    %c0_i32_1 = arith.constant 0 : i32
    return %arg0, %c0_i32, %c0_i32_0 : i32, i32, i32
  }
  func.func @transform_2(%arg0: i32) -> (i32, i32) {
    %c0_i32 = arith.constant 0 : i32
    %c0_i32_0 = arith.constant 0 : i32
    %c0_i32_1 = arith.constant 0 : i32
    return %c0_i32, %c0_i32_0 : i32, i32
  }
  func.func @transform_3(%arg0: i32) -> (i32, i32) {
    %c0_i32 = arith.constant 0 : i32
    %c0_i32_0 = arith.constant 0 : i32
    %c0_i32_1 = arith.constant 0 : i32
    return %c0_i32, %c0_i32_0 : i32, i32
  }
  func.func @transform_4(%arg0: i32) -> (i32, i32) {
    %c0_i32 = arith.constant 0 : i32
    %c0_i32_0 = arith.constant 0 : i32
    %c0_i32_1 = arith.constant 0 : i32
    return %c0_i32, %c0_i32_0 : i32, i32
  }
  func.func @transform_5(%arg0: i32) -> (i32, i32) {
    %c0_i32 = arith.constant 0 : i32
    %c0_i32_0 = arith.constant 0 : i32
    %c0_i32_1 = arith.constant 0 : i32
    return %c0_i32, %c0_i32_0 : i32, i32
  }
  func.func @transform_6(%arg0: i32) -> (i32, i32) {
    %c0_i32 = arith.constant 0 : i32
    %c0_i32_0 = arith.constant 0 : i32
    %c0_i32_1 = arith.constant 0 : i32
    return %c0_i32, %c0_i32_0 : i32, i32
  }
  func.func @transform_7(%arg0: i32) -> (i32, i32) {
    %c0_i32 = arith.constant 0 : i32
    %c0_i32_0 = arith.constant 0 : i32
    %c0_i32_1 = arith.constant 0 : i32
    return %c0_i32, %c0_i32_0 : i32, i32
  }
  func.func @transform_8(%arg0: i32) -> (i32, i32) {
    %c0_i32 = arith.constant 0 : i32
    %c0_i32_0 = arith.constant 0 : i32
    %c0_i32_1 = arith.constant 0 : i32
    return %c0_i32, %c0_i32_0 : i32, i32
  }
  func.func @transform_9(%arg0: i32) -> (i32, i32) {
    %c0_i32 = arith.constant 0 : i32
    %c0_i32_0 = arith.constant 0 : i32
    %c0_i32_1 = arith.constant 0 : i32
    return %c0_i32, %c0_i32_0 : i32, i32
  }
  func.func @transform_10(%arg0: i32) -> (i32, i32) {
    %c0_i32 = arith.constant 0 : i32
    %c0_i32_0 = arith.constant 0 : i32
    %c0_i32_1 = arith.constant 0 : i32
    return %c0_i32, %c0_i32_0 : i32, i32
  }
  func.func @transform_11(%arg0: i32) -> (i32, i32) {
    %c0_i32 = arith.constant 0 : i32
    %c0_i32_0 = arith.constant 0 : i32
    %c0_i32_1 = arith.constant 0 : i32
    return %c0_i32, %c0_i32_0 : i32, i32
  }
  func.func @transform_12(%arg0: i32) -> (i32, i32) {
    %c0_i32 = arith.constant 0 : i32
    %c0_i32_0 = arith.constant 0 : i32
    %c0_i32_1 = arith.constant 0 : i32
    return %c0_i32, %c0_i32_0 : i32, i32
  }
  func.func @transform_13(%arg0: i32) -> (i32, i32) {
    %c0_i32 = arith.constant 0 : i32
    %c0_i32_0 = arith.constant 0 : i32
    %c0_i32_1 = arith.constant 0 : i32
    return %c0_i32, %c0_i32_0 : i32, i32
  }
  func.func @transform_14(%arg0: i32) -> (i32, i32) {
    %c0_i32 = arith.constant 0 : i32
    %c0_i32_0 = arith.constant 0 : i32
    %c0_i32_1 = arith.constant 0 : i32
    return %c0_i32, %c0_i32_0 : i32, i32
  }
  func.func @transform_15(%arg0: i32) -> (i32, i32) {
    %c0_i32 = arith.constant 0 : i32
    %c0_i32_0 = arith.constant 0 : i32
    %c0_i32_1 = arith.constant 0 : i32
    return %c0_i32, %c0_i32_0 : i32, i32
  }
  func.func @transform_16(%arg0: i32) -> (i32, i32) {
    %c0_i32 = arith.constant 0 : i32
    %c0_i32_0 = arith.constant 0 : i32
    %c0_i32_1 = arith.constant 0 : i32
    return %c0_i32, %c0_i32_0 : i32, i32
  }
  func.func @transform_17(%arg0: i32) -> (i32, i32) {
    %c0_i32 = arith.constant 0 : i32
    %c0_i32_0 = arith.constant 0 : i32
    %c0_i32_1 = arith.constant 0 : i32
    return %c0_i32, %c0_i32_0 : i32, i32
  }
  func.func @transform_18(%arg0: i32) -> (i32, i32) {
    %c0_i32 = arith.constant 0 : i32
    %c0_i32_0 = arith.constant 0 : i32
    %c0_i32_1 = arith.constant 0 : i32
    return %c0_i32, %c0_i32_0 : i32, i32
  }
  func.func @transform_19(%arg0: i32) -> (i32, i32) {
    %c0_i32 = arith.constant 0 : i32
    %c0_i32_0 = arith.constant 0 : i32
    %c0_i32_1 = arith.constant 0 : i32
    return %c0_i32, %c0_i32_0 : i32, i32
  }
  func.func @transform_20(%arg0: i32) -> (i32, i32) {
    %c0_i32 = arith.constant 0 : i32
    %c0_i32_0 = arith.constant 0 : i32
    %c0_i32_1 = arith.constant 0 : i32
    return %c0_i32, %c0_i32_0 : i32, i32
  }
  func.func @transform_21(%arg0: i32) -> (i32, i32) {
    %c0_i32 = arith.constant 0 : i32
    %c0_i32_0 = arith.constant 0 : i32
    %c0_i32_1 = arith.constant 0 : i32
    return %c0_i32, %c0_i32_0 : i32, i32
  }
  func.func @transform_22(%arg0: i32) -> (i32, i32) {
    %c0_i32 = arith.constant 0 : i32
    %c0_i32_0 = arith.constant 0 : i32
    %c0_i32_1 = arith.constant 0 : i32
    return %c0_i32, %c0_i32_0 : i32, i32
  }
  func.func @transform_23(%arg0: i32) -> (i32, i32) {
    %c0_i32 = arith.constant 0 : i32
    %c0_i32_0 = arith.constant 0 : i32
    %c0_i32_1 = arith.constant 0 : i32
    return %c0_i32, %c0_i32_0 : i32, i32
  }
  func.func @transform_24(%arg0: i32) -> (i32, i32) {
    %c0_i32 = arith.constant 0 : i32
    %c0_i32_0 = arith.constant 0 : i32
    %c0_i32_1 = arith.constant 0 : i32
    return %c0_i32, %c0_i32_0 : i32, i32
  }
  func.func @transform_25(%arg0: i32) -> (i32, i32) {
    %c0_i32 = arith.constant 0 : i32
    %c0_i32_0 = arith.constant 0 : i32
    %c0_i32_1 = arith.constant 0 : i32
    return %c0_i32, %c0_i32_0 : i32, i32
  }
  func.func @transform_26(%arg0: i32) -> (i32, i32, i32) {
    %c0_i32 = arith.constant 0 : i32
    %c0_i32_0 = arith.constant 0 : i32
    %c0_i32_1 = arith.constant 0 : i32
    return %arg0, %c0_i32, %c0_i32_0 : i32, i32, i32
  }
}

</mosaic_0001>

<llo_original>
// kernel: text_image_transformer.1
$region0: #{text_image_transformer.1}
  #allocation0 [shape = 'u32[]', space=smem, size = 0x4, offset = 0x4, fixed_abs, tag = 'smem constant byte address 0x4 - core index']
  #allocation1 [shape = 'u32[144,128]{1,0:T(1,128)}', space=vmem, size = 0x12000, scoped, tag = 'internal scratch']
  %s0 = inlined_call_operand.vmem [shape: f32[2,8,32], index: 0, kind: input, shape index: {}]
  %s1 = inlined_call_operand.vmem [shape: f32[2,8,32], index: 1, kind: input, shape index: {}]
  %s2 = inlined_call_operand.vmem [shape: f32[8,32], index: 2, kind: input, shape index: {}]
  %s3 = inlined_call_operand.vmem [shape: f32[1,32], index: 3, kind: input, shape index: {}]
  %s4 = inlined_call_operand.vmem [shape: f32[1,32], index: 4, kind: input, shape index: {}]
  %s5 = inlined_call_operand.vmem [shape: f32[32,96], index: 5, kind: input, shape index: {}]
  %s6 = inlined_call_operand.vmem [shape: f32[32,32], index: 6, kind: input, shape index: {}]
  %s7 = inlined_call_operand.vmem [shape: f32[32,32], index: 7, kind: input, shape index: {}]
  %s8 = inlined_call_operand.vmem [shape: f32[1,32], index: 8, kind: input, shape index: {}]
  %s9 = inlined_call_operand.vmem [shape: f32[32,32], index: 9, kind: input, shape index: {}]
  %s10 = inlined_call_operand.vmem [shape: f32[1,32], index: 10, kind: input, shape index: {}]
  %s11 = inlined_call_operand.hbm [shape: f32[1,32], index: 11, kind: input, shape index: {}]
  %s12 = inlined_call_operand.hbm [shape: f32[1,32], index: 12, kind: input, shape index: {}]
  %s13 = inlined_call_operand.hbm [shape: f32[1,32], index: 13, kind: input, shape index: {}]
  %s14 = inlined_call_operand.hbm [shape: f32[1,32], index: 14, kind: input, shape index: {}]
  %s15 = inlined_call_operand.vmem [shape: f32[32,32], index: 15, kind: input, shape index: {}]
  %s16 = inlined_call_operand.vmem [shape: f32[32,64], index: 16, kind: input, shape index: {}]
  %s17 = inlined_call_operand.vmem [shape: f32[32,32], index: 17, kind: input, shape index: {}]
  %s18 = inlined_call_operand.vmem [shape: f32[32,32], index: 18, kind: input, shape index: {}]
  %s19 = inlined_call_operand.hbm [shape: f32[1,32], index: 19, kind: input, shape index: {}]
  %s20 = inlined_call_operand.vmem [shape: f32[32,32], index: 20, kind: input, shape index: {}]
  %s21 = inlined_call_operand.hbm [shape: f32[1,32], index: 21, kind: input, shape index: {}]
  %s22 = inlined_call_operand.vmem [shape: f32[1,32], index: 22, kind: input, shape index: {}]
  %s23 = inlined_call_operand.hbm [shape: f32[1,32], index: 23, kind: input, shape index: {}]
  %s24 = inlined_call_operand.vmem [shape: f32[1,32], index: 24, kind: input, shape index: {}]
  %s25 = inlined_call_operand.vmem [shape: f32[1,32], index: 25, kind: input, shape index: {}]
  %s26 = inlined_call_operand.hbm [shape: f32[2,1,64], index: 26, kind: output, shape index: {}]
  %s27 = sld [smem:[#allocation0]]
  $region165: #{text_image_transformer.1} parent=0
    _
  %s29 = ssub.s32 1, %s27
  %s30 = scalar_select 0, %s29, %s27
  $region1: #{text_image_transformer.1} parent=0
    #allocation2 [shape = 'u8[512]{0}', space=vmem, size = 0x400, scoped, tag = 'input window, operand 11, single buffered']
    #allocation3 [shape = 's32[2]{0}', space=sflag, size = 0x8, scoped, tag = 'scoped memory for text_image_transformer.1']
    #allocation4 [shape = 's32[2]{0}', space=sflag, size = 0x8, scoped, tag = 'scoped memory for text_image_transformer.1']
    #allocation5 [shape = 'u8[512]{0}', space=vmem, size = 0x400, scoped, tag = 'input window, operand 12, single buffered']
    #allocation6 [shape = 's32[1]{0}', space=sflag, size = 0x4, scoped, tag = 'scoped memory for text_image_transformer.1']
    #allocation7 [shape = 'u8[512]{0}', space=vmem, size = 0x400, scoped, tag = 'input window, operand 13, single buffered']
    #allocation8 [shape = 'u8[512]{0}', space=vmem, size = 0x400, scoped, tag = 'input window, operand 14, single buffered']
    #allocation9 [shape = 's32[1]{0}', space=sflag, size = 0x4, scoped, tag = 'scoped memory for text_image_transformer.1']
    #allocation10 [shape = 'u8[512]{0}', space=vmem, size = 0x400, scoped, tag = 'input window, operand 19, single buffered']
    #allocation11 [shape = 'u8[512]{0}', space=vmem, size = 0x400, scoped, tag = 'input window, operand 21, single buffered']
    #allocation12 [shape = 's32[1]{0}', space=sflag, size = 0x4, scoped, tag = 'scoped memory for text_image_transformer.1']
    #allocation13 [shape = 'u8[512]{0}', space=vmem, size = 0x400, scoped, tag = 'input window, operand 23, single buffered']
    #allocation14 [shape = 'u8[1024]{0}', space=vmem, size = 0x400, scoped, tag = 'output window, operand 0']
    %31 = vsyncpa [#allocation3], 0
    %32 = vsyncpa [#allocation6], 0
    %33 = vsyncpa [#allocation9], 0
    %34 = vsyncpa [#allocation12], 0
    %35 = vsyncpa [#allocation4], 0
    %s36 = scalar_lea.sflag [#allocation4], 1
    %37 = vsyncpa %s36, 0
    loop: start=0, step=1, limit=4
    $region2: #{text_image_transformer.1} parent=1 // loop_pre_header
      _
    $region3: #{text_image_transformer.1} parent=1 // loop_header
      %s39 = sphi 0, %s43
      %p40 = scmp.ge.s32.totalorder %s39, 4
      %s49 = sphi 0, %s51
      %s52 = sphi 0, %s49
      %s53 = sphi 0, %s52
      %s69 = sphi 0, %s53
      %s75 = sphi 0, %s77
      %s78 = sphi 0, %s75
      %s79 = sphi 0, %s78
      %s95 = sphi 0, %s79
      %s99 = sphi 0, %s99
      %s101 = sphi 0, %s99
      %s102 = sphi 0, %s101
      %s116 = sphi 0, %s102
      %s120 = sphi 0, %s120
      %s122 = sphi 0, %s120
      %s123 = sphi 0, %s122
      %s137 = sphi 0, %s123
      %s141 = sphi 0, %s141
      %s143 = sphi 0, %s141
      %s144 = sphi 0, %s143
      %s158 = sphi 0, %s144
      %s162 = sphi 0, %s162
      %s164 = sphi 0, %s162
      %s165 = sphi 0, %s164
      %s179 = sphi 0, %s165
      %s183 = sphi 0, %s183
      %s185 = sphi 0, %s183
      %s186 = sphi 0, %s185
      %s200 = sphi 0, %s186
      %s204 = sphi 0, %s204
      %s206 = sphi 0, %s204
      %s207 = sphi 0, %s206
      %s221 = sphi 0, %s207
      %s225 = sphi 0, %s225
      %s227 = sphi 0, %s225
      %s228 = sphi 0, %s227
      %s242 = sphi 0, %s228
      %s246 = sphi 0, %s246
      %s248 = sphi 0, %s246
      %s249 = sphi 0, %s248
      %s263 = sphi 0, %s249
      %s267 = sphi 0, %s267
      %s269 = sphi 0, %s267
      %s270 = sphi 0, %s269
      %s284 = sphi 0, %s270
      %s288 = sphi 0, %s288
      %s290 = sphi 0, %s288
      %s291 = sphi 0, %s290
      %s305 = sphi 0, %s291
      %s309 = sphi 0, %s309
      %s311 = sphi 0, %s309
      %s312 = sphi 0, %s311
      %s326 = sphi 0, %s312
      %s330 = sphi 0, %s330
      %s332 = sphi 0, %s330
      %s333 = sphi 0, %s332
      %s347 = sphi 0, %s333
      %s351 = sphi 0, %s351
      %s353 = sphi 0, %s351
      %s354 = sphi 0, %s353
      %s368 = sphi 0, %s354
      %s372 = sphi 0, %s372
      %s374 = sphi 0, %s372
      %s375 = sphi 0, %s374
      %s389 = sphi 0, %s375
      %s393 = sphi 0, %s393
      %s395 = sphi 0, %s393
      %s396 = sphi 0, %s395
      %s410 = sphi 0, %s396
      %s414 = sphi 0, %s414
      %s416 = sphi 0, %s414
      %s417 = sphi 0, %s416
      %s431 = sphi 0, %s417
      %s435 = sphi 0, %s435
      %s437 = sphi 0, %s435
      %s438 = sphi 0, %s437
      %s452 = sphi 0, %s438
      %s456 = sphi 0, %s456
      %s458 = sphi 0, %s456
      %s459 = sphi 0, %s458
      %s473 = sphi 0, %s459
      %s477 = sphi 0, %s477
      %s479 = sphi 0, %s477
      %s480 = sphi 0, %s479
      %s494 = sphi 0, %s480
      %s498 = sphi 0, %s498
      %s500 = sphi 0, %s498
      %s501 = sphi 0, %s500
      %s515 = sphi 0, %s501
      %s519 = sphi 0, %s519
      %s521 = sphi 0, %s519
      %s522 = sphi 0, %s521
      %s536 = sphi 0, %s522
      %s540 = sphi 0, %s540
      %s542 = sphi 0, %s540
      %s543 = sphi 0, %s542
      %s557 = sphi 0, %s543
      %s561 = sphi 0, %s561
      %s563 = sphi 0, %s561
      %s564 = sphi 0, %s563
      %s578 = sphi 0, %s564
      %s582 = sphi 0, %s582
      %s584 = sphi 0, %s582
      %s585 = sphi 0, %s584
      %s599 = sphi 0, %s585
      %s605 = sphi 0, %s607
      %s608 = sphi 0, %s605
      %s609 = sphi 0, %s608
      %s625 = sphi 0, %s609
    $region4: #{text_image_transformer.1} parent=1 // loop_header_branch
      %42 = sbr.rel (%p40) target = $region8
    $region5: #{text_image_transformer.1} parent=1 // loop_body
      %s44 = ssub.s32 %s39, 1
      %s45 = ssub.s32 %s39, 2
      %s46 = sadd.s32 %s39, 1
      %s47 = ssub.s32 %s39, %s46
      %p48 = scmp.eq.s32.totalorder %s47, 0
      %s50 = sadd.s32 %s49, 1
      %s51 = scalar_select %p48, %s49, %s50
      %p54 = pneg %p48
      %p55 = scmp.eq.s32.totalorder %s39, 1
      %p56 = por %p54, %p55
      %p57 = scmp.ne.s32.totalorder %s49, %s52
      %p58 = scmp.eq.s32.totalorder %s39, 0
      %p59 = por %p57, %p58
      %p60 = scmp.ne.s32.totalorder %s49, %s52
      %p61 = scmp.eq.s32.totalorder %s44, 1
      %p62 = por %p60, %p61
      %p63 = scmp.ne.s32.totalorder %s52, %s53
      %p64 = scmp.eq.s32.totalorder %s44, 0
      %p65 = por %p63, %p64
      %p66 = scmp.ne.s32.totalorder %s52, %s53
      %p67 = scmp.eq.s32.totalorder %s45, 1
      %p68 = por %p66, %p67
      %p70 = scmp.ne.s32.totalorder %s53, %s69
      %p71 = scmp.eq.s32.totalorder %s45, 0
      %p72 = por %p70, %p71
      %s73 = ssub.s32 %s39, %s46
      %p74 = scmp.eq.s32.totalorder %s73, 0
      %s76 = sadd.s32 %s75, 1
      %s77 = scalar_select %p74, %s75, %s76
      %p80 = pneg %p74
      %p81 = scmp.eq.s32.totalorder %s39, 1
      %p82 = por %p80, %p81
      %p83 = scmp.ne.s32.totalorder %s75, %s78
      %p84 = scmp.eq.s32.totalorder %s39, 0
      %p85 = por %p83, %p84
      %p86 = scmp.ne.s32.totalorder %s75, %s78
      %p87 = scmp.eq.s32.totalorder %s44, 1
      %p88 = por %p86, %p87
      %p89 = scmp.ne.s32.totalorder %s78, %s79
      %p90 = scmp.eq.s32.totalorder %s44, 0
      %p91 = por %p89, %p90
      %p92 = scmp.ne.s32.totalorder %s78, %s79
      %p93 = scmp.eq.s32.totalorder %s45, 1
      %p94 = por %p92, %p93
      %p96 = scmp.ne.s32.totalorder %s79, %s95
      %p97 = scmp.eq.s32.totalorder %s45, 0
      %p98 = por %p96, %p97
      %s100 = sadd.s32 %s99, 1
      %p103 = scmp.eq.s32.totalorder %s39, 1
      %p104 = scmp.ne.s32.totalorder %s99, %s101
      %p105 = scmp.eq.s32.totalorder %s39, 0
      %p106 = por %p104, %p105
      %p107 = scmp.ne.s32.totalorder %s99, %s101
      %p108 = scmp.eq.s32.totalorder %s44, 1
      %p109 = por %p107, %p108
      %p110 = scmp.ne.s32.totalorder %s101, %s102
      %p111 = scmp.eq.s32.totalorder %s44, 0
      %p112 = por %p110, %p111
      %p113 = scmp.ne.s32.totalorder %s101, %s102
      %p114 = scmp.eq.s32.totalorder %s45, 1
      %p115 = por %p113, %p114
      %p117 = scmp.ne.s32.totalorder %s102, %s116
      %p118 = scmp.eq.s32.totalorder %s45, 0
      %p119 = por %p117, %p118
      %s121 = sadd.s32 %s120, 1
      %p124 = scmp.eq.s32.totalorder %s39, 1
      %p125 = scmp.ne.s32.totalorder %s120, %s122
      %p126 = scmp.eq.s32.totalorder %s39, 0
      %p127 = por %p125, %p126
      %p128 = scmp.ne.s32.totalorder %s120, %s122
      %p129 = scmp.eq.s32.totalorder %s44, 1
      %p130 = por %p128, %p129
      %p131 = scmp.ne.s32.totalorder %s122, %s123
      %p132 = scmp.eq.s32.totalorder %s44, 0
      %p133 = por %p131, %p132
      %p134 = scmp.ne.s32.totalorder %s122, %s123
      %p135 = scmp.eq.s32.totalorder %s45, 1
      %p136 = por %p134, %p135
      %p138 = scmp.ne.s32.totalorder %s123, %s137
      %p139 = scmp.eq.s32.totalorder %s45, 0
      %p140 = por %p138, %p139
      %s142 = sadd.s32 %s141, 1
      %p145 = scmp.eq.s32.totalorder %s39, 1
      %p146 = scmp.ne.s32.totalorder %s141, %s143
      %p147 = scmp.eq.s32.totalorder %s39, 0
      %p148 = por %p146, %p147
      %p149 = scmp.ne.s32.totalorder %s141, %s143
      %p150 = scmp.eq.s32.totalorder %s44, 1
      %p151 = por %p149, %p150
      %p152 = scmp.ne.s32.totalorder %s143, %s144
      %p153 = scmp.eq.s32.totalorder %s44, 0
      %p154 = por %p152, %p153
      %p155 = scmp.ne.s32.totalorder %s143, %s144
      %p156 = scmp.eq.s32.totalorder %s45, 1
      %p157 = por %p155, %p156
      %p159 = scmp.ne.s32.totalorder %s144, %s158
      %p160 = scmp.eq.s32.totalorder %s45, 0
      %p161 = por %p159, %p160
      %s163 = sadd.s32 %s162, 1
      %p166 = scmp.eq.s32.totalorder %s39, 1
      %p167 = scmp.ne.s32.totalorder %s162, %s164
      %p168 = scmp.eq.s32.totalorder %s39, 0
      %p169 = por %p167, %p168
      %p170 = scmp.ne.s32.totalorder %s162, %s164
      %p171 = scmp.eq.s32.totalorder %s44, 1
      %p172 = por %p170, %p171
      %p173 = scmp.ne.s32.totalorder %s164, %s165
      %p174 = scmp.eq.s32.totalorder %s44, 0
      %p175 = por %p173, %p174
      %p176 = scmp.ne.s32.totalorder %s164, %s165
      %p177 = scmp.eq.s32.totalorder %s45, 1
      %p178 = por %p176, %p177
      %p180 = scmp.ne.s32.totalorder %s165, %s179
      %p181 = scmp.eq.s32.totalorder %s45, 0
      %p182 = por %p180, %p181
      %s184 = sadd.s32 %s183, 1
      %p187 = scmp.eq.s32.totalorder %s39, 1
      %p188 = scmp.ne.s32.totalorder %s183, %s185
      %p189 = scmp.eq.s32.totalorder %s39, 0
      %p190 = por %p188, %p189
      %p191 = scmp.ne.s32.totalorder %s183, %s185
      %p192 = scmp.eq.s32.totalorder %s44, 1
      %p193 = por %p191, %p192
      %p194 = scmp.ne.s32.totalorder %s185, %s186
      %p195 = scmp.eq.s32.totalorder %s44, 0
      %p196 = por %p194, %p195
      %p197 = scmp.ne.s32.totalorder %s185, %s186
      %p198 = scmp.eq.s32.totalorder %s45, 1
      %p199 = por %p197, %p198
      %p201 = scmp.ne.s32.totalorder %s186, %s200
      %p202 = scmp.eq.s32.totalorder %s45, 0
      %p203 = por %p201, %p202
      %s205 = sadd.s32 %s204, 1
      %p208 = scmp.eq.s32.totalorder %s39, 1
      %p209 = scmp.ne.s32.totalorder %s204, %s206
      %p210 = scmp.eq.s32.totalorder %s39, 0
      %p211 = por %p209, %p210
      %p212 = scmp.ne.s32.totalorder %s204, %s206
      %p213 = scmp.eq.s32.totalorder %s44, 1
      %p214 = por %p212, %p213
      %p215 = scmp.ne.s32.totalorder %s206, %s207
      %p216 = scmp.eq.s32.totalorder %s44, 0
      %p217 = por %p215, %p216
      %p218 = scmp.ne.s32.totalorder %s206, %s207
      %p219 = scmp.eq.s32.totalorder %s45, 1
      %p220 = por %p218, %p219
      %p222 = scmp.ne.s32.totalorder %s207, %s221
      %p223 = scmp.eq.s32.totalorder %s45, 0
      %p224 = por %p222, %p223
      %s226 = sadd.s32 %s225, 1
      %p229 = scmp.eq.s32.totalorder %s39, 1
      %p230 = scmp.ne.s32.totalorder %s225, %s227
      %p231 = scmp.eq.s32.totalorder %s39, 0
      %p232 = por %p230, %p231
      %p233 = scmp.ne.s32.totalorder %s225, %s227
      %p234 = scmp.eq.s32.totalorder %s44, 1
      %p235 = por %p233, %p234
      %p236 = scmp.ne.s32.totalorder %s227, %s228
      %p237 = scmp.eq.s32.totalorder %s44, 0
      %p238 = por %p236, %p237
      %p239 = scmp.ne.s32.totalorder %s227, %s228
      %p240 = scmp.eq.s32.totalorder %s45, 1
      %p241 = por %p239, %p240
      %p243 = scmp.ne.s32.totalorder %s228, %s242
      %p244 = scmp.eq.s32.totalorder %s45, 0
      %p245 = por %p243, %p244
      %s247 = sadd.s32 %s246, 1
      %p250 = scmp.eq.s32.totalorder %s39, 1
      %p251 = scmp.ne.s32.totalorder %s246, %s248
      %p252 = scmp.eq.s32.totalorder %s39, 0
      %p253 = por %p251, %p252
      %p254 = scmp.ne.s32.totalorder %s246, %s248
      %p255 = scmp.eq.s32.totalorder %s44, 1
      %p256 = por %p254, %p255
      %p257 = scmp.ne.s32.totalorder %s248, %s249
      %p258 = scmp.eq.s32.totalorder %s44, 0
      %p259 = por %p257, %p258
      %p260 = scmp.ne.s32.totalorder %s248, %s249
      %p261 = scmp.eq.s32.totalorder %s45, 1
      %p262 = por %p260, %p261
      %p264 = scmp.ne.s32.totalorder %s249, %s263
      %p265 = scmp.eq.s32.totalorder %s45, 0
      %p266 = por %p264, %p265
      %s268 = sadd.s32 %s267, 1
      %p271 = scmp.eq.s32.totalorder %s39, 1
      %p272 = scmp.ne.s32.totalorder %s267, %s269
      %p273 = scmp.eq.s32.totalorder %s39, 0
      %p274 = por %p272, %p273
      %p275 = scmp.ne.s32.totalorder %s267, %s269
      %p276 = scmp.eq.s32.totalorder %s44, 1
      %p277 = por %p275, %p276
      %p278 = scmp.ne.s32.totalorder %s269, %s270
      %p279 = scmp.eq.s32.totalorder %s44, 0
      %p280 = por %p278, %p279
      %p281 = scmp.ne.s32.totalorder %s269, %s270
      %p282 = scmp.eq.s32.totalorder %s45, 1
      %p283 = por %p281, %p282
      %p285 = scmp.ne.s32.totalorder %s270, %s284
      %p286 = scmp.eq.s32.totalorder %s45, 0
      %p287 = por %p285, %p286
      %s289 = sadd.s32 %s288, 1
      %p292 = scmp.eq.s32.totalorder %s39, 1
      %p293 = scmp.ne.s32.totalorder %s288, %s290
      %p294 = scmp.eq.s32.totalorder %s39, 0
      %p295 = por %p293, %p294
      %p296 = scmp.ne.s32.totalorder %s288, %s290
      %p297 = scmp.eq.s32.totalorder %s44, 1
      %p298 = por %p296, %p297
      %p299 = scmp.ne.s32.totalorder %s290, %s291
      %p300 = scmp.eq.s32.totalorder %s44, 0
      %p301 = por %p299, %p300
      %p302 = scmp.ne.s32.totalorder %s290, %s291
      %p303 = scmp.eq.s32.totalorder %s45, 1
      %p304 = por %p302, %p303
      %p306 = scmp.ne.s32.totalorder %s291, %s305
      %p307 = scmp.eq.s32.totalorder %s45, 0
      %p308 = por %p306, %p307
      %s310 = sadd.s32 %s309, 1
      %p313 = scmp.eq.s32.totalorder %s39, 1
      %p314 = scmp.ne.s32.totalorder %s309, %s311
      %p315 = scmp.eq.s32.totalorder %s39, 0
      %p316 = por %p314, %p315
      %p317 = scmp.ne.s32.totalorder %s309, %s311
      %p318 = scmp.eq.s32.totalorder %s44, 1
      %p319 = por %p317, %p318
      %p320 = scmp.ne.s32.totalorder %s311, %s312
      %p321 = scmp.eq.s32.totalorder %s44, 0
      %p322 = por %p320, %p321
      %p323 = scmp.ne.s32.totalorder %s311, %s312
      %p324 = scmp.eq.s32.totalorder %s45, 1
      %p325 = por %p323, %p324
      %p327 = scmp.ne.s32.totalorder %s312, %s326
      %p328 = scmp.eq.s32.totalorder %s45, 0
      %p329 = por %p327, %p328
      %s331 = sadd.s32 %s330, 1
      %p334 = scmp.eq.s32.totalorder %s39, 1
      %p335 = scmp.ne.s32.totalorder %s330, %s332
      %p336 = scmp.eq.s32.totalorder %s39, 0
      %p337 = por %p335, %p336
      %p338 = scmp.ne.s32.totalorder %s330, %s332
      %p339 = scmp.eq.s32.totalorder %s44, 1
      %p340 = por %p338, %p339
      %p341 = scmp.ne.s32.totalorder %s332, %s333
      %p342 = scmp.eq.s32.totalorder %s44, 0
      %p343 = por %p341, %p342
      %p344 = scmp.ne.s32.totalorder %s332, %s333
      %p345 = scmp.eq.s32.totalorder %s45, 1
      %p346 = por %p344, %p345
      %p348 = scmp.ne.s32.totalorder %s333, %s347
      %p349 = scmp.eq.s32.totalorder %s45, 0
      %p350 = por %p348, %p349
      %s352 = sadd.s32 %s351, 1
      %p355 = scmp.eq.s32.totalorder %s39, 1
      %p356 = scmp.ne.s32.totalorder %s351, %s353
      %p357 = scmp.eq.s32.totalorder %s39, 0
      %p358 = por %p356, %p357
      %p359 = scmp.ne.s32.totalorder %s351, %s353
      %p360 = scmp.eq.s32.totalorder %s44, 1
      %p361 = por %p359, %p360
      %p362 = scmp.ne.s32.totalorder %s353, %s354
      %p363 = scmp.eq.s32.totalorder %s44, 0
      %p364 = por %p362, %p363
      %p365 = scmp.ne.s32.totalorder %s353, %s354
      %p366 = scmp.eq.s32.totalorder %s45, 1
      %p367 = por %p365, %p366
      %p369 = scmp.ne.s32.totalorder %s354, %s368
      %p370 = scmp.eq.s32.totalorder %s45, 0
      %p371 = por %p369, %p370
      %s373 = sadd.s32 %s372, 1
      %p376 = scmp.eq.s32.totalorder %s39, 1
      %p377 = scmp.ne.s32.totalorder %s372, %s374
      %p378 = scmp.eq.s32.totalorder %s39, 0
      %p379 = por %p377, %p378
      %p380 = scmp.ne.s32.totalorder %s372, %s374
      %p381 = scmp.eq.s32.totalorder %s44, 1
      %p382 = por %p380, %p381
      %p383 = scmp.ne.s32.totalorder %s374, %s375
      %p384 = scmp.eq.s32.totalorder %s44, 0
      %p385 = por %p383, %p384
      %p386 = scmp.ne.s32.totalorder %s374, %s375
      %p387 = scmp.eq.s32.totalorder %s45, 1
      %p388 = por %p386, %p387
      %p390 = scmp.ne.s32.totalorder %s375, %s389
      %p391 = scmp.eq.s32.totalorder %s45, 0
      %p392 = por %p390, %p391
      %s394 = sadd.s32 %s393, 1
      %p397 = scmp.eq.s32.totalorder %s39, 1
      %p398 = scmp.ne.s32.totalorder %s393, %s395
      %p399 = scmp.eq.s32.totalorder %s39, 0
      %p400 = por %p398, %p399
      %p401 = scmp.ne.s32.totalorder %s393, %s395
      %p402 = scmp.eq.s32.totalorder %s44, 1
      %p403 = por %p401, %p402
      %p404 = scmp.ne.s32.totalorder %s395, %s396
      %p405 = scmp.eq.s32.totalorder %s44, 0
      %p406 = por %p404, %p405
      %p407 = scmp.ne.s32.totalorder %s395, %s396
      %p408 = scmp.eq.s32.totalorder %s45, 1
      %p409 = por %p407, %p408
      %p411 = scmp.ne.s32.totalorder %s396, %s410
      %p412 = scmp.eq.s32.totalorder %s45, 0
      %p413 = por %p411, %p412
      %s415 = sadd.s32 %s414, 1
      %p418 = scmp.eq.s32.totalorder %s39, 1
      %p419 = scmp.ne.s32.totalorder %s414, %s416
      %p420 = scmp.eq.s32.totalorder %s39, 0
      %p421 = por %p419, %p420
      %p422 = scmp.ne.s32.totalorder %s414, %s416
      %p423 = scmp.eq.s32.totalorder %s44, 1
      %p424 = por %p422, %p423
      %p425 = scmp.ne.s32.totalorder %s416, %s417
      %p426 = scmp.eq.s32.totalorder %s44, 0
      %p427 = por %p425, %p426
      %p428 = scmp.ne.s32.totalorder %s416, %s417
      %p429 = scmp.eq.s32.totalorder %s45, 1
      %p430 = por %p428, %p429
      %p432 = scmp.ne.s32.totalorder %s417, %s431
      %p433 = scmp.eq.s32.totalorder %s45, 0
      %p434 = por %p432, %p433
      %s436 = sadd.s32 %s435, 1
      %p439 = scmp.eq.s32.totalorder %s39, 1
      %p440 = scmp.ne.s32.totalorder %s435, %s437
      %p441 = scmp.eq.s32.totalorder %s39, 0
      %p442 = por %p440, %p441
      %p443 = scmp.ne.s32.totalorder %s435, %s437
      %p444 = scmp.eq.s32.totalorder %s44, 1
      %p445 = por %p443, %p444
      %p446 = scmp.ne.s32.totalorder %s437, %s438
      %p447 = scmp.eq.s32.totalorder %s44, 0
      %p448 = por %p446, %p447
      %p449 = scmp.ne.s32.totalorder %s437, %s438
      %p450 = scmp.eq.s32.totalorder %s45, 1
      %p451 = por %p449, %p450
      %p453 = scmp.ne.s32.totalorder %s438, %s452
      %p454 = scmp.eq.s32.totalorder %s45, 0
      %p455 = por %p453, %p454
      %s457 = sadd.s32 %s456, 1
      %p460 = scmp.eq.s32.totalorder %s39, 1
      %p461 = scmp.ne.s32.totalorder %s456, %s458
      %p462 = scmp.eq.s32.totalorder %s39, 0
      %p463 = por %p461, %p462
      %p464 = scmp.ne.s32.totalorder %s456, %s458
      %p465 = scmp.eq.s32.totalorder %s44, 1
      %p466 = por %p464, %p465
      %p467 = scmp.ne.s32.totalorder %s458, %s459
      %p468 = scmp.eq.s32.totalorder %s44, 0
      %p469 = por %p467, %p468
      %p470 = scmp.ne.s32.totalorder %s458, %s459
      %p471 = scmp.eq.s32.totalorder %s45, 1
      %p472 = por %p470, %p471
      %p474 = scmp.ne.s32.totalorder %s459, %s473
      %p475 = scmp.eq.s32.totalorder %s45, 0
      %p476 = por %p474, %p475
      %s478 = sadd.s32 %s477, 1
      %p481 = scmp.eq.s32.totalorder %s39, 1
      %p482 = scmp.ne.s32.totalorder %s477, %s479
      %p483 = scmp.eq.s32.totalorder %s39, 0
      %p484 = por %p482, %p483
      %p485 = scmp.ne.s32.totalorder %s477, %s479
      %p486 = scmp.eq.s32.totalorder %s44, 1
      %p487 = por %p485, %p486
      %p488 = scmp.ne.s32.totalorder %s479, %s480
      %p489 = scmp.eq.s32.totalorder %s44, 0
      %p490 = por %p488, %p489
      %p491 = scmp.ne.s32.totalorder %s479, %s480
      %p492 = scmp.eq.s32.totalorder %s45, 1
      %p493 = por %p491, %p492
      %p495 = scmp.ne.s32.totalorder %s480, %s494
      %p496 = scmp.eq.s32.totalorder %s45, 0
      %p497 = por %p495, %p496
      %s499 = sadd.s32 %s498, 1
      %p502 = scmp.eq.s32.totalorder %s39, 1
      %p503 = scmp.ne.s32.totalorder %s498, %s500
      %p504 = scmp.eq.s32.totalorder %s39, 0
      %p505 = por %p503, %p504
      %p506 = scmp.ne.s32.totalorder %s498, %s500
      %p507 = scmp.eq.s32.totalorder %s44, 1
      %p508 = por %p506, %p507
      %p509 = scmp.ne.s32.totalorder %s500, %s501
      %p510 = scmp.eq.s32.totalorder %s44, 0
      %p511 = por %p509, %p510
      %p512 = scmp.ne.s32.totalorder %s500, %s501
      %p513 = scmp.eq.s32.totalorder %s45, 1
      %p514 = por %p512, %p513
      %p516 = scmp.ne.s32.totalorder %s501, %s515
      %p517 = scmp.eq.s32.totalorder %s45, 0
      %p518 = por %p516, %p517
      %s520 = sadd.s32 %s519, 1
      %p523 = scmp.eq.s32.totalorder %s39, 1
      %p524 = scmp.ne.s32.totalorder %s519, %s521
      %p525 = scmp.eq.s32.totalorder %s39, 0
      %p526 = por %p524, %p525
      %p527 = scmp.ne.s32.totalorder %s519, %s521
      %p528 = scmp.eq.s32.totalorder %s44, 1
      %p529 = por %p527, %p528
      %p530 = scmp.ne.s32.totalorder %s521, %s522
      %p531 = scmp.eq.s32.totalorder %s44, 0
      %p532 = por %p530, %p531
      %p533 = scmp.ne.s32.totalorder %s521, %s522
      %p534 = scmp.eq.s32.totalorder %s45, 1
      %p535 = por %p533, %p534
      %p537 = scmp.ne.s32.totalorder %s522, %s536
      %p538 = scmp.eq.s32.totalorder %s45, 0
      %p539 = por %p537, %p538
      %s541 = sadd.s32 %s540, 1
      %p544 = scmp.eq.s32.totalorder %s39, 1
      %p545 = scmp.ne.s32.totalorder %s540, %s542
      %p546 = scmp.eq.s32.totalorder %s39, 0
      %p547 = por %p545, %p546
      %p548 = scmp.ne.s32.totalorder %s540, %s542
      %p549 = scmp.eq.s32.totalorder %s44, 1
      %p550 = por %p548, %p549
      %p551 = scmp.ne.s32.totalorder %s542, %s543
      %p552 = scmp.eq.s32.totalorder %s44, 0
      %p553 = por %p551, %p552
      %p554 = scmp.ne.s32.totalorder %s542, %s543
      %p555 = scmp.eq.s32.totalorder %s45, 1
      %p556 = por %p554, %p555
      %p558 = scmp.ne.s32.totalorder %s543, %s557
      %p559 = scmp.eq.s32.totalorder %s45, 0
      %p560 = por %p558, %p559
      %s562 = sadd.s32 %s561, 1
      %p565 = scmp.eq.s32.totalorder %s39, 1
      %p566 = scmp.ne.s32.totalorder %s561, %s563
      %p567 = scmp.eq.s32.totalorder %s39, 0
      %p568 = por %p566, %p567
      %p569 = scmp.ne.s32.totalorder %s561, %s563
      %p570 = scmp.eq.s32.totalorder %s44, 1
      %p571 = por %p569, %p570
      %p572 = scmp.ne.s32.totalorder %s563, %s564
      %p573 = scmp.eq.s32.totalorder %s44, 0
      %p574 = por %p572, %p573
      %p575 = scmp.ne.s32.totalorder %s563, %s564
      %p576 = scmp.eq.s32.totalorder %s45, 1
      %p577 = por %p575, %p576
      %p579 = scmp.ne.s32.totalorder %s564, %s578
      %p580 = scmp.eq.s32.totalorder %s45, 0
      %p581 = por %p579, %p580
      %s583 = sadd.s32 %s582, 1
      %p586 = scmp.eq.s32.totalorder %s39, 1
      %p587 = scmp.ne.s32.totalorder %s582, %s584
      %p588 = scmp.eq.s32.totalorder %s39, 0
      %p589 = por %p587, %p588
      %p590 = scmp.ne.s32.totalorder %s582, %s584
      %p591 = scmp.eq.s32.totalorder %s44, 1
      %p592 = por %p590, %p591
      %p593 = scmp.ne.s32.totalorder %s584, %s585
      %p594 = scmp.eq.s32.totalorder %s44, 0
      %p595 = por %p593, %p594
      %p596 = scmp.ne.s32.totalorder %s584, %s585
      %p597 = scmp.eq.s32.totalorder %s45, 1
      %p598 = por %p596, %p597
      %p600 = scmp.ne.s32.totalorder %s585, %s599
      %p601 = scmp.eq.s32.totalorder %s45, 0
      %p602 = por %p600, %p601
      %s603 = ssub.s32 %s39, %s46
      %p604 = scmp.eq.s32.totalorder %s603, 0
      %s606 = sadd.s32 %s605, 1
      %s607 = scalar_select %p604, %s605, %s606
      %p610 = pneg %p604
      %p611 = scmp.eq.s32.totalorder %s39, 1
      %p612 = por %p610, %p611
      %p613 = scmp.ne.s32.totalorder %s605, %s608
      %p614 = scmp.eq.s32.totalorder %s39, 0
      %p615 = por %p613, %p614
      %p616 = scmp.ne.s32.totalorder %s605, %s608
      %p617 = scmp.eq.s32.totalorder %s44, 1
      %p618 = por %p616, %p617
      %p619 = scmp.ne.s32.totalorder %s608, %s609
      %p620 = scmp.eq.s32.totalorder %s44, 0
      %p621 = por %p619, %p620
      %p622 = scmp.ne.s32.totalorder %s608, %s609
      %p623 = scmp.eq.s32.totalorder %s45, 1
      %p624 = por %p622, %p623
      %p626 = scmp.ne.s32.totalorder %s609, %s625
      %p627 = scmp.eq.s32.totalorder %s45, 0
      %p628 = por %p626, %p627
      %p629 = scmp.le.s32.totalorder 1, %s39
      %p630 = scmp.lt.s32.totalorder %s39, 3
      %p631 = pnand %p629, %p630
      %p632 = pneg %p631
      // Predicated region
      $region9: #{text_image_transformer.1} parent=5 // pred_check
        _
      $region10: #{text_image_transformer.1} parent=5 // pred_check_branch
        %634 = sbr.rel (%p631) target = $region12
      $region11: #{text_image_transformer.1} parent=5 // pred_region
        %s635 = ssub.s32 %s39, 1
        // Predicated region
        $region13: #{text_image_transformer.1} parent=11 // pred_check
          %p636 = pneg %p112
        $region14: #{text_image_transformer.1} parent=11 // pred_check_branch
          %638 = sbr.rel (%p636) target = $region16
        $region15: #{text_image_transformer.1} parent=11 // pred_region
          _
        $region16: #{text_image_transformer.1} parent=11 // pred_fallthru
          _
        // Predicated region
        $region17: #{text_image_transformer.1} parent=11 // pred_check
          %p639 = pneg %p133
        $region18: #{text_image_transformer.1} parent=11 // pred_check_branch
          %641 = sbr.rel (%p639) target = $region20
        $region19: #{text_image_transformer.1} parent=11 // pred_region
          _
        $region20: #{text_image_transformer.1} parent=11 // pred_fallthru
          _
        // Predicated region
        $region21: #{text_image_transformer.1} parent=11 // pred_check
          %p642 = pneg %p154
        $region22: #{text_image_transformer.1} parent=11 // pred_check_branch
          %644 = sbr.rel (%p642) target = $region24
        $region23: #{text_image_transformer.1} parent=11 // pred_region
          _
        $region24: #{text_image_transformer.1} parent=11 // pred_fallthru
          _
        // Predicated region
        $region25: #{text_image_transformer.1} parent=11 // pred_check
          %p645 = pneg %p175
        $region26: #{text_image_transformer.1} parent=11 // pred_check_branch
          %647 = sbr.rel (%p645) target = $region28
        $region27: #{text_image_transformer.1} parent=11 // pred_region
          _
        $region28: #{text_image_transformer.1} parent=11 // pred_fallthru
          _
        // Predicated region
        $region29: #{text_image_transformer.1} parent=11 // pred_check
          %p648 = pneg %p196
        $region30: #{text_image_transformer.1} parent=11 // pred_check_branch
          %650 = sbr.rel (%p648) target = $region32
        $region31: #{text_image_transformer.1} parent=11 // pred_region
          _
        $region32: #{text_image_transformer.1} parent=11 // pred_fallthru
          _
        // Predicated region
        $region33: #{text_image_transformer.1} parent=11 // pred_check
          %p651 = pneg %p217
        $region34: #{text_image_transformer.1} parent=11 // pred_check_branch
          %653 = sbr.rel (%p651) target = $region36
        $region35: #{text_image_transformer.1} parent=11 // pred_region
          _
        $region36: #{text_image_transformer.1} parent=11 // pred_fallthru
          _
        // Predicated region
        $region37: #{text_image_transformer.1} parent=11 // pred_check
          %p654 = pneg %p238
        $region38: #{text_image_transformer.1} parent=11 // pred_check_branch
          %656 = sbr.rel (%p654) target = $region40
        $region39: #{text_image_transformer.1} parent=11 // pred_region
          _
        $region40: #{text_image_transformer.1} parent=11 // pred_fallthru
          _
        // Predicated region
        $region41: #{text_image_transformer.1} parent=11 // pred_check
          %p657 = pneg %p259
        $region42: #{text_image_transformer.1} parent=11 // pred_check_branch
          %659 = sbr.rel (%p657) target = $region44
        $region43: #{text_image_transformer.1} parent=11 // pred_region
          _
        $region44: #{text_image_transformer.1} parent=11 // pred_fallthru
          _
        // Predicated region
        $region45: #{text_image_transformer.1} parent=11 // pred_check
          %p660 = pneg %p280
        $region46: #{text_image_transformer.1} parent=11 // pred_check_branch
          %662 = sbr.rel (%p660) target = $region48
        $region47: #{text_image_transformer.1} parent=11 // pred_region
          _
        $region48: #{text_image_transformer.1} parent=11 // pred_fallthru
          _
        // Predicated region
        $region49: #{text_image_transformer.1} parent=11 // pred_check
          %p663 = pneg %p301
        $region50: #{text_image_transformer.1} parent=11 // pred_check_branch
          %665 = sbr.rel (%p663) target = $region52
        $region51: #{text_image_transformer.1} parent=11 // pred_region
          %s667 = ssub.s32 16, 16
          %668 = vsyncadd [#allocation3], %s667
          %s670 = sshll.u32 [#allocation2], 4
          %s671 = int_to_ptr.vmem [resolvable:$true] %s670
          %673 = dma.hbm_to_vmem [thread:$0]  %s11, 16, %s671, [#allocation3]
        $region52: #{text_image_transformer.1} parent=11 // pred_fallthru
          _
        // Predicated region
        $region53: #{text_image_transformer.1} parent=11 // pred_check
          %p674 = pneg %p322
        $region54: #{text_image_transformer.1} parent=11 // pred_check_branch
          %676 = sbr.rel (%p674) target = $region56
        $region55: #{text_image_transformer.1} parent=11 // pred_region
          %s678 = ssub.s32 16, 16
          %679 = vsyncadd [#allocation6], %s678
          %s681 = sshll.u32 [#allocation5], 4
          %s682 = int_to_ptr.vmem [resolvable:$true] %s681
          %684 = dma.hbm_to_vmem [thread:$0]  %s12, 16, %s682, [#allocation6]
        $region56: #{text_image_transformer.1} parent=11 // pred_fallthru
          _
        // Predicated region
        $region57: #{text_image_transformer.1} parent=11 // pred_check
          %p685 = pneg %p343
        $region58: #{text_image_transformer.1} parent=11 // pred_check_branch
          %687 = sbr.rel (%p685) target = $region60
        $region59: #{text_image_transformer.1} parent=11 // pred_region
          %s689 = ssub.s32 16, 16
          %690 = vsyncadd [#allocation6], %s689
          %s692 = sshll.u32 [#allocation7], 4
          %s693 = int_to_ptr.vmem [resolvable:$true] %s692
          %695 = dma.hbm_to_vmem [thread:$0]  %s13, 16, %s693, [#allocation6]
        $region60: #{text_image_transformer.1} parent=11 // pred_fallthru
          _
        // Predicated region
        $region61: #{text_image_transformer.1} parent=11 // pred_check
          %p696 = pneg %p364
        $region62: #{text_image_transformer.1} parent=11 // pred_check_branch
          %698 = sbr.rel (%p696) target = $region64
        $region63: #{text_image_transformer.1} parent=11 // pred_region
          %s700 = ssub.s32 16, 16
          %701 = vsyncadd [#allocation9], %s700
          %s703 = sshll.u32 [#allocation8], 4
          %s704 = int_to_ptr.vmem [resolvable:$true] %s703
          %706 = dma.hbm_to_vmem [thread:$0]  %s14, 16, %s704, [#allocation9]
        $region64: #{text_image_transformer.1} parent=11 // pred_fallthru
          _
        // Predicated region
        $region65: #{text_image_transformer.1} parent=11 // pred_check
          %p707 = pneg %p385
        $region66: #{text_image_transformer.1} parent=11 // pred_check_branch
          %709 = sbr.rel (%p707) target = $region68
        $region67: #{text_image_transformer.1} parent=11 // pred_region
          _
        $region68: #{text_image_transformer.1} parent=11 // pred_fallthru
          _
        // Predicated region
        $region69: #{text_image_transformer.1} parent=11 // pred_check
          %p710 = pneg %p406
        $region70: #{text_image_transformer.1} parent=11 // pred_check_branch
          %712 = sbr.rel (%p710) target = $region72
        $region71: #{text_image_transformer.1} parent=11 // pred_region
          _
        $region72: #{text_image_transformer.1} parent=11 // pred_fallthru
          _
        // Predicated region
        $region73: #{text_image_transformer.1} parent=11 // pred_check
          %p713 = pneg %p427
        $region74: #{text_image_transformer.1} parent=11 // pred_check_branch
          %715 = sbr.rel (%p713) target = $region76
        $region75: #{text_image_transformer.1} parent=11 // pred_region
          _
        $region76: #{text_image_transformer.1} parent=11 // pred_fallthru
          _
        // Predicated region
        $region77: #{text_image_transformer.1} parent=11 // pred_check
          %p716 = pneg %p448
        $region78: #{text_image_transformer.1} parent=11 // pred_check_branch
          %718 = sbr.rel (%p716) target = $region80
        $region79: #{text_image_transformer.1} parent=11 // pred_region
          _
        $region80: #{text_image_transformer.1} parent=11 // pred_fallthru
          _
        // Predicated region
        $region81: #{text_image_transformer.1} parent=11 // pred_check
          %p719 = pneg %p469
        $region82: #{text_image_transformer.1} parent=11 // pred_check_branch
          %721 = sbr.rel (%p719) target = $region84
        $region83: #{text_image_transformer.1} parent=11 // pred_region
          %s723 = ssub.s32 16, 16
          %724 = vsyncadd [#allocation9], %s723
          %s726 = sshll.u32 [#allocation10], 4
          %s727 = int_to_ptr.vmem [resolvable:$true] %s726
          %729 = dma.hbm_to_vmem [thread:$0]  %s19, 16, %s727, [#allocation9]
        $region84: #{text_image_transformer.1} parent=11 // pred_fallthru
          _
        // Predicated region
        $region85: #{text_image_transformer.1} parent=11 // pred_check
          %p730 = pneg %p490
        $region86: #{text_image_transformer.1} parent=11 // pred_check_branch
          %732 = sbr.rel (%p730) target = $region88
        $region87: #{text_image_transformer.1} parent=11 // pred_region
          _
        $region88: #{text_image_transformer.1} parent=11 // pred_fallthru
          _
        // Predicated region
        $region89: #{text_image_transformer.1} parent=11 // pred_check
          %p733 = pneg %p511
        $region90: #{text_image_transformer.1} parent=11 // pred_check_branch
          %735 = sbr.rel (%p733) target = $region92
        $region91: #{text_image_transformer.1} parent=11 // pred_region
          %s737 = ssub.s32 16, 16
          %738 = vsyncadd [#allocation12], %s737
          %s740 = sshll.u32 [#allocation11], 4
          %s741 = int_to_ptr.vmem [resolvable:$true] %s740
          %743 = dma.hbm_to_vmem [thread:$0]  %s21, 16, %s741, [#allocation12]
        $region92: #{text_image_transformer.1} parent=11 // pred_fallthru
          _
        // Predicated region
        $region93: #{text_image_transformer.1} parent=11 // pred_check
          %p744 = pneg %p532
        $region94: #{text_image_transformer.1} parent=11 // pred_check_branch
          %746 = sbr.rel (%p744) target = $region96
        $region95: #{text_image_transformer.1} parent=11 // pred_region
          _
        $region96: #{text_image_transformer.1} parent=11 // pred_fallthru
          _
        // Predicated region
        $region97: #{text_image_transformer.1} parent=11 // pred_check
          %p747 = pneg %p553
        $region98: #{text_image_transformer.1} parent=11 // pred_check_branch
          %749 = sbr.rel (%p747) target = $region100
        $region99: #{text_image_transformer.1} parent=11 // pred_region
          %s751 = ssub.s32 16, 16
          %752 = vsyncadd [#allocation12], %s751
          %s754 = sshll.u32 [#allocation13], 4
          %s755 = int_to_ptr.vmem [resolvable:$true] %s754
          %757 = dma.hbm_to_vmem [thread:$0]  %s23, 16, %s755, [#allocation12]
        $region100: #{text_image_transformer.1} parent=11 // pred_fallthru
          _
        // Predicated region
        $region101: #{text_image_transformer.1} parent=11 // pred_check
          %p758 = pneg %p574
        $region102: #{text_image_transformer.1} parent=11 // pred_check_branch
          %760 = sbr.rel (%p758) target = $region104
        $region103: #{text_image_transformer.1} parent=11 // pred_region
          _
        $region104: #{text_image_transformer.1} parent=11 // pred_fallthru
          _
        // Predicated region
        $region105: #{text_image_transformer.1} parent=11 // pred_check
          %p761 = pneg %p595
        $region106: #{text_image_transformer.1} parent=11 // pred_check_branch
          %763 = sbr.rel (%p761) target = $region108
        $region107: #{text_image_transformer.1} parent=11 // pred_region
          _
        $region108: #{text_image_transformer.1} parent=11 // pred_fallthru
          _
      $region12: #{text_image_transformer.1} parent=5 // pred_fallthru
        _
      %p764 = scmp.lt.s32.totalorder %s39, 2
      // Predicated region
      $region109: #{text_image_transformer.1} parent=5 // pred_check
        %p765 = pneg %p764
      $region110: #{text_image_transformer.1} parent=5 // pred_check_branch
        %767 = sbr.rel (%p765) target = $region112
      $region111: #{text_image_transformer.1} parent=5 // pred_region
        // Predicated region
        $region113: #{text_image_transformer.1} parent=111 // pred_check
          %p768 = pneg %p59
        $region114: #{text_image_transformer.1} parent=111 // pred_check_branch
          %770 = sbr.rel (%p768) target = $region116
        $region115: #{text_image_transformer.1} parent=111 // pred_region
          %p771 = scmp.lt.s32.totalorder %s39, 1
          %s772 = scalar_select %p771, %s39, 1
          %s773 = smul.addr %s772, 8
          %s774 = scalar_lea.vmem %s0, %s773
        $region116: #{text_image_transformer.1} parent=111 // pred_fallthru
          _
        // Predicated region
        $region117: #{text_image_transformer.1} parent=111 // pred_check
          %p775 = pneg %p85
        $region118: #{text_image_transformer.1} parent=111 // pred_check_branch
          %777 = sbr.rel (%p775) target = $region120
        $region119: #{text_image_transformer.1} parent=111 // pred_region
          %p778 = scmp.lt.s32.totalorder %s39, 1
          %s779 = scalar_select %p778, %s39, 1
          %s780 = smul.addr %s779, 8
          %s781 = scalar_lea.vmem %s1, %s780
        $region120: #{text_image_transformer.1} parent=111 // pred_fallthru
          _
      $region112: #{text_image_transformer.1} parent=5 // pred_fallthru
        _
      %p782 = scmp.le.s32.totalorder 1, %s39
      %p783 = scmp.lt.s32.totalorder %s39, 3
      %p784 = pnand %p782, %p783
      %p785 = pneg %p784
      // Predicated region
      $region121: #{text_image_transformer.1} parent=5 // pred_check
        _
      $region122: #{text_image_transformer.1} parent=5 // pred_check_branch
        %787 = sbr.rel (%p784) target = $region124
      $region123: #{text_image_transformer.1} parent=5 // pred_region
        %s788 = ssub.s32 %s39, 1
        // Predicated region
        $region125: #{text_image_transformer.1} parent=123 // pred_check
          %p789 = pneg %p301
        $region126: #{text_image_transformer.1} parent=123 // pred_check_branch
          %791 = sbr.rel (%p789) target = $region128
        $region127: #{text_image_transformer.1} parent=123 // pred_region
          %792 = dma.done [#allocation3], 16
        $region128: #{text_image_transformer.1} parent=123 // pred_fallthru
          _
        // Predicated region
        $region129: #{text_image_transformer.1} parent=123 // pred_check
          %p793 = pneg %p322
        $region130: #{text_image_transformer.1} parent=123 // pred_check_branch
          %795 = sbr.rel (%p793) target = $region132
        $region131: #{text_image_transformer.1} parent=123 // pred_region
          %796 = dma.done [#allocation6], 16
        $region132: #{text_image_transformer.1} parent=123 // pred_fallthru
          _
        // Predicated region
        $region133: #{text_image_transformer.1} parent=123 // pred_check
          %p797 = pneg %p343
        $region134: #{text_image_transformer.1} parent=123 // pred_check_branch
          %799 = sbr.rel (%p797) target = $region136
        $region135: #{text_image_transformer.1} parent=123 // pred_region
          %800 = dma.done [#allocation6], 16
        $region136: #{text_image_transformer.1} parent=123 // pred_fallthru
          _
        // Predicated region
        $region137: #{text_image_transformer.1} parent=123 // pred_check
          %p801 = pneg %p364
        $region138: #{text_image_transformer.1} parent=123 // pred_check_branch
          %803 = sbr.rel (%p801) target = $region140
        $region139: #{text_image_transformer.1} parent=123 // pred_region
          %804 = dma.done [#allocation9], 16
        $region140: #{text_image_transformer.1} parent=123 // pred_fallthru
          _
        // Predicated region
        $region141: #{text_image_transformer.1} parent=123 // pred_check
          %p805 = pneg %p469
        $region142: #{text_image_transformer.1} parent=123 // pred_check_branch
          %807 = sbr.rel (%p805) target = $region144
        $region143: #{text_image_transformer.1} parent=123 // pred_region
          %808 = dma.done [#allocation9], 16
        $region144: #{text_image_transformer.1} parent=123 // pred_fallthru
          _
        // Predicated region
        $region145: #{text_image_transformer.1} parent=123 // pred_check
          %p809 = pneg %p511
        $region146: #{text_image_transformer.1} parent=123 // pred_check_branch
          %811 = sbr.rel (%p809) target = $region148
        $region147: #{text_image_transformer.1} parent=123 // pred_region
          %812 = dma.done [#allocation12], 16
        $region148: #{text_image_transformer.1} parent=123 // pred_fallthru
          _
        // Predicated region
        $region149: #{text_image_transformer.1} parent=123 // pred_check
          %p813 = pneg %p553
        $region150: #{text_image_transformer.1} parent=123 // pred_check_branch
          %815 = sbr.rel (%p813) target = $region152
        $region151: #{text_image_transformer.1} parent=123 // pred_region
          %816 = dma.done [#allocation12], 16
        $region152: #{text_image_transformer.1} parent=123 // pred_fallthru
          _
        %p817 = scmp.lt.s32.totalorder %s44, 1
        %s818 = scalar_select %p817, %s44, 1
        %s819 = smul.addr %s818, 8
        %s820 = scalar_lea.vmem %s0, %s819
        %p821 = pneg %p65
        %p822 = pneg %p62
        %p823 = scmp.lt.s32.totalorder %s44, 1
        %s824 = scalar_select %p823, %s44, 1
        %s825 = smul.addr %s824, 8
        %s826 = scalar_lea.vmem %s1, %s825
        %p827 = pneg %p91
        %p828 = pneg %p88
        %p829 = pneg %p112
        %p830 = pneg %p109
        %p831 = pneg %p133
        %p832 = pneg %p130
        %p833 = pneg %p154
        %p834 = pneg %p151
        %p835 = pneg %p175
        %p836 = pneg %p172
        %p837 = pneg %p196
        %p838 = pneg %p193
        %p839 = pneg %p217
        %p840 = pneg %p214
        %p841 = pneg %p238
        %p842 = pneg %p235
        %p843 = pneg %p259
        %p844 = pneg %p256
        %p845 = pneg %p280
        %p846 = pneg %p277
        %p847 = pneg %p301
        %p848 = pneg %p298
        %p849 = pneg %p322
        %p850 = pneg %p319
        %p851 = pneg %p343
        %p852 = pneg %p340
        %p853 = pneg %p364
        %p854 = pneg %p361
        %p855 = pneg %p385
        %p856 = pneg %p382
        %p857 = pneg %p406
        %p858 = pneg %p403
        %p859 = pneg %p427
        %p860 = pneg %p424
        %p861 = pneg %p448
        %p862 = pneg %p445
        %p863 = pneg %p469
        %p864 = pneg %p466
        %p865 = pneg %p490
        %p866 = pneg %p487
        %p867 = pneg %p511
        %p868 = pneg %p508
        %p869 = pneg %p532
        %p870 = pneg %p529
        %p871 = pneg %p553
        %p872 = pneg %p550
        %p873 = pneg %p574
        %p874 = pneg %p571
        %p875 = pneg %p595
        %p876 = pneg %p592
        %p877 = pneg %p621
        %p878 = pneg %p618
        %s879 = sand.u32 %s608, 1
        %s880 = scalar_lea.sflag [#allocation4], %s879
        %s881 = sand.u32 %s608, 1
        %s882 = scalar_lea.vmem [#allocation14], %s881
        %p883 = scmp.lt.s32.totalorder %s44, 1
        %s884 = scalar_select %p883, %s44, 1
        %s885 = smul.addr %s884, 8
        %s886 = scalar_lea.vmem %s0, %s885
        %p887 = scmp.lt.s32.totalorder %s44, 1
        %s888 = scalar_select %p887, %s44, 1
        %s889 = smul.addr %s888, 8
        %s890 = scalar_lea.vmem %s1, %s889
        %v891 = vld [vmem:[%s886] sm:$0xff]
        %v892 = vld [vmem:[%s3] sm:$0x1]
        %v893 = vld [vmem:[%s4] sm:$0x1]
        %vm894 = vcmask 261120
        %v895 = vsel %vm894, %v891, 0.0
        %896 = vadd.xlane.f32.xlu0 %v895
        %v897 = vpop.xlane.xlu0 %896
        %v898 = vrcp.pop 32.0
        %v899 = vmul.f32 %v897, %v898
        %v900 = vsub.f32 %v891, %v899
        %v901 = vmul.f32 %v900, %v900
        %v902 = vsel %vm894, %v901, 0.0
        %903 = vadd.xlane.f32.xlu0 %v902
        %v904 = vpop.xlane.xlu0 %903
        %v905 = vmul.f32 %v904, %v898
        %v906 = vadd.f32 %v905, 1e-05
        %v907 = vrsqrt.pop %v906
        %v908 = vmul.f32 %v900, %v907
        %v910 = vlaneseq
        %v911 = vshrl.u32 %v910, 7
        %v912 = vsub.s32 0, %v911
        %v913 = vrot.slane %v892, %v912
        %v915 = vmul.f32 %v908, %v913
        %v917 = vlaneseq
        %v918 = vshrl.u32 %v917, 7
        %v919 = vsub.s32 0, %v918
        %v920 = vrot.slane %v893, %v919
        %v922 = vadd.f32 %v915, %v920
        %v923 = vld [vmem:[%s2] sm:$0xff]
        %v924 = vadd.f32 %v922, %v923
        %v925 = vld [vmem:[%s5] sm:$0xff]
        %v926 = vld [vmem:[%s5 + $0x8] sm:$0xff]
        %v927 = vld [vmem:[%s5 + $0x10] sm:$0xff]
        %v928 = vld [vmem:[%s5 + $0x18] sm:$0xff]
        %v930 = vsel %vm894, %v924, 0
        %932 = vmatprep.subr.mxu0 0.0
        %933 = vmatpush1.msra.mxu0 %v925
        %934 = vmatprep.subr.mxu0 0.0
        %935 = vmatpush1.msra.mxu0 %v926
        %936 = vmatprep.subr.mxu0 0.0
        %937 = vmatpush1.msra.mxu0 %v927
        %938 = vmatprep.subr.mxu0 0.0
        %939 = vmatpush1.msra.mxu0 %v928
        %940 = vmatprep.subr.mxu0 0.0
        %941 = vmatpush1.msra.mxu0 0.0
        %942 = vmatprep.subr.mxu0 0.0
        %943 = vmatpush1.msra.mxu0 0.0
        %944 = vmatprep.subr.mxu0 0.0
        %945 = vmatpush1.msra.mxu0 0.0
        %946 = vmatprep.subr.mxu0 0.0
        %947 = vmatpush1.msra.mxu0 0.0
        %948 = vmatprep.subr.mxu0 0.0
        %949 = vmatpush1.msra.mxu0 0.0
        %950 = vmatprep.subr.mxu0 0.0
        %951 = vmatpush1.msra.mxu0 0.0
        %952 = vmatprep.subr.mxu0 0.0
        %953 = vmatpush1.msra.mxu0 0.0
        %954 = vmatprep.subr.mxu0 0.0
        %955 = vmatpush1.msra.mxu0 0.0
        %956 = vmatprep.subr.mxu0 0.0
        %957 = vmatpush1.msra.mxu0 0.0
        %958 = vmatprep.subr.mxu0 0.0
        %959 = vmatpush1.msra.mxu0 0.0
        %960 = vmatprep.subr.mxu0 0.0
        %961 = vmatpush1.msra.mxu0 0.0
        %962 = vmatprep.subr.mxu0 0.0
        %963 = vmatpush1.msra.mxu0 0.0
        %964 = vmatprep.subr.mxu0 0.0
        %965 = vmatpush1.msra.mxu0 0.0
        %966 = vmatprep.subr.mxu0 0.0
        %967 = vmatpush1.msra.mxu0 0.0
        %968 = vmatprep.subr.mxu0 0.0
        %969 = vmatpush1.msra.mxu0 0.0
        %970 = vmatprep.subr.mxu0 0.0
        %971 = vmatpush1.msra.mxu0 0.0
        %972 = vmatprep.subr.mxu0 0.0
        %973 = vmatpush1.msra.mxu0 0.0
        %974 = vmatprep.subr.mxu0 0.0
        %975 = vmatpush1.msra.mxu0 0.0
        %976 = vmatprep.subr.mxu0 0.0
        %977 = vmatpush1.msra.mxu0 0.0
        %978 = vmatprep.subr.mxu0 0.0
        %979 = vmatpush1.msra.mxu0 0.0
        %980 = vmatprep.subr.mxu0 0.0
        %981 = vmatpush1.msra.mxu0 0.0
        %982 = vmatprep.subr.mxu0 0.0
        %983 = vmatpush1.msra.mxu0 0.0
        %984 = vmatprep.subr.mxu0 0.0
        %985 = vmatpush1.msra.mxu0 0.0
        %986 = vmatprep.subr.mxu0 0.0
        %987 = vmatpush1.msra.mxu0 0.0
        %988 = vmatprep.subr.mxu0 0.0
        %989 = vmatpush1.msra.mxu0 0.0
        %990 = vmatprep.subr.mxu0 0.0
        %991 = vmatpush1.msra.mxu0 0.0
        %992 = vmatprep.subr.mxu0 0.0
        %993 = vmatpush1.msra.mxu0 0.0
        %994 = vmatprep.subr.mxu0 0.0
        %995 = vmatpush1.msra.mxu0 0.0
        %996 = vmatprep.mubr.f32.mxu0 0.0
        %997 = vmatmul.mubr.f32.gmra.mrb[0].mxu0 %v930
        %v998 = vpop.f32.mrb[0].mxu0
        %v999 = vadd.f32 0.0, %v998
        %v1000 = vpop.f32.mrb[0].mxu0
        %1001 = vdwg.mxu0
        %v1002 = vld [vmem:[%s6] sm:$0xff]
        %v1003 = vld [vmem:[%s6 + $0x8] sm:$0xff]
        %v1004 = vld [vmem:[%s6 + $0x10] sm:$0xff]
        %v1005 = vld [vmem:[%s6 + $0x18] sm:$0xff]
        %v1006 = vld [vmem:[%s7] sm:$0xff]
        %v1007 = vld [vmem:[%s7 + $0x8] sm:$0xff]
        %v1008 = vld [vmem:[%s7 + $0x10] sm:$0xff]
        %v1009 = vld [vmem:[%s7 + $0x18] sm:$0xff]
        %v1010 = vld [vmem:[%s8] sm:$0x1]
        %v1011 = vld [vmem:[%s9] sm:$0xff]
        %v1012 = vld [vmem:[%s9 + $0x8] sm:$0xff]
        %v1013 = vld [vmem:[%s9 + $0x10] sm:$0xff]
        %v1014 = vld [vmem:[%s9 + $0x18] sm:$0xff]
        %v1015 = vld [vmem:[%s10] sm:$0x1]
        %v1016 = vld [vmem:[#allocation2] sm:$0x1]
        %v1017 = vld [vmem:[#allocation5] sm:$0x1]
        %v1018 = vld [vmem:[#allocation7] sm:$0x1]
        %v1019 = vld [vmem:[#allocation8] sm:$0x1]
        %1021 = vrot.lane.b32.xlu0 %v999, 96
        %v1022 = vpop.permute.xlu0 %1021
        %vm1023 = vcmask 64512
        %v1024 = vsel %vm1023, %v999, 0
        %v1026 = vsel %vm1023, %v1022, 0
        %1028 = vmatprep.subr.mxu0 0.0
        %1029 = vmatpush1.xpose.msra.mxu0 %v1026
        %1030 = vmatprep.subr.mxu0 0.0
        %1031 = vmatpush1.xpose.msra.mxu0 0.0
        %1032 = vmatprep.subr.mxu0 0.0
        %1033 = vmatpush1.xpose.msra.mxu0 0.0
        %1034 = vmatprep.subr.mxu0 0.0
        %1035 = vmatpush1.xpose.msra.mxu0 0.0
        %1036 = vmatprep.subr.mxu0 0.0
        %1037 = vmatpush1.xpose.msra.mxu0 0.0
        %1038 = vmatprep.subr.mxu0 0.0
        %1039 = vmatpush1.xpose.msra.mxu0 0.0
        %1040 = vmatprep.subr.mxu0 0.0
        %1041 = vmatpush1.xpose.msra.mxu0 0.0
        %1042 = vmatprep.subr.mxu0 0.0
        %1043 = vmatpush1.xpose.msra.mxu0 0.0
        %1044 = vmatprep.subr.mxu0 0.0
        %1045 = vmatpush1.xpose.msra.mxu0 0.0
        %1046 = vmatprep.subr.mxu0 0.0
        %1047 = vmatpush1.xpose.msra.mxu0 0.0
        %1048 = vmatprep.subr.mxu0 0.0
        %1049 = vmatpush1.xpose.msra.mxu0 0.0
        %1050 = vmatprep.subr.mxu0 0.0
        %1051 = vmatpush1.xpose.msra.mxu0 0.0
        %1052 = vmatprep.subr.mxu0 0.0
        %1053 = vmatpush1.xpose.msra.mxu0 0.0
        %1054 = vmatprep.subr.mxu0 0.0
        %1055 = vmatpush1.xpose.msra.mxu0 0.0
        %1056 = vmatprep.subr.mxu0 0.0
        %1057 = vmatpush1.xpose.msra.mxu0 0.0
        %1058 = vmatprep.subr.mxu0 0.0
        %1059 = vmatpush1.xpose.msra.mxu0 0.0
        %1060 = vmatprep.subr.mxu0 0.0
        %1061 = vmatpush1.xpose.msra.mxu0 0.0
        %1062 = vmatprep.subr.mxu0 0.0
        %1063 = vmatpush1.xpose.msra.mxu0 0.0
        %1064 = vmatprep.subr.mxu0 0.0
        %1065 = vmatpush1.xpose.msra.mxu0 0.0
        %1066 = vmatprep.subr.mxu0 0.0
        %1067 = vmatpush1.xpose.msra.mxu0 0.0
        %1068 = vmatprep.subr.mxu0 0.0
        %1069 = vmatpush1.xpose.msra.mxu0 0.0
        %1070 = vmatprep.subr.mxu0 0.0
        %1071 = vmatpush1.xpose.msra.mxu0 0.0
        %1072 = vmatprep.subr.mxu0 0.0
        %1073 = vmatpush1.xpose.msra.mxu0 0.0
        %1074 = vmatprep.subr.mxu0 0.0
        %1075 = vmatpush1.xpose.msra.mxu0 0.0
        %1076 = vmatprep.subr.mxu0 0.0
        %1077 = vmatpush1.xpose.msra.mxu0 0.0
        %1078 = vmatprep.subr.mxu0 0.0
        %1079 = vmatpush1.xpose.msra.mxu0 0.0
        %1080 = vmatprep.subr.mxu0 0.0
        %1081 = vmatpush1.xpose.msra.mxu0 0.0
        %1082 = vmatprep.subr.mxu0 0.0
        %1083 = vmatpush1.xpose.msra.mxu0 0.0
        %1084 = vmatprep.subr.mxu0 0.0
        %1085 = vmatpush1.xpose.msra.mxu0 0.0
        %1086 = vmatprep.subr.mxu0 0.0
        %1087 = vmatpush1.xpose.msra.mxu0 0.0
        %1088 = vmatprep.subr.mxu0 0.0
        %1089 = vmatpush1.xpose.msra.mxu0 0.0
        %1090 = vmatprep.subr.mxu0 0.0
        %1091 = vmatpush1.xpose.msra.mxu0 0.0
        %1092 = vmatprep.mubr.f32.mxu0 0.0
        %1093 = vmatmul.mubr.f32.gmra.mrb[0].mxu0 %v1024
        %v1094 = vpop.f32.mrb[0].mxu0
        %v1095 = vadd.f32 0.0, %v1094
        %v1096 = vpop.f32.mrb[0].mxu0
        %1097 = vdwg.mxu0
        %v1098 = vmul.f32 %v1095, 0.35355338
        %v1099 = vsel %vm1023, %v1098, -inf
        %1100 = vmax.xlane.f32.xlu0 %v1099
        %v1101 = vpop.xlane.xlu0 %1100
        %v1102 = vsub.f32 %v1098, %v1101
        %v1103 = vmul.f32 %v1102, 1.442695
        %v1104 = vpow.pop %v1103
        %v1105 = vsel %vm1023, %v1104, 0.0
        %1106 = vadd.xlane.f32.xlu0 %v1105
        %v1107 = vpop.xlane.xlu0 %1106
        %v1108 = vrcp.pop %v1107
        %v1109 = vmul.f32 %v1104, %v1108
        %1110 = vrot.lane.b32.xlu0 %v999, 64
        %v1111 = vpop.permute.xlu0 %1110
        %v1114 = vsel %vm1023, %v1109, 0
        %1116 = vmatprep.subr.mxu0 0.0
        %1117 = vmatpush1.msra.mxu0 %v1111
        %1118 = vmatprep.subr.mxu0 0.0
        %1119 = vmatpush1.msra.mxu0 0.0
        %1120 = vmatprep.subr.mxu0 0.0
        %1121 = vmatpush1.msra.mxu0 0.0
        %1122 = vmatprep.subr.mxu0 0.0
        %1123 = vmatpush1.msra.mxu0 0.0
        %1124 = vmatprep.subr.mxu0 0.0
        %1125 = vmatpush1.msra.mxu0 0.0
        %1126 = vmatprep.subr.mxu0 0.0
        %1127 = vmatpush1.msra.mxu0 0.0
        %1128 = vmatprep.subr.mxu0 0.0
        %1129 = vmatpush1.msra.mxu0 0.0
        %1130 = vmatprep.subr.mxu0 0.0
        %1131 = vmatpush1.msra.mxu0 0.0
        %1132 = vmatprep.subr.mxu0 0.0
        %1133 = vmatpush1.msra.mxu0 0.0
        %1134 = vmatprep.subr.mxu0 0.0
        %1135 = vmatpush1.msra.mxu0 0.0
        %1136 = vmatprep.subr.mxu0 0.0
        %1137 = vmatpush1.msra.mxu0 0.0
        %1138 = vmatprep.subr.mxu0 0.0
        %1139 = vmatpush1.msra.mxu0 0.0
        %1140 = vmatprep.subr.mxu0 0.0
        %1141 = vmatpush1.msra.mxu0 0.0
        %1142 = vmatprep.subr.mxu0 0.0
        %1143 = vmatpush1.msra.mxu0 0.0
        %1144 = vmatprep.subr.mxu0 0.0
        %1145 = vmatpush1.msra.mxu0 0.0
        %1146 = vmatprep.subr.mxu0 0.0
        %1147 = vmatpush1.msra.mxu0 0.0
        %1148 = vmatprep.subr.mxu0 0.0
        %1149 = vmatpush1.msra.mxu0 0.0
        %1150 = vmatprep.subr.mxu0 0.0
        %1151 = vmatpush1.msra.mxu0 0.0
        %1152 = vmatprep.subr.mxu0 0.0
        %1153 = vmatpush1.msra.mxu0 0.0
        %1154 = vmatprep.subr.mxu0 0.0
        %1155 = vmatpush1.msra.mxu0 0.0
        %1156 = vmatprep.subr.mxu0 0.0
        %1157 = vmatpush1.msra.mxu0 0.0
        %1158 = vmatprep.subr.mxu0 0.0
        %1159 = vmatpush1.msra.mxu0 0.0
        %1160 = vmatprep.subr.mxu0 0.0
        %1161 = vmatpush1.msra.mxu0 0.0
        %1162 = vmatprep.subr.mxu0 0.0
        %1163 = vmatpush1.msra.mxu0 0.0
        %1164 = vmatprep.subr.mxu0 0.0
        %1165 = vmatpush1.msra.mxu0 0.0
        %1166 = vmatprep.subr.mxu0 0.0
        %1167 = vmatpush1.msra.mxu0 0.0
        %1168 = vmatprep.subr.mxu0 0.0
        %1169 = vmatpush1.msra.mxu0 0.0
        %1170 = vmatprep.subr.mxu0 0.0
        %1171 = vmatpush1.msra.mxu0 0.0
        %1172 = vmatprep.subr.mxu0 0.0
        %1173 = vmatpush1.msra.mxu0 0.0
        %1174 = vmatprep.subr.mxu0 0.0
        %1175 = vmatpush1.msra.mxu0 0.0
        %1176 = vmatprep.subr.mxu0 0.0
        %1177 = vmatpush1.msra.mxu0 0.0
        %1178 = vmatprep.subr.mxu0 0.0
        %1179 = vmatpush1.msra.mxu0 0.0
        %1180 = vmatprep.mubr.f32.mxu0 0.0
        %1181 = vmatmul.mubr.f32.gmra.mrb[0].mxu0 %v1114
        %v1182 = vpop.f32.mrb[0].mxu0
        %v1183 = vadd.f32 0.0, %v1182
        %v1184 = vpop.f32.mrb[0].mxu0
        %1185 = vdwg.mxu0
        %1186 = vrot.lane.b32.xlu0 %v999, 120
        %v1187 = vpop.permute.xlu0 %1186
        %1188 = vrot.lane.b32.xlu0 %v999, 88
        %v1189 = vpop.permute.xlu0 %1188
        %v1190 = vsel %vm1023, %v1187, 0
        %v1192 = vsel %vm1023, %v1189, 0
        %1194 = vmatprep.subr.mxu0 0.0
        %1195 = vmatpush1.xpose.msra.mxu0 %v1192
        %1196 = vmatprep.subr.mxu0 0.0
        %1197 = vmatpush1.xpose.msra.mxu0 0.0
        %1198 = vmatprep.subr.mxu0 0.0
        %1199 = vmatpush1.xpose.msra.mxu0 0.0
        %1200 = vmatprep.subr.mxu0 0.0
        %1201 = vmatpush1.xpose.msra.mxu0 0.0
        %1202 = vmatprep.subr.mxu0 0.0
        %1203 = vmatpush1.xpose.msra.mxu0 0.0
        %1204 = vmatprep.subr.mxu0 0.0
        %1205 = vmatpush1.xpose.msra.mxu0 0.0
        %1206 = vmatprep.subr.mxu0 0.0
        %1207 = vmatpush1.xpose.msra.mxu0 0.0
        %1208 = vmatprep.subr.mxu0 0.0
        %1209 = vmatpush1.xpose.msra.mxu0 0.0
        %1210 = vmatprep.subr.mxu0 0.0
        %1211 = vmatpush1.xpose.msra.mxu0 0.0
        %1212 = vmatprep.subr.mxu0 0.0
        %1213 = vmatpush1.xpose.msra.mxu0 0.0
        %1214 = vmatprep.subr.mxu0 0.0
        %1215 = vmatpush1.xpose.msra.mxu0 0.0
        %1216 = vmatprep.subr.mxu0 0.0
        %1217 = vmatpush1.xpose.msra.mxu0 0.0
        %1218 = vmatprep.subr.mxu0 0.0
        %1219 = vmatpush1.xpose.msra.mxu0 0.0
        %1220 = vmatprep.subr.mxu0 0.0
        %1221 = vmatpush1.xpose.msra.mxu0 0.0
        %1222 = vmatprep.subr.mxu0 0.0
        %1223 = vmatpush1.xpose.msra.mxu0 0.0
        %1224 = vmatprep.subr.mxu0 0.0
        %1225 = vmatpush1.xpose.msra.mxu0 0.0
        %1226 = vmatprep.subr.mxu0 0.0
        %1227 = vmatpush1.xpose.msra.mxu0 0.0
        %1228 = vmatprep.subr.mxu0 0.0
        %1229 = vmatpush1.xpose.msra.mxu0 0.0
        %1230 = vmatprep.subr.mxu0 0.0
        %1231 = vmatpush1.xpose.msra.mxu0 0.0
        %1232 = vmatprep.subr.mxu0 0.0
        %1233 = vmatpush1.xpose.msra.mxu0 0.0
        %1234 = vmatprep.subr.mxu0 0.0
        %1235 = vmatpush1.xpose.msra.mxu0 0.0
        %1236 = vmatprep.subr.mxu0 0.0
        %1237 = vmatpush1.xpose.msra.mxu0 0.0
        %1238 = vmatprep.subr.mxu0 0.0
        %1239 = vmatpush1.xpose.msra.mxu0 0.0
        %1240 = vmatprep.subr.mxu0 0.0
        %1241 = vmatpush1.xpose.msra.mxu0 0.0
        %1242 = vmatprep.subr.mxu0 0.0
        %1243 = vmatpush1.xpose.msra.mxu0 0.0
        %1244 = vmatprep.subr.mxu0 0.0
        %1245 = vmatpush1.xpose.msra.mxu0 0.0
        %1246 = vmatprep.subr.mxu0 0.0
        %1247 = vmatpush1.xpose.msra.mxu0 0.0
        %1248 = vmatprep.subr.mxu0 0.0
        %1249 = vmatpush1.xpose.msra.mxu0 0.0
        %1250 = vmatprep.subr.mxu0 0.0
        %1251 = vmatpush1.xpose.msra.mxu0 0.0
        %1252 = vmatprep.subr.mxu0 0.0
        %1253 = vmatpush1.xpose.msra.mxu0 0.0
        %1254 = vmatprep.subr.mxu0 0.0
        %1255 = vmatpush1.xpose.msra.mxu0 0.0
        %1256 = vmatprep.subr.mxu0 0.0
        %1257 = vmatpush1.xpose.msra.mxu0 0.0
        %1258 = vmatprep.mubr.f32.mxu0 0.0
        %1259 = vmatmul.mubr.f32.gmra.mrb[0].mxu0 %v1190
        %v1260 = vpop.f32.mrb[0].mxu0
        %v1261 = vadd.f32 0.0, %v1260
        %v1262 = vpop.f32.mrb[0].mxu0
        %1263 = vdwg.mxu0
        %v1264 = vmul.f32 %v1261, 0.35355338
        %v1265 = vsel %vm1023, %v1264, -inf
        %1266 = vmax.xlane.f32.xlu0 %v1265
        %v1267 = vpop.xlane.xlu0 %1266
        %v1268 = vsub.f32 %v1264, %v1267
        %v1269 = vmul.f32 %v1268, 1.442695
        %v1270 = vpow.pop %v1269
        %v1271 = vsel %vm1023, %v1270, 0.0
        %1272 = vadd.xlane.f32.xlu0 %v1271
        %v1273 = vpop.xlane.xlu0 %1272
        %v1274 = vrcp.pop %v1273
        %v1275 = vmul.f32 %v1270, %v1274
        %1276 = vrot.lane.b32.xlu0 %v999, 56
        %v1277 = vpop.permute.xlu0 %1276
        %v1280 = vsel %vm1023, %v1275, 0
        %1282 = vmatprep.subr.mxu0 0.0
        %1283 = vmatpush1.msra.mxu0 %v1277
        %1284 = vmatprep.subr.mxu0 0.0
        %1285 = vmatpush1.msra.mxu0 0.0
        %1286 = vmatprep.subr.mxu0 0.0
        %1287 = vmatpush1.msra.mxu0 0.0
        %1288 = vmatprep.subr.mxu0 0.0
        %1289 = vmatpush1.msra.mxu0 0.0
        %1290 = vmatprep.subr.mxu0 0.0
        %1291 = vmatpush1.msra.mxu0 0.0
        %1292 = vmatprep.subr.mxu0 0.0
        %1293 = vmatpush1.msra.mxu0 0.0
        %1294 = vmatprep.subr.mxu0 0.0
        %1295 = vmatpush1.msra.mxu0 0.0
        %1296 = vmatprep.subr.mxu0 0.0
        %1297 = vmatpush1.msra.mxu0 0.0
        %1298 = vmatprep.subr.mxu0 0.0
        %1299 = vmatpush1.msra.mxu0 0.0
        %1300 = vmatprep.subr.mxu0 0.0
        %1301 = vmatpush1.msra.mxu0 0.0
        %1302 = vmatprep.subr.mxu0 0.0
        %1303 = vmatpush1.msra.mxu0 0.0
        %1304 = vmatprep.subr.mxu0 0.0
        %1305 = vmatpush1.msra.mxu0 0.0
        %1306 = vmatprep.subr.mxu0 0.0
        %1307 = vmatpush1.msra.mxu0 0.0
        %1308 = vmatprep.subr.mxu0 0.0
        %1309 = vmatpush1.msra.mxu0 0.0
        %1310 = vmatprep.subr.mxu0 0.0
        %1311 = vmatpush1.msra.mxu0 0.0
        %1312 = vmatprep.subr.mxu0 0.0
        %1313 = vmatpush1.msra.mxu0 0.0
        %1314 = vmatprep.subr.mxu0 0.0
        %1315 = vmatpush1.msra.mxu0 0.0
        %1316 = vmatprep.subr.mxu0 0.0
        %1317 = vmatpush1.msra.mxu0 0.0
        %1318 = vmatprep.subr.mxu0 0.0
        %1319 = vmatpush1.msra.mxu0 0.0
        %1320 = vmatprep.subr.mxu0 0.0
        %1321 = vmatpush1.msra.mxu0 0.0
        %1322 = vmatprep.subr.mxu0 0.0
        %1323 = vmatpush1.msra.mxu0 0.0
        %1324 = vmatprep.subr.mxu0 0.0
        %1325 = vmatpush1.msra.mxu0 0.0
        %1326 = vmatprep.subr.mxu0 0.0
        %1327 = vmatpush1.msra.mxu0 0.0
        %1328 = vmatprep.subr.mxu0 0.0
        %1329 = vmatpush1.msra.mxu0 0.0
        %1330 = vmatprep.subr.mxu0 0.0
        %1331 = vmatpush1.msra.mxu0 0.0
        %1332 = vmatprep.subr.mxu0 0.0
        %1333 = vmatpush1.msra.mxu0 0.0
        %1334 = vmatprep.subr.mxu0 0.0
        %1335 = vmatpush1.msra.mxu0 0.0
        %1336 = vmatprep.subr.mxu0 0.0
        %1337 = vmatpush1.msra.mxu0 0.0
        %1338 = vmatprep.subr.mxu0 0.0
        %1339 = vmatpush1.msra.mxu0 0.0
        %1340 = vmatprep.subr.mxu0 0.0
        %1341 = vmatpush1.msra.mxu0 0.0
        %1342 = vmatprep.subr.mxu0 0.0
        %1343 = vmatpush1.msra.mxu0 0.0
        %1344 = vmatprep.subr.mxu0 0.0
        %1345 = vmatpush1.msra.mxu0 0.0
        %1346 = vmatprep.mubr.f32.mxu0 0.0
        %1347 = vmatmul.mubr.f32.gmra.mrb[0].mxu0 %v1280
        %v1348 = vpop.f32.mrb[0].mxu0
        %v1349 = vadd.f32 0.0, %v1348
        %v1350 = vpop.f32.mrb[0].mxu0
        %1351 = vdwg.mxu0
        %1352 = vrot.lane.b32.xlu0 %v999, 112
        %v1353 = vpop.permute.xlu0 %1352
        %1354 = vrot.lane.b32.xlu0 %v999, 80
        %v1355 = vpop.permute.xlu0 %1354
        %v1356 = vsel %vm1023, %v1353, 0
        %v1358 = vsel %vm1023, %v1355, 0
        %1360 = vmatprep.subr.mxu0 0.0
        %1361 = vmatpush1.xpose.msra.mxu0 %v1358
        %1362 = vmatprep.subr.mxu0 0.0
        %1363 = vmatpush1.xpose.msra.mxu0 0.0
        %1364 = vmatprep.subr.mxu0 0.0
        %1365 = vmatpush1.xpose.msra.mxu0 0.0
        %1366 = vmatprep.subr.mxu0 0.0
        %1367 = vmatpush1.xpose.msra.mxu0 0.0
        %1368 = vmatprep.subr.mxu0 0.0
        %1369 = vmatpush1.xpose.msra.mxu0 0.0
        %1370 = vmatprep.subr.mxu0 0.0
        %1371 = vmatpush1.xpose.msra.mxu0 0.0
        %1372 = vmatprep.subr.mxu0 0.0
        %1373 = vmatpush1.xpose.msra.mxu0 0.0
        %1374 = vmatprep.subr.mxu0 0.0
        %1375 = vmatpush1.xpose.msra.mxu0 0.0
        %1376 = vmatprep.subr.mxu0 0.0
        %1377 = vmatpush1.xpose.msra.mxu0 0.0
        %1378 = vmatprep.subr.mxu0 0.0
        %1379 = vmatpush1.xpose.msra.mxu0 0.0
        %1380 = vmatprep.subr.mxu0 0.0
        %1381 = vmatpush1.xpose.msra.mxu0 0.0
        %1382 = vmatprep.subr.mxu0 0.0
        %1383 = vmatpush1.xpose.msra.mxu0 0.0
        %1384 = vmatprep.subr.mxu0 0.0
        %1385 = vmatpush1.xpose.msra.mxu0 0.0
        %1386 = vmatprep.subr.mxu0 0.0
        %1387 = vmatpush1.xpose.msra.mxu0 0.0
        %1388 = vmatprep.subr.mxu0 0.0
        %1389 = vmatpush1.xpose.msra.mxu0 0.0
        %1390 = vmatprep.subr.mxu0 0.0
        %1391 = vmatpush1.xpose.msra.mxu0 0.0
        %1392 = vmatprep.subr.mxu0 0.0
        %1393 = vmatpush1.xpose.msra.mxu0 0.0
        %1394 = vmatprep.subr.mxu0 0.0
        %1395 = vmatpush1.xpose.msra.mxu0 0.0
        %1396 = vmatprep.subr.mxu0 0.0
        %1397 = vmatpush1.xpose.msra.mxu0 0.0
        %1398 = vmatprep.subr.mxu0 0.0
        %1399 = vmatpush1.xpose.msra.mxu0 0.0
        %1400 = vmatprep.subr.mxu0 0.0
        %1401 = vmatpush1.xpose.msra.mxu0 0.0
        %1402 = vmatprep.subr.mxu0 0.0
        %1403 = vmatpush1.xpose.msra.mxu0 0.0
        %1404 = vmatprep.subr.mxu0 0.0
        %1405 = vmatpush1.xpose.msra.mxu0 0.0
        %1406 = vmatprep.subr.mxu0 0.0
        %1407 = vmatpush1.xpose.msra.mxu0 0.0
        %1408 = vmatprep.subr.mxu0 0.0
        %1409 = vmatpush1.xpose.msra.mxu0 0.0
        %1410 = vmatprep.subr.mxu0 0.0
        %1411 = vmatpush1.xpose.msra.mxu0 0.0
        %1412 = vmatprep.subr.mxu0 0.0
        %1413 = vmatpush1.xpose.msra.mxu0 0.0
        %1414 = vmatprep.subr.mxu0 0.0
        %1415 = vmatpush1.xpose.msra.mxu0 0.0
        %1416 = vmatprep.subr.mxu0 0.0
        %1417 = vmatpush1.xpose.msra.mxu0 0.0
        %1418 = vmatprep.subr.mxu0 0.0
        %1419 = vmatpush1.xpose.msra.mxu0 0.0
        %1420 = vmatprep.subr.mxu0 0.0
        %1421 = vmatpush1.xpose.msra.mxu0 0.0
        %1422 = vmatprep.subr.mxu0 0.0
        %1423 = vmatpush1.xpose.msra.mxu0 0.0
        %1424 = vmatprep.mubr.f32.mxu0 0.0
        %1425 = vmatmul.mubr.f32.gmra.mrb[0].mxu0 %v1356
        %v1426 = vpop.f32.mrb[0].mxu0
        %v1427 = vadd.f32 0.0, %v1426
        %v1428 = vpop.f32.mrb[0].mxu0
        %1429 = vdwg.mxu0
        %v1430 = vmul.f32 %v1427, 0.35355338
        %v1431 = vsel %vm1023, %v1430, -inf
        %1432 = vmax.xlane.f32.xlu0 %v1431
        %v1433 = vpop.xlane.xlu0 %1432
        %v1434 = vsub.f32 %v1430, %v1433
        %v1435 = vmul.f32 %v1434, 1.442695
        %v1436 = vpow.pop %v1435
        %v1437 = vsel %vm1023, %v1436, 0.0
        %1438 = vadd.xlane.f32.xlu0 %v1437
        %v1439 = vpop.xlane.xlu0 %1438
        %v1440 = vrcp.pop %v1439
        %v1441 = vmul.f32 %v1436, %v1440
        %1442 = vrot.lane.b32.xlu0 %v999, 48
        %v1443 = vpop.permute.xlu0 %1442
        %v1446 = vsel %vm1023, %v1441, 0
        %1448 = vmatprep.subr.mxu0 0.0
        %1449 = vmatpush1.msra.mxu0 %v1443
        %1450 = vmatprep.subr.mxu0 0.0
        %1451 = vmatpush1.msra.mxu0 0.0
        %1452 = vmatprep.subr.mxu0 0.0
        %1453 = vmatpush1.msra.mxu0 0.0
        %1454 = vmatprep.subr.mxu0 0.0
        %1455 = vmatpush1.msra.mxu0 0.0
        %1456 = vmatprep.subr.mxu0 0.0
        %1457 = vmatpush1.msra.mxu0 0.0
        %1458 = vmatprep.subr.mxu0 0.0
        %1459 = vmatpush1.msra.mxu0 0.0
        %1460 = vmatprep.subr.mxu0 0.0
        %1461 = vmatpush1.msra.mxu0 0.0
        %1462 = vmatprep.subr.mxu0 0.0
        %1463 = vmatpush1.msra.mxu0 0.0
        %1464 = vmatprep.subr.mxu0 0.0
        %1465 = vmatpush1.msra.mxu0 0.0
        %1466 = vmatprep.subr.mxu0 0.0
        %1467 = vmatpush1.msra.mxu0 0.0
        %1468 = vmatprep.subr.mxu0 0.0
        %1469 = vmatpush1.msra.mxu0 0.0
        %1470 = vmatprep.subr.mxu0 0.0
        %1471 = vmatpush1.msra.mxu0 0.0
        %1472 = vmatprep.subr.mxu0 0.0
        %1473 = vmatpush1.msra.mxu0 0.0
        %1474 = vmatprep.subr.mxu0 0.0
        %1475 = vmatpush1.msra.mxu0 0.0
        %1476 = vmatprep.subr.mxu0 0.0
        %1477 = vmatpush1.msra.mxu0 0.0
        %1478 = vmatprep.subr.mxu0 0.0
        %1479 = vmatpush1.msra.mxu0 0.0
        %1480 = vmatprep.subr.mxu0 0.0
        %1481 = vmatpush1.msra.mxu0 0.0
        %1482 = vmatprep.subr.mxu0 0.0
        %1483 = vmatpush1.msra.mxu0 0.0
        %1484 = vmatprep.subr.mxu0 0.0
        %1485 = vmatpush1.msra.mxu0 0.0
        %1486 = vmatprep.subr.mxu0 0.0
        %1487 = vmatpush1.msra.mxu0 0.0
        %1488 = vmatprep.subr.mxu0 0.0
        %1489 = vmatpush1.msra.mxu0 0.0
        %1490 = vmatprep.subr.mxu0 0.0
        %1491 = vmatpush1.msra.mxu0 0.0
        %1492 = vmatprep.subr.mxu0 0.0
        %1493 = vmatpush1.msra.mxu0 0.0
        %1494 = vmatprep.subr.mxu0 0.0
        %1495 = vmatpush1.msra.mxu0 0.0
        %1496 = vmatprep.subr.mxu0 0.0
        %1497 = vmatpush1.msra.mxu0 0.0
        %1498 = vmatprep.subr.mxu0 0.0
        %1499 = vmatpush1.msra.mxu0 0.0
        %1500 = vmatprep.subr.mxu0 0.0
        %1501 = vmatpush1.msra.mxu0 0.0
        %1502 = vmatprep.subr.mxu0 0.0
        %1503 = vmatpush1.msra.mxu0 0.0
        %1504 = vmatprep.subr.mxu0 0.0
        %1505 = vmatpush1.msra.mxu0 0.0
        %1506 = vmatprep.subr.mxu0 0.0
        %1507 = vmatpush1.msra.mxu0 0.0
        %1508 = vmatprep.subr.mxu0 0.0
        %1509 = vmatpush1.msra.mxu0 0.0
        %1510 = vmatprep.subr.mxu0 0.0
        %1511 = vmatpush1.msra.mxu0 0.0
        %1512 = vmatprep.mubr.f32.mxu0 0.0
        %1513 = vmatmul.mubr.f32.gmra.mrb[0].mxu0 %v1446
        %v1514 = vpop.f32.mrb[0].mxu0
        %v1515 = vadd.f32 0.0, %v1514
        %v1516 = vpop.f32.mrb[0].mxu0
        %1517 = vdwg.mxu0
        %1518 = vrot.lane.b32.xlu0 %v999, 104
        %v1519 = vpop.permute.xlu0 %1518
        %1520 = vrot.lane.b32.xlu0 %v999, 72
        %v1521 = vpop.permute.xlu0 %1520
        %v1522 = vsel %vm1023, %v1519, 0
        %v1524 = vsel %vm1023, %v1521, 0
        %1526 = vmatprep.subr.mxu0 0.0
        %1527 = vmatpush1.xpose.msra.mxu0 %v1524
        %1528 = vmatprep.subr.mxu0 0.0
        %1529 = vmatpush1.xpose.msra.mxu0 0.0
        %1530 = vmatprep.subr.mxu0 0.0
        %1531 = vmatpush1.xpose.msra.mxu0 0.0
        %1532 = vmatprep.subr.mxu0 0.0
        %1533 = vmatpush1.xpose.msra.mxu0 0.0
        %1534 = vmatprep.subr.mxu0 0.0
        %1535 = vmatpush1.xpose.msra.mxu0 0.0
        %1536 = vmatprep.subr.mxu0 0.0
        %1537 = vmatpush1.xpose.msra.mxu0 0.0
        %1538 = vmatprep.subr.mxu0 0.0
        %1539 = vmatpush1.xpose.msra.mxu0 0.0
        %1540 = vmatprep.subr.mxu0 0.0
        %1541 = vmatpush1.xpose.msra.mxu0 0.0
        %1542 = vmatprep.subr.mxu0 0.0
        %1543 = vmatpush1.xpose.msra.mxu0 0.0
        %1544 = vmatprep.subr.mxu0 0.0
        %1545 = vmatpush1.xpose.msra.mxu0 0.0
        %1546 = vmatprep.subr.mxu0 0.0
        %1547 = vmatpush1.xpose.msra.mxu0 0.0
        %1548 = vmatprep.subr.mxu0 0.0
        %1549 = vmatpush1.xpose.msra.mxu0 0.0
        %1550 = vmatprep.subr.mxu0 0.0
        %1551 = vmatpush1.xpose.msra.mxu0 0.0
        %1552 = vmatprep.subr.mxu0 0.0
        %1553 = vmatpush1.xpose.msra.mxu0 0.0
        %1554 = vmatprep.subr.mxu0 0.0
        %1555 = vmatpush1.xpose.msra.mxu0 0.0
        %1556 = vmatprep.subr.mxu0 0.0
        %1557 = vmatpush1.xpose.msra.mxu0 0.0
        %1558 = vmatprep.subr.mxu0 0.0
        %1559 = vmatpush1.xpose.msra.mxu0 0.0
        %1560 = vmatprep.subr.mxu0 0.0
        %1561 = vmatpush1.xpose.msra.mxu0 0.0
        %1562 = vmatprep.subr.mxu0 0.0
        %1563 = vmatpush1.xpose.msra.mxu0 0.0
        %1564 = vmatprep.subr.mxu0 0.0
        %1565 = vmatpush1.xpose.msra.mxu0 0.0
        %1566 = vmatprep.subr.mxu0 0.0
        %1567 = vmatpush1.xpose.msra.mxu0 0.0
        %1568 = vmatprep.subr.mxu0 0.0
        %1569 = vmatpush1.xpose.msra.mxu0 0.0
        %1570 = vmatprep.subr.mxu0 0.0
        %1571 = vmatpush1.xpose.msra.mxu0 0.0
        %1572 = vmatprep.subr.mxu0 0.0
        %1573 = vmatpush1.xpose.msra.mxu0 0.0
        %1574 = vmatprep.subr.mxu0 0.0
        %1575 = vmatpush1.xpose.msra.mxu0 0.0
        %1576 = vmatprep.subr.mxu0 0.0
        %1577 = vmatpush1.xpose.msra.mxu0 0.0
        %1578 = vmatprep.subr.mxu0 0.0
        %1579 = vmatpush1.xpose.msra.mxu0 0.0
        %1580 = vmatprep.subr.mxu0 0.0
        %1581 = vmatpush1.xpose.msra.mxu0 0.0
        %1582 = vmatprep.subr.mxu0 0.0
        %1583 = vmatpush1.xpose.msra.mxu0 0.0
        %1584 = vmatprep.subr.mxu0 0.0
        %1585 = vmatpush1.xpose.msra.mxu0 0.0
        %1586 = vmatprep.subr.mxu0 0.0
        %1587 = vmatpush1.xpose.msra.mxu0 0.0
        %1588 = vmatprep.subr.mxu0 0.0
        %1589 = vmatpush1.xpose.msra.mxu0 0.0
        %1590 = vmatprep.mubr.f32.mxu0 0.0
        %1591 = vmatmul.mubr.f32.gmra.mrb[0].mxu0 %v1522
        %v1592 = vpop.f32.mrb[0].mxu0
        %v1593 = vadd.f32 0.0, %v1592
        %v1594 = vpop.f32.mrb[0].mxu0
        %1595 = vdwg.mxu0
        %v1596 = vmul.f32 %v1593, 0.35355338
        %v1597 = vsel %vm1023, %v1596, -inf
        %1598 = vmax.xlane.f32.xlu0 %v1597
        %v1599 = vpop.xlane.xlu0 %1598
        %v1600 = vsub.f32 %v1596, %v1599
        %v1601 = vmul.f32 %v1600, 1.442695
        %v1602 = vpow.pop %v1601
        %v1603 = vsel %vm1023, %v1602, 0.0
        %1604 = vadd.xlane.f32.xlu0 %v1603
        %v1605 = vpop.xlane.xlu0 %1604
        %v1606 = vrcp.pop %v1605
        %v1607 = vmul.f32 %v1602, %v1606
        %1608 = vrot.lane.b32.xlu0 %v999, 40
        %v1609 = vpop.permute.xlu0 %1608
        %v1612 = vsel %vm1023, %v1607, 0
        %1614 = vmatprep.subr.mxu0 0.0
        %1615 = vmatpush1.msra.mxu0 %v1609
        %1616 = vmatprep.subr.mxu0 0.0
        %1617 = vmatpush1.msra.mxu0 0.0
        %1618 = vmatprep.subr.mxu0 0.0
        %1619 = vmatpush1.msra.mxu0 0.0
        %1620 = vmatprep.subr.mxu0 0.0
        %1621 = vmatpush1.msra.mxu0 0.0
        %1622 = vmatprep.subr.mxu0 0.0
        %1623 = vmatpush1.msra.mxu0 0.0
        %1624 = vmatprep.subr.mxu0 0.0
        %1625 = vmatpush1.msra.mxu0 0.0
        %1626 = vmatprep.subr.mxu0 0.0
        %1627 = vmatpush1.msra.mxu0 0.0
        %1628 = vmatprep.subr.mxu0 0.0
        %1629 = vmatpush1.msra.mxu0 0.0
        %1630 = vmatprep.subr.mxu0 0.0
        %1631 = vmatpush1.msra.mxu0 0.0
        %1632 = vmatprep.subr.mxu0 0.0
        %1633 = vmatpush1.msra.mxu0 0.0
        %1634 = vmatprep.subr.mxu0 0.0
        %1635 = vmatpush1.msra.mxu0 0.0
        %1636 = vmatprep.subr.mxu0 0.0
        %1637 = vmatpush1.msra.mxu0 0.0
        %1638 = vmatprep.subr.mxu0 0.0
        %1639 = vmatpush1.msra.mxu0 0.0
        %1640 = vmatprep.subr.mxu0 0.0
        %1641 = vmatpush1.msra.mxu0 0.0
        %1642 = vmatprep.subr.mxu0 0.0
        %1643 = vmatpush1.msra.mxu0 0.0
        %1644 = vmatprep.subr.mxu0 0.0
        %1645 = vmatpush1.msra.mxu0 0.0
        %1646 = vmatprep.subr.mxu0 0.0
        %1647 = vmatpush1.msra.mxu0 0.0
        %1648 = vmatprep.subr.mxu0 0.0
        %1649 = vmatpush1.msra.mxu0 0.0
        %1650 = vmatprep.subr.mxu0 0.0
        %1651 = vmatpush1.msra.mxu0 0.0
        %1652 = vmatprep.subr.mxu0 0.0
        %1653 = vmatpush1.msra.mxu0 0.0
        %1654 = vmatprep.subr.mxu0 0.0
        %1655 = vmatpush1.msra.mxu0 0.0
        %1656 = vmatprep.subr.mxu0 0.0
        %1657 = vmatpush1.msra.mxu0 0.0
        %1658 = vmatprep.subr.mxu0 0.0
        %1659 = vmatpush1.msra.mxu0 0.0
        %1660 = vmatprep.subr.mxu0 0.0
        %1661 = vmatpush1.msra.mxu0 0.0
        %1662 = vmatprep.subr.mxu0 0.0
        %1663 = vmatpush1.msra.mxu0 0.0
        %1664 = vmatprep.subr.mxu0 0.0
        %1665 = vmatpush1.msra.mxu0 0.0
        %1666 = vmatprep.subr.mxu0 0.0
        %1667 = vmatpush1.msra.mxu0 0.0
        %1668 = vmatprep.subr.mxu0 0.0
        %1669 = vmatpush1.msra.mxu0 0.0
        %1670 = vmatprep.subr.mxu0 0.0
        %1671 = vmatpush1.msra.mxu0 0.0
        %1672 = vmatprep.subr.mxu0 0.0
        %1673 = vmatpush1.msra.mxu0 0.0
        %1674 = vmatprep.subr.mxu0 0.0
        %1675 = vmatpush1.msra.mxu0 0.0
        %1676 = vmatprep.subr.mxu0 0.0
        %1677 = vmatpush1.msra.mxu0 0.0
        %1678 = vmatprep.mubr.f32.mxu0 0.0
        %1679 = vmatmul.mubr.f32.gmra.mrb[0].mxu0 %v1612
        %v1680 = vpop.f32.mrb[0].mxu0
        %v1681 = vadd.f32 0.0, %v1680
        %v1682 = vpop.f32.mrb[0].mxu0
        %1683 = vdwg.mxu0
        %1685 = vrot.lane.b32.xlu0 %v1349, 8
        %v1686 = vpop.permute.xlu0 %1685
        %1689 = vrot.lane.b32.xlu0 %v1515, 16
        %v1690 = vpop.permute.xlu0 %1689
        %1693 = vrot.lane.b32.xlu0 %v1681, 24
        %v1694 = vpop.permute.xlu0 %1693
        %v1696 = vsel %vm1023, %v1183, %v1686
        %vm1697 = vcmask 130048
        %v1698 = vsel %vm1697, %v1696, %v1690
        %vm1699 = vcmask 195584
        %v1700 = vsel %vm1699, %v1698, %v1694
        %v1702 = vsel %vm894, %v1700, 0
        %1704 = vmatprep.subr.mxu0 0.0
        %1705 = vmatpush1.msra.mxu0 %v1002
        %1706 = vmatprep.subr.mxu0 0.0
        %1707 = vmatpush1.msra.mxu0 %v1003
        %1708 = vmatprep.subr.mxu0 0.0
        %1709 = vmatpush1.msra.mxu0 %v1004
        %1710 = vmatprep.subr.mxu0 0.0
        %1711 = vmatpush1.msra.mxu0 %v1005
        %1712 = vmatprep.subr.mxu0 0.0
        %1713 = vmatpush1.msra.mxu0 0.0
        %1714 = vmatprep.subr.mxu0 0.0
        %1715 = vmatpush1.msra.mxu0 0.0
        %1716 = vmatprep.subr.mxu0 0.0
        %1717 = vmatpush1.msra.mxu0 0.0
        %1718 = vmatprep.subr.mxu0 0.0
        %1719 = vmatpush1.msra.mxu0 0.0
        %1720 = vmatprep.subr.mxu0 0.0
        %1721 = vmatpush1.msra.mxu0 0.0
        %1722 = vmatprep.subr.mxu0 0.0
        %1723 = vmatpush1.msra.mxu0 0.0
        %1724 = vmatprep.subr.mxu0 0.0
        %1725 = vmatpush1.msra.mxu0 0.0
        %1726 = vmatprep.subr.mxu0 0.0
        %1727 = vmatpush1.msra.mxu0 0.0
        %1728 = vmatprep.subr.mxu0 0.0
        %1729 = vmatpush1.msra.mxu0 0.0
        %1730 = vmatprep.subr.mxu0 0.0
        %1731 = vmatpush1.msra.mxu0 0.0
        %1732 = vmatprep.subr.mxu0 0.0
        %1733 = vmatpush1.msra.mxu0 0.0
        %1734 = vmatprep.subr.mxu0 0.0
        %1735 = vmatpush1.msra.mxu0 0.0
        %1736 = vmatprep.subr.mxu0 0.0
        %1737 = vmatpush1.msra.mxu0 0.0
        %1738 = vmatprep.subr.mxu0 0.0
        %1739 = vmatpush1.msra.mxu0 0.0
        %1740 = vmatprep.subr.mxu0 0.0
        %1741 = vmatpush1.msra.mxu0 0.0
        %1742 = vmatprep.subr.mxu0 0.0
        %1743 = vmatpush1.msra.mxu0 0.0
        %1744 = vmatprep.subr.mxu0 0.0
        %1745 = vmatpush1.msra.mxu0 0.0
        %1746 = vmatprep.subr.mxu0 0.0
        %1747 = vmatpush1.msra.mxu0 0.0
        %1748 = vmatprep.subr.mxu0 0.0
        %1749 = vmatpush1.msra.mxu0 0.0
        %1750 = vmatprep.subr.mxu0 0.0
        %1751 = vmatpush1.msra.mxu0 0.0
        %1752 = vmatprep.subr.mxu0 0.0
        %1753 = vmatpush1.msra.mxu0 0.0
        %1754 = vmatprep.subr.mxu0 0.0
        %1755 = vmatpush1.msra.mxu0 0.0
        %1756 = vmatprep.subr.mxu0 0.0
        %1757 = vmatpush1.msra.mxu0 0.0
        %1758 = vmatprep.subr.mxu0 0.0
        %1759 = vmatpush1.msra.mxu0 0.0
        %1760 = vmatprep.subr.mxu0 0.0
        %1761 = vmatpush1.msra.mxu0 0.0
        %1762 = vmatprep.subr.mxu0 0.0
        %1763 = vmatpush1.msra.mxu0 0.0
        %1764 = vmatprep.subr.mxu0 0.0
        %1765 = vmatpush1.msra.mxu0 0.0
        %1766 = vmatprep.subr.mxu0 0.0
        %1767 = vmatpush1.msra.mxu0 0.0
        %1768 = vmatprep.mubr.f32.mxu0 0.0
        %1769 = vmatmul.mubr.f32.gmra.mrb[0].mxu0 %v1702
        %v1770 = vpop.f32.mrb[0].mxu0
        %v1771 = vadd.f32 0.0, %v1770
        %v1772 = vpop.f32.mrb[0].mxu0
        %1773 = vdwg.mxu0
        %v1774 = vadd.f32 %v924, %v1771
        %v1775 = vsel %vm894, %v1774, 0.0
        %1776 = vadd.xlane.f32.xlu0 %v1775
        %v1777 = vpop.xlane.xlu0 %1776
        %v1778 = vmul.f32 %v1777, %v898
        %v1779 = vsub.f32 %v1774, %v1778
        %v1780 = vmul.f32 %v1779, %v1779
        %v1781 = vsel %vm894, %v1780, 0.0
        %1782 = vadd.xlane.f32.xlu0 %v1781
        %v1783 = vpop.xlane.xlu0 %1782
        %v1784 = vmul.f32 %v1783, %v898
        %v1785 = vadd.f32 %v1784, 1e-05
        %v1786 = vrsqrt.pop %v1785
        %v1787 = vmul.f32 %v1779, %v1786
        %v1789 = vlaneseq
        %v1790 = vshrl.u32 %v1789, 7
        %v1791 = vsub.s32 0, %v1790
        %v1792 = vrot.slane %v1016, %v1791
        %v1794 = vmul.f32 %v1787, %v1792
        %v1796 = vlaneseq
        %v1797 = vshrl.u32 %v1796, 7
        %v1798 = vsub.s32 0, %v1797
        %v1799 = vrot.slane %v1017, %v1798
        %v1801 = vadd.f32 %v1794, %v1799
        %v1803 = vlaneseq
        %v1804 = vshrl.u32 %v1803, 7
        %v1805 = vsub.s32 0, %v1804
        %v1806 = vrot.slane %v1010, %v1805
        %v1809 = vsel %vm894, %v1801, 0
        %1811 = vmatprep.subr.mxu0 0.0
        %1812 = vmatpush1.msra.mxu0 %v1006
        %1813 = vmatprep.subr.mxu0 0.0
        %1814 = vmatpush1.msra.mxu0 %v1007
        %1815 = vmatprep.subr.mxu0 0.0
        %1816 = vmatpush1.msra.mxu0 %v1008
        %1817 = vmatprep.subr.mxu0 0.0
        %1818 = vmatpush1.msra.mxu0 %v1009
        %1819 = vmatprep.subr.mxu0 0.0
        %1820 = vmatpush1.msra.mxu0 0.0
        %1821 = vmatprep.subr.mxu0 0.0
        %1822 = vmatpush1.msra.mxu0 0.0
        %1823 = vmatprep.subr.mxu0 0.0
        %1824 = vmatpush1.msra.mxu0 0.0
        %1825 = vmatprep.subr.mxu0 0.0
        %1826 = vmatpush1.msra.mxu0 0.0
        %1827 = vmatprep.subr.mxu0 0.0
        %1828 = vmatpush1.msra.mxu0 0.0
        %1829 = vmatprep.subr.mxu0 0.0
        %1830 = vmatpush1.msra.mxu0 0.0
        %1831 = vmatprep.subr.mxu0 0.0
        %1832 = vmatpush1.msra.mxu0 0.0
        %1833 = vmatprep.subr.mxu0 0.0
        %1834 = vmatpush1.msra.mxu0 0.0
        %1835 = vmatprep.subr.mxu0 0.0
        %1836 = vmatpush1.msra.mxu0 0.0
        %1837 = vmatprep.subr.mxu0 0.0
        %1838 = vmatpush1.msra.mxu0 0.0
        %1839 = vmatprep.subr.mxu0 0.0
        %1840 = vmatpush1.msra.mxu0 0.0
        %1841 = vmatprep.subr.mxu0 0.0
        %1842 = vmatpush1.msra.mxu0 0.0
        %1843 = vmatprep.subr.mxu0 0.0
        %1844 = vmatpush1.msra.mxu0 0.0
        %1845 = vmatprep.subr.mxu0 0.0
        %1846 = vmatpush1.msra.mxu0 0.0
        %1847 = vmatprep.subr.mxu0 0.0
        %1848 = vmatpush1.msra.mxu0 0.0
        %1849 = vmatprep.subr.mxu0 0.0
        %1850 = vmatpush1.msra.mxu0 0.0
        %1851 = vmatprep.subr.mxu0 0.0
        %1852 = vmatpush1.msra.mxu0 0.0
        %1853 = vmatprep.subr.mxu0 0.0
        %1854 = vmatpush1.msra.mxu0 0.0
        %1855 = vmatprep.subr.mxu0 0.0
        %1856 = vmatpush1.msra.mxu0 0.0
        %1857 = vmatprep.subr.mxu0 0.0
        %1858 = vmatpush1.msra.mxu0 0.0
        %1859 = vmatprep.subr.mxu0 0.0
        %1860 = vmatpush1.msra.mxu0 0.0
        %1861 = vmatprep.subr.mxu0 0.0
        %1862 = vmatpush1.msra.mxu0 0.0
        %1863 = vmatprep.subr.mxu0 0.0
        %1864 = vmatpush1.msra.mxu0 0.0
        %1865 = vmatprep.subr.mxu0 0.0
        %1866 = vmatpush1.msra.mxu0 0.0
        %1867 = vmatprep.subr.mxu0 0.0
        %1868 = vmatpush1.msra.mxu0 0.0
        %1869 = vmatprep.subr.mxu0 0.0
        %1870 = vmatpush1.msra.mxu0 0.0
        %1871 = vmatprep.subr.mxu0 0.0
        %1872 = vmatpush1.msra.mxu0 0.0
        %1873 = vmatprep.subr.mxu0 0.0
        %1874 = vmatpush1.msra.mxu0 0.0
        %1875 = vmatprep.mubr.f32.mxu0 0.0
        %1876 = vmatmul.mubr.f32.gmra.mrb[0].mxu0 %v1809
        %v1877 = vpop.f32.mrb[0].mxu0
        %v1878 = vadd.f32 %v1806, %v1877
        %v1879 = vpop.f32.mrb[0].mxu0
        %1880 = vdwg.mxu0
        %v1881 = vmul.f32 %v1878, 0.5
        %v1882 = vmul.f32 %v1878, 0.044715
        %v1883 = vmul.f32 %v1882, %v1878
        %v1884 = vmul.f32 %v1883, %v1878
        %v1885 = vadd.f32 %v1878, %v1884
        %v1886 = vmul.f32 %v1885, 0.7978846
        %v1887 = vtanh.pop %v1886
        %v1888 = vadd.f32 %v1887, 1.0
        %v1889 = vmul.f32 %v1881, %v1888
        %v1891 = vlaneseq
        %v1892 = vshrl.u32 %v1891, 7
        %v1893 = vsub.s32 0, %v1892
        %v1894 = vrot.slane %v1015, %v1893
        %v1897 = vsel %vm894, %v1889, 0
        %1899 = vmatprep.subr.mxu0 0.0
        %1900 = vmatpush1.msra.mxu0 %v1011
        %1901 = vmatprep.subr.mxu0 0.0
        %1902 = vmatpush1.msra.mxu0 %v1012
        %1903 = vmatprep.subr.mxu0 0.0
        %1904 = vmatpush1.msra.mxu0 %v1013
        %1905 = vmatprep.subr.mxu0 0.0
        %1906 = vmatpush1.msra.mxu0 %v1014
        %1907 = vmatprep.subr.mxu0 0.0
        %1908 = vmatpush1.msra.mxu0 0.0
        %1909 = vmatprep.subr.mxu0 0.0
        %1910 = vmatpush1.msra.mxu0 0.0
        %1911 = vmatprep.subr.mxu0 0.0
        %1912 = vmatpush1.msra.mxu0 0.0
        %1913 = vmatprep.subr.mxu0 0.0
        %1914 = vmatpush1.msra.mxu0 0.0
        %1915 = vmatprep.subr.mxu0 0.0
        %1916 = vmatpush1.msra.mxu0 0.0
        %1917 = vmatprep.subr.mxu0 0.0
        %1918 = vmatpush1.msra.mxu0 0.0
        %1919 = vmatprep.subr.mxu0 0.0
        %1920 = vmatpush1.msra.mxu0 0.0
        %1921 = vmatprep.subr.mxu0 0.0
        %1922 = vmatpush1.msra.mxu0 0.0
        %1923 = vmatprep.subr.mxu0 0.0
        %1924 = vmatpush1.msra.mxu0 0.0
        %1925 = vmatprep.subr.mxu0 0.0
        %1926 = vmatpush1.msra.mxu0 0.0
        %1927 = vmatprep.subr.mxu0 0.0
        %1928 = vmatpush1.msra.mxu0 0.0
        %1929 = vmatprep.subr.mxu0 0.0
        %1930 = vmatpush1.msra.mxu0 0.0
        %1931 = vmatprep.subr.mxu0 0.0
        %1932 = vmatpush1.msra.mxu0 0.0
        %1933 = vmatprep.subr.mxu0 0.0
        %1934 = vmatpush1.msra.mxu0 0.0
        %1935 = vmatprep.subr.mxu0 0.0
        %1936 = vmatpush1.msra.mxu0 0.0
        %1937 = vmatprep.subr.mxu0 0.0
        %1938 = vmatpush1.msra.mxu0 0.0
        %1939 = vmatprep.subr.mxu0 0.0
        %1940 = vmatpush1.msra.mxu0 0.0
        %1941 = vmatprep.subr.mxu0 0.0
        %1942 = vmatpush1.msra.mxu0 0.0
        %1943 = vmatprep.subr.mxu0 0.0
        %1944 = vmatpush1.msra.mxu0 0.0
        %1945 = vmatprep.subr.mxu0 0.0
        %1946 = vmatpush1.msra.mxu0 0.0
        %1947 = vmatprep.subr.mxu0 0.0
        %1948 = vmatpush1.msra.mxu0 0.0
        %1949 = vmatprep.subr.mxu0 0.0
        %1950 = vmatpush1.msra.mxu0 0.0
        %1951 = vmatprep.subr.mxu0 0.0
        %1952 = vmatpush1.msra.mxu0 0.0
        %1953 = vmatprep.subr.mxu0 0.0
        %1954 = vmatpush1.msra.mxu0 0.0
        %1955 = vmatprep.subr.mxu0 0.0
        %1956 = vmatpush1.msra.mxu0 0.0
        %1957 = vmatprep.subr.mxu0 0.0
        %1958 = vmatpush1.msra.mxu0 0.0
        %1959 = vmatprep.subr.mxu0 0.0
        %1960 = vmatpush1.msra.mxu0 0.0
        %1961 = vmatprep.subr.mxu0 0.0
        %1962 = vmatpush1.msra.mxu0 0.0
        %1963 = vmatprep.mubr.f32.mxu0 0.0
        %1964 = vmatmul.mubr.f32.gmra.mrb[0].mxu0 %v1897
        %v1965 = vpop.f32.mrb[0].mxu0
        %v1966 = vadd.f32 %v1894, %v1965
        %v1967 = vpop.f32.mrb[0].mxu0
        %1968 = vdwg.mxu0
        %v1969 = vadd.f32 %v1801, %v1966
        %v1970 = vsel %vm894, %v1969, 0.0
        %1971 = vadd.xlane.f32.xlu0 %v1970
        %v1972 = vpop.xlane.xlu0 %1971
        %v1973 = vmul.f32 %v1972, %v898
        %v1974 = vsub.f32 %v1969, %v1973
        %v1975 = vmul.f32 %v1974, %v1974
        %v1976 = vsel %vm894, %v1975, 0.0
        %1977 = vadd.xlane.f32.xlu0 %v1976
        %v1978 = vpop.xlane.xlu0 %1977
        %v1979 = vmul.f32 %v1978, %v898
        %v1980 = vadd.f32 %v1979, 1e-05
        %v1981 = vrsqrt.pop %v1980
        %v1982 = vmul.f32 %v1974, %v1981
        %v1984 = vlaneseq
        %v1985 = vshrl.u32 %v1984, 7
        %v1986 = vsub.s32 0, %v1985
        %v1987 = vrot.slane %v1018, %v1986
        %v1989 = vmul.f32 %v1982, %v1987
        %v1991 = vlaneseq
        %v1992 = vshrl.u32 %v1991, 7
        %v1993 = vsub.s32 0, %v1992
        %v1994 = vrot.slane %v1019, %v1993
        %v1996 = vadd.f32 %v1989, %v1994
        %v1997 = vsel %vm894, %v1996, 0.0
        %v1998 = vrot.slane %v1997, 4
        %v1999 = vadd.f32 %v1997, %v1998
        %v2000 = vrot.slane %v1999, 2
        %v2001 = vadd.f32 %v1999, %v2000
        %v2002 = vrot.slane %v2001, 1
        %v2003 = vadd.f32 %v2001, %v2002
        %v2004 = vrcp.pop 8.0
        %v2005 = vmul.f32 %v2003, %v2004
        %v2006 = vld [vmem:[%s890] sm:$0xff]
        %v2007 = vld [vmem:[%s15] sm:$0xff]
        %v2008 = vld [vmem:[%s15 + $0x8] sm:$0xff]
        %v2009 = vld [vmem:[%s15 + $0x10] sm:$0xff]
        %v2010 = vld [vmem:[%s15 + $0x18] sm:$0xff]
        %v2012 = vsel %vm894, %v2006, 0
        %2014 = vmatprep.subr.mxu0 0.0
        %2015 = vmatpush1.msra.mxu0 %v2007
        %2016 = vmatprep.subr.mxu0 0.0
        %2017 = vmatpush1.msra.mxu0 %v2008
        %2018 = vmatprep.subr.mxu0 0.0
        %2019 = vmatpush1.msra.mxu0 %v2009
        %2020 = vmatprep.subr.mxu0 0.0
        %2021 = vmatpush1.msra.mxu0 %v2010
        %2022 = vmatprep.subr.mxu0 0.0
        %2023 = vmatpush1.msra.mxu0 0.0
        %2024 = vmatprep.subr.mxu0 0.0
        %2025 = vmatpush1.msra.mxu0 0.0
        %2026 = vmatprep.subr.mxu0 0.0
        %2027 = vmatpush1.msra.mxu0 0.0
        %2028 = vmatprep.subr.mxu0 0.0
        %2029 = vmatpush1.msra.mxu0 0.0
        %2030 = vmatprep.subr.mxu0 0.0
        %2031 = vmatpush1.msra.mxu0 0.0
        %2032 = vmatprep.subr.mxu0 0.0
        %2033 = vmatpush1.msra.mxu0 0.0
        %2034 = vmatprep.subr.mxu0 0.0
        %2035 = vmatpush1.msra.mxu0 0.0
        %2036 = vmatprep.subr.mxu0 0.0
        %2037 = vmatpush1.msra.mxu0 0.0
        %2038 = vmatprep.subr.mxu0 0.0
        %2039 = vmatpush1.msra.mxu0 0.0
        %2040 = vmatprep.subr.mxu0 0.0
        %2041 = vmatpush1.msra.mxu0 0.0
        %2042 = vmatprep.subr.mxu0 0.0
        %2043 = vmatpush1.msra.mxu0 0.0
        %2044 = vmatprep.subr.mxu0 0.0
        %2045 = vmatpush1.msra.mxu0 0.0
        %2046 = vmatprep.subr.mxu0 0.0
        %2047 = vmatpush1.msra.mxu0 0.0
        %2048 = vmatprep.subr.mxu0 0.0
        %2049 = vmatpush1.msra.mxu0 0.0
        %2050 = vmatprep.subr.mxu0 0.0
        %2051 = vmatpush1.msra.mxu0 0.0
        %2052 = vmatprep.subr.mxu0 0.0
        %2053 = vmatpush1.msra.mxu0 0.0
        %2054 = vmatprep.subr.mxu0 0.0
        %2055 = vmatpush1.msra.mxu0 0.0
        %2056 = vmatprep.subr.mxu0 0.0
        %2057 = vmatpush1.msra.mxu0 0.0
        %2058 = vmatprep.subr.mxu0 0.0
        %2059 = vmatpush1.msra.mxu0 0.0
        %2060 = vmatprep.subr.mxu0 0.0
        %2061 = vmatpush1.msra.mxu0 0.0
        %2062 = vmatprep.subr.mxu0 0.0
        %2063 = vmatpush1.msra.mxu0 0.0
        %2064 = vmatprep.subr.mxu0 0.0
        %2065 = vmatpush1.msra.mxu0 0.0
        %2066 = vmatprep.subr.mxu0 0.0
        %2067 = vmatpush1.msra.mxu0 0.0
        %2068 = vmatprep.subr.mxu0 0.0
        %2069 = vmatpush1.msra.mxu0 0.0
        %2070 = vmatprep.subr.mxu0 0.0
        %2071 = vmatpush1.msra.mxu0 0.0
        %2072 = vmatprep.subr.mxu0 0.0
        %2073 = vmatpush1.msra.mxu0 0.0
        %2074 = vmatprep.subr.mxu0 0.0
        %2075 = vmatpush1.msra.mxu0 0.0
        %2076 = vmatprep.subr.mxu0 0.0
        %2077 = vmatpush1.msra.mxu0 0.0
        %2078 = vmatprep.mubr.f32.mxu0 0.0
        %2079 = vmatmul.mubr.f32.gmra.mrb[0].mxu0 %v2012
        %v2080 = vpop.f32.mrb[0].mxu0
        %v2081 = vadd.f32 0.0, %v2080
        %v2082 = vpop.f32.mrb[0].mxu0
        %2083 = vdwg.mxu0
        %v2084 = vld [vmem:[%s16] sm:$0xff]
        %v2085 = vld [vmem:[%s16 + $0x8] sm:$0xff]
        %v2086 = vld [vmem:[%s16 + $0x10] sm:$0xff]
        %v2087 = vld [vmem:[%s16 + $0x18] sm:$0xff]
        %v2089 = vsel %vm894, %v1996, 0
        %2091 = vmatprep.subr.mxu0 0.0
        %2092 = vmatpush1.msra.mxu0 %v2084
        %2093 = vmatprep.subr.mxu0 0.0
        %2094 = vmatpush1.msra.mxu0 %v2085
        %2095 = vmatprep.subr.mxu0 0.0
        %2096 = vmatpush1.msra.mxu0 %v2086
        %2097 = vmatprep.subr.mxu0 0.0
        %2098 = vmatpush1.msra.mxu0 %v2087
        %2099 = vmatprep.subr.mxu0 0.0
        %2100 = vmatpush1.msra.mxu0 0.0
        %2101 = vmatprep.subr.mxu0 0.0
        %2102 = vmatpush1.msra.mxu0 0.0
        %2103 = vmatprep.subr.mxu0 0.0
        %2104 = vmatpush1.msra.mxu0 0.0
        %2105 = vmatprep.subr.mxu0 0.0
        %2106 = vmatpush1.msra.mxu0 0.0
        %2107 = vmatprep.subr.mxu0 0.0
        %2108 = vmatpush1.msra.mxu0 0.0
        %2109 = vmatprep.subr.mxu0 0.0
        %2110 = vmatpush1.msra.mxu0 0.0
        %2111 = vmatprep.subr.mxu0 0.0
        %2112 = vmatpush1.msra.mxu0 0.0
        %2113 = vmatprep.subr.mxu0 0.0
        %2114 = vmatpush1.msra.mxu0 0.0
        %2115 = vmatprep.subr.mxu0 0.0
        %2116 = vmatpush1.msra.mxu0 0.0
        %2117 = vmatprep.subr.mxu0 0.0
        %2118 = vmatpush1.msra.mxu0 0.0
        %2119 = vmatprep.subr.mxu0 0.0
        %2120 = vmatpush1.msra.mxu0 0.0
        %2121 = vmatprep.subr.mxu0 0.0
        %2122 = vmatpush1.msra.mxu0 0.0
        %2123 = vmatprep.subr.mxu0 0.0
        %2124 = vmatpush1.msra.mxu0 0.0
        %2125 = vmatprep.subr.mxu0 0.0
        %2126 = vmatpush1.msra.mxu0 0.0
        %2127 = vmatprep.subr.mxu0 0.0
        %2128 = vmatpush1.msra.mxu0 0.0
        %2129 = vmatprep.subr.mxu0 0.0
        %2130 = vmatpush1.msra.mxu0 0.0
        %2131 = vmatprep.subr.mxu0 0.0
        %2132 = vmatpush1.msra.mxu0 0.0
        %2133 = vmatprep.subr.mxu0 0.0
        %2134 = vmatpush1.msra.mxu0 0.0
        %2135 = vmatprep.subr.mxu0 0.0
        %2136 = vmatpush1.msra.mxu0 0.0
        %2137 = vmatprep.subr.mxu0 0.0
        %2138 = vmatpush1.msra.mxu0 0.0
        %2139 = vmatprep.subr.mxu0 0.0
        %2140 = vmatpush1.msra.mxu0 0.0
        %2141 = vmatprep.subr.mxu0 0.0
        %2142 = vmatpush1.msra.mxu0 0.0
        %2143 = vmatprep.subr.mxu0 0.0
        %2144 = vmatpush1.msra.mxu0 0.0
        %2145 = vmatprep.subr.mxu0 0.0
        %2146 = vmatpush1.msra.mxu0 0.0
        %2147 = vmatprep.subr.mxu0 0.0
        %2148 = vmatpush1.msra.mxu0 0.0
        %2149 = vmatprep.subr.mxu0 0.0
        %2150 = vmatpush1.msra.mxu0 0.0
        %2151 = vmatprep.subr.mxu0 0.0
        %2152 = vmatpush1.msra.mxu0 0.0
        %2153 = vmatprep.subr.mxu0 0.0
        %2154 = vmatpush1.msra.mxu0 0.0
        %2155 = vmatprep.mubr.f32.mxu0 0.0
        %2156 = vmatmul.mubr.f32.gmra.mrb[0].mxu0 %v2089
        %v2157 = vpop.f32.mrb[0].mxu0
        %v2158 = vadd.f32 0.0, %v2157
        %v2159 = vpop.f32.mrb[0].mxu0
        %2160 = vdwg.mxu0
        %v2161 = vld [vmem:[%s17] sm:$0xff]
        %v2162 = vld [vmem:[%s17 + $0x8] sm:$0xff]
        %v2163 = vld [vmem:[%s17 + $0x10] sm:$0xff]
        %v2164 = vld [vmem:[%s17 + $0x18] sm:$0xff]
        %v2165 = vld [vmem:[%s18] sm:$0xff]
        %v2166 = vld [vmem:[%s18 + $0x8] sm:$0xff]
        %v2167 = vld [vmem:[%s18 + $0x10] sm:$0xff]
        %v2168 = vld [vmem:[%s18 + $0x18] sm:$0xff]
        %v2169 = vld [vmem:[#allocation10] sm:$0x1]
        %v2170 = vld [vmem:[%s20] sm:$0xff]
        %v2171 = vld [vmem:[%s20 + $0x8] sm:$0xff]
        %v2172 = vld [vmem:[%s20 + $0x10] sm:$0xff]
        %v2173 = vld [vmem:[%s20 + $0x18] sm:$0xff]
        %v2174 = vld [vmem:[#allocation11] sm:$0x1]
        %v2175 = vld [vmem:[%s22] sm:$0x1]
        %v2176 = vld [vmem:[#allocation13] sm:$0x1]
        %v2177 = vld [vmem:[%s24] sm:$0x1]
        %v2178 = vld [vmem:[%s25] sm:$0x1]
        %v2180 = vsel %vm1023, %v2081, 0
        %v2183 = vsel %vm1023, %v2158, 0
        %2185 = vmatprep.subr.mxu0 0.0
        %2186 = vmatpush1.xpose.msra.mxu0 %v2183
        %2187 = vmatprep.subr.mxu0 0.0
        %2188 = vmatpush1.xpose.msra.mxu0 0.0
        %2189 = vmatprep.subr.mxu0 0.0
        %2190 = vmatpush1.xpose.msra.mxu0 0.0
        %2191 = vmatprep.subr.mxu0 0.0
        %2192 = vmatpush1.xpose.msra.mxu0 0.0
        %2193 = vmatprep.subr.mxu0 0.0
        %2194 = vmatpush1.xpose.msra.mxu0 0.0
        %2195 = vmatprep.subr.mxu0 0.0
        %2196 = vmatpush1.xpose.msra.mxu0 0.0
        %2197 = vmatprep.subr.mxu0 0.0
        %2198 = vmatpush1.xpose.msra.mxu0 0.0
        %2199 = vmatprep.subr.mxu0 0.0
        %2200 = vmatpush1.xpose.msra.mxu0 0.0
        %2201 = vmatprep.subr.mxu0 0.0
        %2202 = vmatpush1.xpose.msra.mxu0 0.0
        %2203 = vmatprep.subr.mxu0 0.0
        %2204 = vmatpush1.xpose.msra.mxu0 0.0
        %2205 = vmatprep.subr.mxu0 0.0
        %2206 = vmatpush1.xpose.msra.mxu0 0.0
        %2207 = vmatprep.subr.mxu0 0.0
        %2208 = vmatpush1.xpose.msra.mxu0 0.0
        %2209 = vmatprep.subr.mxu0 0.0
        %2210 = vmatpush1.xpose.msra.mxu0 0.0
        %2211 = vmatprep.subr.mxu0 0.0
        %2212 = vmatpush1.xpose.msra.mxu0 0.0
        %2213 = vmatprep.subr.mxu0 0.0
        %2214 = vmatpush1.xpose.msra.mxu0 0.0
        %2215 = vmatprep.subr.mxu0 0.0
        %2216 = vmatpush1.xpose.msra.mxu0 0.0
        %2217 = vmatprep.subr.mxu0 0.0
        %2218 = vmatpush1.xpose.msra.mxu0 0.0
        %2219 = vmatprep.subr.mxu0 0.0
        %2220 = vmatpush1.xpose.msra.mxu0 0.0
        %2221 = vmatprep.subr.mxu0 0.0
        %2222 = vmatpush1.xpose.msra.mxu0 0.0
        %2223 = vmatprep.subr.mxu0 0.0
        %2224 = vmatpush1.xpose.msra.mxu0 0.0
        %2225 = vmatprep.subr.mxu0 0.0
        %2226 = vmatpush1.xpose.msra.mxu0 0.0
        %2227 = vmatprep.subr.mxu0 0.0
        %2228 = vmatpush1.xpose.msra.mxu0 0.0
        %2229 = vmatprep.subr.mxu0 0.0
        %2230 = vmatpush1.xpose.msra.mxu0 0.0
        %2231 = vmatprep.subr.mxu0 0.0
        %2232 = vmatpush1.xpose.msra.mxu0 0.0
        %2233 = vmatprep.subr.mxu0 0.0
        %2234 = vmatpush1.xpose.msra.mxu0 0.0
        %2235 = vmatprep.subr.mxu0 0.0
        %2236 = vmatpush1.xpose.msra.mxu0 0.0
        %2237 = vmatprep.subr.mxu0 0.0
        %2238 = vmatpush1.xpose.msra.mxu0 0.0
        %2239 = vmatprep.subr.mxu0 0.0
        %2240 = vmatpush1.xpose.msra.mxu0 0.0
        %2241 = vmatprep.subr.mxu0 0.0
        %2242 = vmatpush1.xpose.msra.mxu0 0.0
        %2243 = vmatprep.subr.mxu0 0.0
        %2244 = vmatpush1.xpose.msra.mxu0 0.0
        %2245 = vmatprep.subr.mxu0 0.0
        %2246 = vmatpush1.xpose.msra.mxu0 0.0
        %2247 = vmatprep.subr.mxu0 0.0
        %2248 = vmatpush1.xpose.msra.mxu0 0.0
        %2249 = vmatprep.mubr.f32.mxu0 0.0
        %2250 = vmatmul.mubr.f32.gmra.mrb[0].mxu0 %v2180
        %v2251 = vpop.f32.mrb[0].mxu0
        %v2252 = vadd.f32 0.0, %v2251
        %v2253 = vpop.f32.mrb[0].mxu0
        %2254 = vdwg.mxu0
        %v2255 = vmul.f32 %v2252, 0.35355338
        %v2256 = vsel %vm1023, %v2255, -inf
        %2257 = vmax.xlane.f32.xlu0 %v2256
        %v2258 = vpop.xlane.xlu0 %2257
        %v2259 = vsub.f32 %v2255, %v2258
        %v2260 = vmul.f32 %v2259, 1.442695
        %v2261 = vpow.pop %v2260
        %v2262 = vsel %vm1023, %v2261, 0.0
        %2263 = vadd.xlane.f32.xlu0 %v2262
        %v2264 = vpop.xlane.xlu0 %2263
        %v2265 = vrcp.pop %v2264
        %v2266 = vmul.f32 %v2261, %v2265
        %2267 = vrot.lane.b32.xlu0 %v2158, 96
        %v2268 = vpop.permute.xlu0 %2267
        %v2271 = vsel %vm1023, %v2266, 0
        %2273 = vmatprep.subr.mxu0 0.0
        %2274 = vmatpush1.msra.mxu0 %v2268
        %2275 = vmatprep.subr.mxu0 0.0
        %2276 = vmatpush1.msra.mxu0 0.0
        %2277 = vmatprep.subr.mxu0 0.0
        %2278 = vmatpush1.msra.mxu0 0.0
        %2279 = vmatprep.subr.mxu0 0.0
        %2280 = vmatpush1.msra.mxu0 0.0
        %2281 = vmatprep.subr.mxu0 0.0
        %2282 = vmatpush1.msra.mxu0 0.0
        %2283 = vmatprep.subr.mxu0 0.0
        %2284 = vmatpush1.msra.mxu0 0.0
        %2285 = vmatprep.subr.mxu0 0.0
        %2286 = vmatpush1.msra.mxu0 0.0
        %2287 = vmatprep.subr.mxu0 0.0
        %2288 = vmatpush1.msra.mxu0 0.0
        %2289 = vmatprep.subr.mxu0 0.0
        %2290 = vmatpush1.msra.mxu0 0.0
        %2291 = vmatprep.subr.mxu0 0.0
        %2292 = vmatpush1.msra.mxu0 0.0
        %2293 = vmatprep.subr.mxu0 0.0
        %2294 = vmatpush1.msra.mxu0 0.0
        %2295 = vmatprep.subr.mxu0 0.0
        %2296 = vmatpush1.msra.mxu0 0.0
        %2297 = vmatprep.subr.mxu0 0.0
        %2298 = vmatpush1.msra.mxu0 0.0
        %2299 = vmatprep.subr.mxu0 0.0
        %2300 = vmatpush1.msra.mxu0 0.0
        %2301 = vmatprep.subr.mxu0 0.0
        %2302 = vmatpush1.msra.mxu0 0.0
        %2303 = vmatprep.subr.mxu0 0.0
        %2304 = vmatpush1.msra.mxu0 0.0
        %2305 = vmatprep.subr.mxu0 0.0
        %2306 = vmatpush1.msra.mxu0 0.0
        %2307 = vmatprep.subr.mxu0 0.0
        %2308 = vmatpush1.msra.mxu0 0.0
        %2309 = vmatprep.subr.mxu0 0.0
        %2310 = vmatpush1.msra.mxu0 0.0
        %2311 = vmatprep.subr.mxu0 0.0
        %2312 = vmatpush1.msra.mxu0 0.0
        %2313 = vmatprep.subr.mxu0 0.0
        %2314 = vmatpush1.msra.mxu0 0.0
        %2315 = vmatprep.subr.mxu0 0.0
        %2316 = vmatpush1.msra.mxu0 0.0
        %2317 = vmatprep.subr.mxu0 0.0
        %2318 = vmatpush1.msra.mxu0 0.0
        %2319 = vmatprep.subr.mxu0 0.0
        %2320 = vmatpush1.msra.mxu0 0.0
        %2321 = vmatprep.subr.mxu0 0.0
        %2322 = vmatpush1.msra.mxu0 0.0
        %2323 = vmatprep.subr.mxu0 0.0
        %2324 = vmatpush1.msra.mxu0 0.0
        %2325 = vmatprep.subr.mxu0 0.0
        %2326 = vmatpush1.msra.mxu0 0.0
        %2327 = vmatprep.subr.mxu0 0.0
        %2328 = vmatpush1.msra.mxu0 0.0
        %2329 = vmatprep.subr.mxu0 0.0
        %2330 = vmatpush1.msra.mxu0 0.0
        %2331 = vmatprep.subr.mxu0 0.0
        %2332 = vmatpush1.msra.mxu0 0.0
        %2333 = vmatprep.subr.mxu0 0.0
        %2334 = vmatpush1.msra.mxu0 0.0
        %2335 = vmatprep.subr.mxu0 0.0
        %2336 = vmatpush1.msra.mxu0 0.0
        %2337 = vmatprep.mubr.f32.mxu0 0.0
        %2338 = vmatmul.mubr.f32.gmra.mrb[0].mxu0 %v2271
        %v2339 = vpop.f32.mrb[0].mxu0
        %v2340 = vadd.f32 0.0, %v2339
        %v2341 = vpop.f32.mrb[0].mxu0
        %2342 = vdwg.mxu0
        %2343 = vrot.lane.b32.xlu0 %v2081, 120
        %v2344 = vpop.permute.xlu0 %2343
        %2345 = vrot.lane.b32.xlu0 %v2158, 120
        %v2346 = vpop.permute.xlu0 %2345
        %v2347 = vsel %vm1023, %v2344, 0
        %v2349 = vsel %vm1023, %v2346, 0
        %2351 = vmatprep.subr.mxu0 0.0
        %2352 = vmatpush1.xpose.msra.mxu0 %v2349
        %2353 = vmatprep.subr.mxu0 0.0
        %2354 = vmatpush1.xpose.msra.mxu0 0.0
        %2355 = vmatprep.subr.mxu0 0.0
        %2356 = vmatpush1.xpose.msra.mxu0 0.0
        %2357 = vmatprep.subr.mxu0 0.0
        %2358 = vmatpush1.xpose.msra.mxu0 0.0
        %2359 = vmatprep.subr.mxu0 0.0
        %2360 = vmatpush1.xpose.msra.mxu0 0.0
        %2361 = vmatprep.subr.mxu0 0.0
        %2362 = vmatpush1.xpose.msra.mxu0 0.0
        %2363 = vmatprep.subr.mxu0 0.0
        %2364 = vmatpush1.xpose.msra.mxu0 0.0
        %2365 = vmatprep.subr.mxu0 0.0
        %2366 = vmatpush1.xpose.msra.mxu0 0.0
        %2367 = vmatprep.subr.mxu0 0.0
        %2368 = vmatpush1.xpose.msra.mxu0 0.0
        %2369 = vmatprep.subr.mxu0 0.0
        %2370 = vmatpush1.xpose.msra.mxu0 0.0
        %2371 = vmatprep.subr.mxu0 0.0
        %2372 = vmatpush1.xpose.msra.mxu0 0.0
        %2373 = vmatprep.subr.mxu0 0.0
        %2374 = vmatpush1.xpose.msra.mxu0 0.0
        %2375 = vmatprep.subr.mxu0 0.0
        %2376 = vmatpush1.xpose.msra.mxu0 0.0
        %2377 = vmatprep.subr.mxu0 0.0
        %2378 = vmatpush1.xpose.msra.mxu0 0.0
        %2379 = vmatprep.subr.mxu0 0.0
        %2380 = vmatpush1.xpose.msra.mxu0 0.0
        %2381 = vmatprep.subr.mxu0 0.0
        %2382 = vmatpush1.xpose.msra.mxu0 0.0
        %2383 = vmatprep.subr.mxu0 0.0
        %2384 = vmatpush1.xpose.msra.mxu0 0.0
        %2385 = vmatprep.subr.mxu0 0.0
        %2386 = vmatpush1.xpose.msra.mxu0 0.0
        %2387 = vmatprep.subr.mxu0 0.0
        %2388 = vmatpush1.xpose.msra.mxu0 0.0
        %2389 = vmatprep.subr.mxu0 0.0
        %2390 = vmatpush1.xpose.msra.mxu0 0.0
        %2391 = vmatprep.subr.mxu0 0.0
        %2392 = vmatpush1.xpose.msra.mxu0 0.0
        %2393 = vmatprep.subr.mxu0 0.0
        %2394 = vmatpush1.xpose.msra.mxu0 0.0
        %2395 = vmatprep.subr.mxu0 0.0
        %2396 = vmatpush1.xpose.msra.mxu0 0.0
        %2397 = vmatprep.subr.mxu0 0.0
        %2398 = vmatpush1.xpose.msra.mxu0 0.0
        %2399 = vmatprep.subr.mxu0 0.0
        %2400 = vmatpush1.xpose.msra.mxu0 0.0
        %2401 = vmatprep.subr.mxu0 0.0
        %2402 = vmatpush1.xpose.msra.mxu0 0.0
        %2403 = vmatprep.subr.mxu0 0.0
        %2404 = vmatpush1.xpose.msra.mxu0 0.0
        %2405 = vmatprep.subr.mxu0 0.0
        %2406 = vmatpush1.xpose.msra.mxu0 0.0
        %2407 = vmatprep.subr.mxu0 0.0
        %2408 = vmatpush1.xpose.msra.mxu0 0.0
        %2409 = vmatprep.subr.mxu0 0.0
        %2410 = vmatpush1.xpose.msra.mxu0 0.0
        %2411 = vmatprep.subr.mxu0 0.0
        %2412 = vmatpush1.xpose.msra.mxu0 0.0
        %2413 = vmatprep.subr.mxu0 0.0
        %2414 = vmatpush1.xpose.msra.mxu0 0.0
        %2415 = vmatprep.mubr.f32.mxu0 0.0
        %2416 = vmatmul.mubr.f32.gmra.mrb[0].mxu0 %v2347
        %v2417 = vpop.f32.mrb[0].mxu0
        %v2418 = vadd.f32 0.0, %v2417
        %v2419 = vpop.f32.mrb[0].mxu0
        %2420 = vdwg.mxu0
        %v2421 = vmul.f32 %v2418, 0.35355338
        %v2422 = vsel %vm1023, %v2421, -inf
        %2423 = vmax.xlane.f32.xlu0 %v2422
        %v2424 = vpop.xlane.xlu0 %2423
        %v2425 = vsub.f32 %v2421, %v2424
        %v2426 = vmul.f32 %v2425, 1.442695
        %v2427 = vpow.pop %v2426
        %v2428 = vsel %vm1023, %v2427, 0.0
        %2429 = vadd.xlane.f32.xlu0 %v2428
        %v2430 = vpop.xlane.xlu0 %2429
        %v2431 = vrcp.pop %v2430
        %v2432 = vmul.f32 %v2427, %v2431
        %2433 = vrot.lane.b32.xlu0 %v2158, 88
        %v2434 = vpop.permute.xlu0 %2433
        %v2437 = vsel %vm1023, %v2432, 0
        %2439 = vmatprep.subr.mxu0 0.0
        %2440 = vmatpush1.msra.mxu0 %v2434
        %2441 = vmatprep.subr.mxu0 0.0
        %2442 = vmatpush1.msra.mxu0 0.0
        %2443 = vmatprep.subr.mxu0 0.0
        %2444 = vmatpush1.msra.mxu0 0.0
        %2445 = vmatprep.subr.mxu0 0.0
        %2446 = vmatpush1.msra.mxu0 0.0
        %2447 = vmatprep.subr.mxu0 0.0
        %2448 = vmatpush1.msra.mxu0 0.0
        %2449 = vmatprep.subr.mxu0 0.0
        %2450 = vmatpush1.msra.mxu0 0.0
        %2451 = vmatprep.subr.mxu0 0.0
        %2452 = vmatpush1.msra.mxu0 0.0
        %2453 = vmatprep.subr.mxu0 0.0
        %2454 = vmatpush1.msra.mxu0 0.0
        %2455 = vmatprep.subr.mxu0 0.0
        %2456 = vmatpush1.msra.mxu0 0.0
        %2457 = vmatprep.subr.mxu0 0.0
        %2458 = vmatpush1.msra.mxu0 0.0
        %2459 = vmatprep.subr.mxu0 0.0
        %2460 = vmatpush1.msra.mxu0 0.0
        %2461 = vmatprep.subr.mxu0 0.0
        %2462 = vmatpush1.msra.mxu0 0.0
        %2463 = vmatprep.subr.mxu0 0.0
        %2464 = vmatpush1.msra.mxu0 0.0
        %2465 = vmatprep.subr.mxu0 0.0
        %2466 = vmatpush1.msra.mxu0 0.0
        %2467 = vmatprep.subr.mxu0 0.0
        %2468 = vmatpush1.msra.mxu0 0.0
        %2469 = vmatprep.subr.mxu0 0.0
        %2470 = vmatpush1.msra.mxu0 0.0
        %2471 = vmatprep.subr.mxu0 0.0
        %2472 = vmatpush1.msra.mxu0 0.0
        %2473 = vmatprep.subr.mxu0 0.0
        %2474 = vmatpush1.msra.mxu0 0.0
        %2475 = vmatprep.subr.mxu0 0.0
        %2476 = vmatpush1.msra.mxu0 0.0
        %2477 = vmatprep.subr.mxu0 0.0
        %2478 = vmatpush1.msra.mxu0 0.0
        %2479 = vmatprep.subr.mxu0 0.0
        %2480 = vmatpush1.msra.mxu0 0.0
        %2481 = vmatprep.subr.mxu0 0.0
        %2482 = vmatpush1.msra.mxu0 0.0
        %2483 = vmatprep.subr.mxu0 0.0
        %2484 = vmatpush1.msra.mxu0 0.0
        %2485 = vmatprep.subr.mxu0 0.0
        %2486 = vmatpush1.msra.mxu0 0.0
        %2487 = vmatprep.subr.mxu0 0.0
        %2488 = vmatpush1.msra.mxu0 0.0
        %2489 = vmatprep.subr.mxu0 0.0
        %2490 = vmatpush1.msra.mxu0 0.0
        %2491 = vmatprep.subr.mxu0 0.0
        %2492 = vmatpush1.msra.mxu0 0.0
        %2493 = vmatprep.subr.mxu0 0.0
        %2494 = vmatpush1.msra.mxu0 0.0
        %2495 = vmatprep.subr.mxu0 0.0
        %2496 = vmatpush1.msra.mxu0 0.0
        %2497 = vmatprep.subr.mxu0 0.0
        %2498 = vmatpush1.msra.mxu0 0.0
        %2499 = vmatprep.subr.mxu0 0.0
        %2500 = vmatpush1.msra.mxu0 0.0
        %2501 = vmatprep.subr.mxu0 0.0
        %2502 = vmatpush1.msra.mxu0 0.0
        %2503 = vmatprep.mubr.f32.mxu0 0.0
        %2504 = vmatmul.mubr.f32.gmra.mrb[0].mxu0 %v2437
        %v2505 = vpop.f32.mrb[0].mxu0
        %v2506 = vadd.f32 0.0, %v2505
        %v2507 = vpop.f32.mrb[0].mxu0
        %2508 = vdwg.mxu0
        %2509 = vrot.lane.b32.xlu0 %v2081, 112
        %v2510 = vpop.permute.xlu0 %2509
        %2511 = vrot.lane.b32.xlu0 %v2158, 112
        %v2512 = vpop.permute.xlu0 %2511
        %v2513 = vsel %vm1023, %v2510, 0
        %v2515 = vsel %vm1023, %v2512, 0
        %2517 = vmatprep.subr.mxu0 0.0
        %2518 = vmatpush1.xpose.msra.mxu0 %v2515
        %2519 = vmatprep.subr.mxu0 0.0
        %2520 = vmatpush1.xpose.msra.mxu0 0.0
        %2521 = vmatprep.subr.mxu0 0.0
        %2522 = vmatpush1.xpose.msra.mxu0 0.0
        %2523 = vmatprep.subr.mxu0 0.0
        %2524 = vmatpush1.xpose.msra.mxu0 0.0
        %2525 = vmatprep.subr.mxu0 0.0
        %2526 = vmatpush1.xpose.msra.mxu0 0.0
        %2527 = vmatprep.subr.mxu0 0.0
        %2528 = vmatpush1.xpose.msra.mxu0 0.0
        %2529 = vmatprep.subr.mxu0 0.0
        %2530 = vmatpush1.xpose.msra.mxu0 0.0
        %2531 = vmatprep.subr.mxu0 0.0
        %2532 = vmatpush1.xpose.msra.mxu0 0.0
        %2533 = vmatprep.subr.mxu0 0.0
        %2534 = vmatpush1.xpose.msra.mxu0 0.0
        %2535 = vmatprep.subr.mxu0 0.0
        %2536 = vmatpush1.xpose.msra.mxu0 0.0
        %2537 = vmatprep.subr.mxu0 0.0
        %2538 = vmatpush1.xpose.msra.mxu0 0.0
        %2539 = vmatprep.subr.mxu0 0.0
        %2540 = vmatpush1.xpose.msra.mxu0 0.0
        %2541 = vmatprep.subr.mxu0 0.0
        %2542 = vmatpush1.xpose.msra.mxu0 0.0
        %2543 = vmatprep.subr.mxu0 0.0
        %2544 = vmatpush1.xpose.msra.mxu0 0.0
        %2545 = vmatprep.subr.mxu0 0.0
        %2546 = vmatpush1.xpose.msra.mxu0 0.0
        %2547 = vmatprep.subr.mxu0 0.0
        %2548 = vmatpush1.xpose.msra.mxu0 0.0
        %2549 = vmatprep.subr.mxu0 0.0
        %2550 = vmatpush1.xpose.msra.mxu0 0.0
        %2551 = vmatprep.subr.mxu0 0.0
        %2552 = vmatpush1.xpose.msra.mxu0 0.0
        %2553 = vmatprep.subr.mxu0 0.0
        %2554 = vmatpush1.xpose.msra.mxu0 0.0
        %2555 = vmatprep.subr.mxu0 0.0
        %2556 = vmatpush1.xpose.msra.mxu0 0.0
        %2557 = vmatprep.subr.mxu0 0.0
        %2558 = vmatpush1.xpose.msra.mxu0 0.0
        %2559 = vmatprep.subr.mxu0 0.0
        %2560 = vmatpush1.xpose.msra.mxu0 0.0
        %2561 = vmatprep.subr.mxu0 0.0
        %2562 = vmatpush1.xpose.msra.mxu0 0.0
        %2563 = vmatprep.subr.mxu0 0.0
        %2564 = vmatpush1.xpose.msra.mxu0 0.0
        %2565 = vmatprep.subr.mxu0 0.0
        %2566 = vmatpush1.xpose.msra.mxu0 0.0
        %2567 = vmatprep.subr.mxu0 0.0
        %2568 = vmatpush1.xpose.msra.mxu0 0.0
        %2569 = vmatprep.subr.mxu0 0.0
        %2570 = vmatpush1.xpose.msra.mxu0 0.0
        %2571 = vmatprep.subr.mxu0 0.0
        %2572 = vmatpush1.xpose.msra.mxu0 0.0
        %2573 = vmatprep.subr.mxu0 0.0
        %2574 = vmatpush1.xpose.msra.mxu0 0.0
        %2575 = vmatprep.subr.mxu0 0.0
        %2576 = vmatpush1.xpose.msra.mxu0 0.0
        %2577 = vmatprep.subr.mxu0 0.0
        %2578 = vmatpush1.xpose.msra.mxu0 0.0
        %2579 = vmatprep.subr.mxu0 0.0
        %2580 = vmatpush1.xpose.msra.mxu0 0.0
        %2581 = vmatprep.mubr.f32.mxu0 0.0
        %2582 = vmatmul.mubr.f32.gmra.mrb[0].mxu0 %v2513
        %v2583 = vpop.f32.mrb[0].mxu0
        %v2584 = vadd.f32 0.0, %v2583
        %v2585 = vpop.f32.mrb[0].mxu0
        %2586 = vdwg.mxu0
        %v2587 = vmul.f32 %v2584, 0.35355338
        %v2588 = vsel %vm1023, %v2587, -inf
        %2589 = vmax.xlane.f32.xlu0 %v2588
        %v2590 = vpop.xlane.xlu0 %2589
        %v2591 = vsub.f32 %v2587, %v2590
        %v2592 = vmul.f32 %v2591, 1.442695
        %v2593 = vpow.pop %v2592
        %v2594 = vsel %vm1023, %v2593, 0.0
        %2595 = vadd.xlane.f32.xlu0 %v2594
        %v2596 = vpop.xlane.xlu0 %2595
        %v2597 = vrcp.pop %v2596
        %v2598 = vmul.f32 %v2593, %v2597
        %2599 = vrot.lane.b32.xlu0 %v2158, 80
        %v2600 = vpop.permute.xlu0 %2599
        %v2603 = vsel %vm1023, %v2598, 0
        %2605 = vmatprep.subr.mxu0 0.0
        %2606 = vmatpush1.msra.mxu0 %v2600
        %2607 = vmatprep.subr.mxu0 0.0
        %2608 = vmatpush1.msra.mxu0 0.0
        %2609 = vmatprep.subr.mxu0 0.0
        %2610 = vmatpush1.msra.mxu0 0.0
        %2611 = vmatprep.subr.mxu0 0.0
        %2612 = vmatpush1.msra.mxu0 0.0
        %2613 = vmatprep.subr.mxu0 0.0
        %2614 = vmatpush1.msra.mxu0 0.0
        %2615 = vmatprep.subr.mxu0 0.0
        %2616 = vmatpush1.msra.mxu0 0.0
        %2617 = vmatprep.subr.mxu0 0.0
        %2618 = vmatpush1.msra.mxu0 0.0
        %2619 = vmatprep.subr.mxu0 0.0
        %2620 = vmatpush1.msra.mxu0 0.0
        %2621 = vmatprep.subr.mxu0 0.0
        %2622 = vmatpush1.msra.mxu0 0.0
        %2623 = vmatprep.subr.mxu0 0.0
        %2624 = vmatpush1.msra.mxu0 0.0
        %2625 = vmatprep.subr.mxu0 0.0
        %2626 = vmatpush1.msra.mxu0 0.0
        %2627 = vmatprep.subr.mxu0 0.0
        %2628 = vmatpush1.msra.mxu0 0.0
        %2629 = vmatprep.subr.mxu0 0.0
        %2630 = vmatpush1.msra.mxu0 0.0
        %2631 = vmatprep.subr.mxu0 0.0
        %2632 = vmatpush1.msra.mxu0 0.0
        %2633 = vmatprep.subr.mxu0 0.0
        %2634 = vmatpush1.msra.mxu0 0.0
        %2635 = vmatprep.subr.mxu0 0.0
        %2636 = vmatpush1.msra.mxu0 0.0
        %2637 = vmatprep.subr.mxu0 0.0
        %2638 = vmatpush1.msra.mxu0 0.0
        %2639 = vmatprep.subr.mxu0 0.0
        %2640 = vmatpush1.msra.mxu0 0.0
        %2641 = vmatprep.subr.mxu0 0.0
        %2642 = vmatpush1.msra.mxu0 0.0
        %2643 = vmatprep.subr.mxu0 0.0
        %2644 = vmatpush1.msra.mxu0 0.0
        %2645 = vmatprep.subr.mxu0 0.0
        %2646 = vmatpush1.msra.mxu0 0.0
        %2647 = vmatprep.subr.mxu0 0.0
        %2648 = vmatpush1.msra.mxu0 0.0
        %2649 = vmatprep.subr.mxu0 0.0
        %2650 = vmatpush1.msra.mxu0 0.0
        %2651 = vmatprep.subr.mxu0 0.0
        %2652 = vmatpush1.msra.mxu0 0.0
        %2653 = vmatprep.subr.mxu0 0.0
        %2654 = vmatpush1.msra.mxu0 0.0
        %2655 = vmatprep.subr.mxu0 0.0
        %2656 = vmatpush1.msra.mxu0 0.0
        %2657 = vmatprep.subr.mxu0 0.0
        %2658 = vmatpush1.msra.mxu0 0.0
        %2659 = vmatprep.subr.mxu0 0.0
        %2660 = vmatpush1.msra.mxu0 0.0
        %2661 = vmatprep.subr.mxu0 0.0
        %2662 = vmatpush1.msra.mxu0 0.0
        %2663 = vmatprep.subr.mxu0 0.0
        %2664 = vmatpush1.msra.mxu0 0.0
        %2665 = vmatprep.subr.mxu0 0.0
        %2666 = vmatpush1.msra.mxu0 0.0
        %2667 = vmatprep.subr.mxu0 0.0
        %2668 = vmatpush1.msra.mxu0 0.0
        %2669 = vmatprep.mubr.f32.mxu0 0.0
        %2670 = vmatmul.mubr.f32.gmra.mrb[0].mxu0 %v2603
        %v2671 = vpop.f32.mrb[0].mxu0
        %v2672 = vadd.f32 0.0, %v2671
        %v2673 = vpop.f32.mrb[0].mxu0
        %2674 = vdwg.mxu0
        %2675 = vrot.lane.b32.xlu0 %v2081, 104
        %v2676 = vpop.permute.xlu0 %2675
        %2677 = vrot.lane.b32.xlu0 %v2158, 104
        %v2678 = vpop.permute.xlu0 %2677
        %v2679 = vsel %vm1023, %v2676, 0
        %v2681 = vsel %vm1023, %v2678, 0
        %2683 = vmatprep.subr.mxu0 0.0
        %2684 = vmatpush1.xpose.msra.mxu0 %v2681
        %2685 = vmatprep.subr.mxu0 0.0
        %2686 = vmatpush1.xpose.msra.mxu0 0.0
        %2687 = vmatprep.subr.mxu0 0.0
        %2688 = vmatpush1.xpose.msra.mxu0 0.0
        %2689 = vmatprep.subr.mxu0 0.0
        %2690 = vmatpush1.xpose.msra.mxu0 0.0
        %2691 = vmatprep.subr.mxu0 0.0
        %2692 = vmatpush1.xpose.msra.mxu0 0.0
        %2693 = vmatprep.subr.mxu0 0.0
        %2694 = vmatpush1.xpose.msra.mxu0 0.0
        %2695 = vmatprep.subr.mxu0 0.0
        %2696 = vmatpush1.xpose.msra.mxu0 0.0
        %2697 = vmatprep.subr.mxu0 0.0
        %2698 = vmatpush1.xpose.msra.mxu0 0.0
        %2699 = vmatprep.subr.mxu0 0.0
        %2700 = vmatpush1.xpose.msra.mxu0 0.0
        %2701 = vmatprep.subr.mxu0 0.0
        %2702 = vmatpush1.xpose.msra.mxu0 0.0
        %2703 = vmatprep.subr.mxu0 0.0
        %2704 = vmatpush1.xpose.msra.mxu0 0.0
        %2705 = vmatprep.subr.mxu0 0.0
        %2706 = vmatpush1.xpose.msra.mxu0 0.0
        %2707 = vmatprep.subr.mxu0 0.0
        %2708 = vmatpush1.xpose.msra.mxu0 0.0
        %2709 = vmatprep.subr.mxu0 0.0
        %2710 = vmatpush1.xpose.msra.mxu0 0.0
        %2711 = vmatprep.subr.mxu0 0.0
        %2712 = vmatpush1.xpose.msra.mxu0 0.0
        %2713 = vmatprep.subr.mxu0 0.0
        %2714 = vmatpush1.xpose.msra.mxu0 0.0
        %2715 = vmatprep.subr.mxu0 0.0
        %2716 = vmatpush1.xpose.msra.mxu0 0.0
        %2717 = vmatprep.subr.mxu0 0.0
        %2718 = vmatpush1.xpose.msra.mxu0 0.0
        %2719 = vmatprep.subr.mxu0 0.0
        %2720 = vmatpush1.xpose.msra.mxu0 0.0
        %2721 = vmatprep.subr.mxu0 0.0
        %2722 = vmatpush1.xpose.msra.mxu0 0.0
        %2723 = vmatprep.subr.mxu0 0.0
        %2724 = vmatpush1.xpose.msra.mxu0 0.0
        %2725 = vmatprep.subr.mxu0 0.0
        %2726 = vmatpush1.xpose.msra.mxu0 0.0
        %2727 = vmatprep.subr.mxu0 0.0
        %2728 = vmatpush1.xpose.msra.mxu0 0.0
        %2729 = vmatprep.subr.mxu0 0.0
        %2730 = vmatpush1.xpose.msra.mxu0 0.0
        %2731 = vmatprep.subr.mxu0 0.0
        %2732 = vmatpush1.xpose.msra.mxu0 0.0
        %2733 = vmatprep.subr.mxu0 0.0
        %2734 = vmatpush1.xpose.msra.mxu0 0.0
        %2735 = vmatprep.subr.mxu0 0.0
        %2736 = vmatpush1.xpose.msra.mxu0 0.0
        %2737 = vmatprep.subr.mxu0 0.0
        %2738 = vmatpush1.xpose.msra.mxu0 0.0
        %2739 = vmatprep.subr.mxu0 0.0
        %2740 = vmatpush1.xpose.msra.mxu0 0.0
        %2741 = vmatprep.subr.mxu0 0.0
        %2742 = vmatpush1.xpose.msra.mxu0 0.0
        %2743 = vmatprep.subr.mxu0 0.0
        %2744 = vmatpush1.xpose.msra.mxu0 0.0
        %2745 = vmatprep.subr.mxu0 0.0
        %2746 = vmatpush1.xpose.msra.mxu0 0.0
        %2747 = vmatprep.mubr.f32.mxu0 0.0
        %2748 = vmatmul.mubr.f32.gmra.mrb[0].mxu0 %v2679
        %v2749 = vpop.f32.mrb[0].mxu0
        %v2750 = vadd.f32 0.0, %v2749
        %v2751 = vpop.f32.mrb[0].mxu0
        %2752 = vdwg.mxu0
        %v2753 = vmul.f32 %v2750, 0.35355338
        %v2754 = vsel %vm1023, %v2753, -inf
        %2755 = vmax.xlane.f32.xlu0 %v2754
        %v2756 = vpop.xlane.xlu0 %2755
        %v2757 = vsub.f32 %v2753, %v2756
        %v2758 = vmul.f32 %v2757, 1.442695
        %v2759 = vpow.pop %v2758
        %v2760 = vsel %vm1023, %v2759, 0.0
        %2761 = vadd.xlane.f32.xlu0 %v2760
        %v2762 = vpop.xlane.xlu0 %2761
        %v2763 = vrcp.pop %v2762
        %v2764 = vmul.f32 %v2759, %v2763
        %2765 = vrot.lane.b32.xlu0 %v2158, 72
        %v2766 = vpop.permute.xlu0 %2765
        %v2769 = vsel %vm1023, %v2764, 0
        %2771 = vmatprep.subr.mxu0 0.0
        %2772 = vmatpush1.msra.mxu0 %v2766
        %2773 = vmatprep.subr.mxu0 0.0
        %2774 = vmatpush1.msra.mxu0 0.0
        %2775 = vmatprep.subr.mxu0 0.0
        %2776 = vmatpush1.msra.mxu0 0.0
        %2777 = vmatprep.subr.mxu0 0.0
        %2778 = vmatpush1.msra.mxu0 0.0
        %2779 = vmatprep.subr.mxu0 0.0
        %2780 = vmatpush1.msra.mxu0 0.0
        %2781 = vmatprep.subr.mxu0 0.0
        %2782 = vmatpush1.msra.mxu0 0.0
        %2783 = vmatprep.subr.mxu0 0.0
        %2784 = vmatpush1.msra.mxu0 0.0
        %2785 = vmatprep.subr.mxu0 0.0
        %2786 = vmatpush1.msra.mxu0 0.0
        %2787 = vmatprep.subr.mxu0 0.0
        %2788 = vmatpush1.msra.mxu0 0.0
        %2789 = vmatprep.subr.mxu0 0.0
        %2790 = vmatpush1.msra.mxu0 0.0
        %2791 = vmatprep.subr.mxu0 0.0
        %2792 = vmatpush1.msra.mxu0 0.0
        %2793 = vmatprep.subr.mxu0 0.0
        %2794 = vmatpush1.msra.mxu0 0.0
        %2795 = vmatprep.subr.mxu0 0.0
        %2796 = vmatpush1.msra.mxu0 0.0
        %2797 = vmatprep.subr.mxu0 0.0
        %2798 = vmatpush1.msra.mxu0 0.0
        %2799 = vmatprep.subr.mxu0 0.0
        %2800 = vmatpush1.msra.mxu0 0.0
        %2801 = vmatprep.subr.mxu0 0.0
        %2802 = vmatpush1.msra.mxu0 0.0
        %2803 = vmatprep.subr.mxu0 0.0
        %2804 = vmatpush1.msra.mxu0 0.0
        %2805 = vmatprep.subr.mxu0 0.0
        %2806 = vmatpush1.msra.mxu0 0.0
        %2807 = vmatprep.subr.mxu0 0.0
        %2808 = vmatpush1.msra.mxu0 0.0
        %2809 = vmatprep.subr.mxu0 0.0
        %2810 = vmatpush1.msra.mxu0 0.0
        %2811 = vmatprep.subr.mxu0 0.0
        %2812 = vmatpush1.msra.mxu0 0.0
        %2813 = vmatprep.subr.mxu0 0.0
        %2814 = vmatpush1.msra.mxu0 0.0
        %2815 = vmatprep.subr.mxu0 0.0
        %2816 = vmatpush1.msra.mxu0 0.0
        %2817 = vmatprep.subr.mxu0 0.0
        %2818 = vmatpush1.msra.mxu0 0.0
        %2819 = vmatprep.subr.mxu0 0.0
        %2820 = vmatpush1.msra.mxu0 0.0
        %2821 = vmatprep.subr.mxu0 0.0
        %2822 = vmatpush1.msra.mxu0 0.0
        %2823 = vmatprep.subr.mxu0 0.0
        %2824 = vmatpush1.msra.mxu0 0.0
        %2825 = vmatprep.subr.mxu0 0.0
        %2826 = vmatpush1.msra.mxu0 0.0
        %2827 = vmatprep.subr.mxu0 0.0
        %2828 = vmatpush1.msra.mxu0 0.0
        %2829 = vmatprep.subr.mxu0 0.0
        %2830 = vmatpush1.msra.mxu0 0.0
        %2831 = vmatprep.subr.mxu0 0.0
        %2832 = vmatpush1.msra.mxu0 0.0
        %2833 = vmatprep.subr.mxu0 0.0
        %2834 = vmatpush1.msra.mxu0 0.0
        %2835 = vmatprep.mubr.f32.mxu0 0.0
        %2836 = vmatmul.mubr.f32.gmra.mrb[0].mxu0 %v2769
        %v2837 = vpop.f32.mrb[0].mxu0
        %v2838 = vadd.f32 0.0, %v2837
        %v2839 = vpop.f32.mrb[0].mxu0
        %2840 = vdwg.mxu0
        %2842 = vrot.lane.b32.xlu0 %v2506, 8
        %v2843 = vpop.permute.xlu0 %2842
        %2846 = vrot.lane.b32.xlu0 %v2672, 16
        %v2847 = vpop.permute.xlu0 %2846
        %2850 = vrot.lane.b32.xlu0 %v2838, 24
        %v2851 = vpop.permute.xlu0 %2850
        %v2853 = vsel %vm1023, %v2340, %v2843
        %v2854 = vsel %vm1697, %v2853, %v2847
        %v2855 = vsel %vm1699, %v2854, %v2851
        %v2857 = vsel %vm894, %v2855, 0
        %2859 = vmatprep.subr.mxu0 0.0
        %2860 = vmatpush1.msra.mxu0 %v2161
        %2861 = vmatprep.subr.mxu0 0.0
        %2862 = vmatpush1.msra.mxu0 %v2162
        %2863 = vmatprep.subr.mxu0 0.0
        %2864 = vmatpush1.msra.mxu0 %v2163
        %2865 = vmatprep.subr.mxu0 0.0
        %2866 = vmatpush1.msra.mxu0 %v2164
        %2867 = vmatprep.subr.mxu0 0.0
        %2868 = vmatpush1.msra.mxu0 0.0
        %2869 = vmatprep.subr.mxu0 0.0
        %2870 = vmatpush1.msra.mxu0 0.0
        %2871 = vmatprep.subr.mxu0 0.0
        %2872 = vmatpush1.msra.mxu0 0.0
        %2873 = vmatprep.subr.mxu0 0.0
        %2874 = vmatpush1.msra.mxu0 0.0
        %2875 = vmatprep.subr.mxu0 0.0
        %2876 = vmatpush1.msra.mxu0 0.0
        %2877 = vmatprep.subr.mxu0 0.0
        %2878 = vmatpush1.msra.mxu0 0.0
        %2879 = vmatprep.subr.mxu0 0.0
        %2880 = vmatpush1.msra.mxu0 0.0
        %2881 = vmatprep.subr.mxu0 0.0
        %2882 = vmatpush1.msra.mxu0 0.0
        %2883 = vmatprep.subr.mxu0 0.0
        %2884 = vmatpush1.msra.mxu0 0.0
        %2885 = vmatprep.subr.mxu0 0.0
        %2886 = vmatpush1.msra.mxu0 0.0
        %2887 = vmatprep.subr.mxu0 0.0
        %2888 = vmatpush1.msra.mxu0 0.0
        %2889 = vmatprep.subr.mxu0 0.0
        %2890 = vmatpush1.msra.mxu0 0.0
        %2891 = vmatprep.subr.mxu0 0.0
        %2892 = vmatpush1.msra.mxu0 0.0
        %2893 = vmatprep.subr.mxu0 0.0
        %2894 = vmatpush1.msra.mxu0 0.0
        %2895 = vmatprep.subr.mxu0 0.0
        %2896 = vmatpush1.msra.mxu0 0.0
        %2897 = vmatprep.subr.mxu0 0.0
        %2898 = vmatpush1.msra.mxu0 0.0
        %2899 = vmatprep.subr.mxu0 0.0
        %2900 = vmatpush1.msra.mxu0 0.0
        %2901 = vmatprep.subr.mxu0 0.0
        %2902 = vmatpush1.msra.mxu0 0.0
        %2903 = vmatprep.subr.mxu0 0.0
        %2904 = vmatpush1.msra.mxu0 0.0
        %2905 = vmatprep.subr.mxu0 0.0
        %2906 = vmatpush1.msra.mxu0 0.0
        %2907 = vmatprep.subr.mxu0 0.0
        %2908 = vmatpush1.msra.mxu0 0.0
        %2909 = vmatprep.subr.mxu0 0.0
        %2910 = vmatpush1.msra.mxu0 0.0
        %2911 = vmatprep.subr.mxu0 0.0
        %2912 = vmatpush1.msra.mxu0 0.0
        %2913 = vmatprep.subr.mxu0 0.0
        %2914 = vmatpush1.msra.mxu0 0.0
        %2915 = vmatprep.subr.mxu0 0.0
        %2916 = vmatpush1.msra.mxu0 0.0
        %2917 = vmatprep.subr.mxu0 0.0
        %2918 = vmatpush1.msra.mxu0 0.0
        %2919 = vmatprep.subr.mxu0 0.0
        %2920 = vmatpush1.msra.mxu0 0.0
        %2921 = vmatprep.subr.mxu0 0.0
        %2922 = vmatpush1.msra.mxu0 0.0
        %2923 = vmatprep.mubr.f32.mxu0 0.0
        %2924 = vmatmul.mubr.f32.gmra.mrb[0].mxu0 %v2857
        %v2925 = vpop.f32.mrb[0].mxu0
        %v2926 = vadd.f32 0.0, %v2925
        %v2927 = vpop.f32.mrb[0].mxu0
        %2928 = vdwg.mxu0
        %v2929 = vadd.f32 %v2006, %v2926
        %v2930 = vsel %vm894, %v2929, 0.0
        %2931 = vadd.xlane.f32.xlu0 %v2930
        %v2932 = vpop.xlane.xlu0 %2931
        %v2933 = vmul.f32 %v2932, %v898
        %v2934 = vsub.f32 %v2929, %v2933
        %v2935 = vmul.f32 %v2934, %v2934
        %v2936 = vsel %vm894, %v2935, 0.0
        %2937 = vadd.xlane.f32.xlu0 %v2936
        %v2938 = vpop.xlane.xlu0 %2937
        %v2939 = vmul.f32 %v2938, %v898
        %v2940 = vadd.f32 %v2939, 1e-05
        %v2941 = vrsqrt.pop %v2940
        %v2942 = vmul.f32 %v2934, %v2941
        %v2944 = vlaneseq
        %v2945 = vshrl.u32 %v2944, 7
        %v2946 = vsub.s32 0, %v2945
        %v2947 = vrot.slane %v2175, %v2946
        %v2949 = vmul.f32 %v2942, %v2947
        %v2951 = vlaneseq
        %v2952 = vshrl.u32 %v2951, 7
        %v2953 = vsub.s32 0, %v2952
        %v2954 = vrot.slane %v2176, %v2953
        %v2956 = vadd.f32 %v2949, %v2954
        %v2958 = vlaneseq
        %v2959 = vshrl.u32 %v2958, 7
        %v2960 = vsub.s32 0, %v2959
        %v2961 = vrot.slane %v2169, %v2960
        %v2964 = vsel %vm894, %v2956, 0
        %2966 = vmatprep.subr.mxu0 0.0
        %2967 = vmatpush1.msra.mxu0 %v2165
        %2968 = vmatprep.subr.mxu0 0.0
        %2969 = vmatpush1.msra.mxu0 %v2166
        %2970 = vmatprep.subr.mxu0 0.0
        %2971 = vmatpush1.msra.mxu0 %v2167
        %2972 = vmatprep.subr.mxu0 0.0
        %2973 = vmatpush1.msra.mxu0 %v2168
        %2974 = vmatprep.subr.mxu0 0.0
        %2975 = vmatpush1.msra.mxu0 0.0
        %2976 = vmatprep.subr.mxu0 0.0
        %2977 = vmatpush1.msra.mxu0 0.0
        %2978 = vmatprep.subr.mxu0 0.0
        %2979 = vmatpush1.msra.mxu0 0.0
        %2980 = vmatprep.subr.mxu0 0.0
        %2981 = vmatpush1.msra.mxu0 0.0
        %2982 = vmatprep.subr.mxu0 0.0
        %2983 = vmatpush1.msra.mxu0 0.0
        %2984 = vmatprep.subr.mxu0 0.0
        %2985 = vmatpush1.msra.mxu0 0.0
        %2986 = vmatprep.subr.mxu0 0.0
        %2987 = vmatpush1.msra.mxu0 0.0
        %2988 = vmatprep.subr.mxu0 0.0
        %2989 = vmatpush1.msra.mxu0 0.0
        %2990 = vmatprep.subr.mxu0 0.0
        %2991 = vmatpush1.msra.mxu0 0.0
        %2992 = vmatprep.subr.mxu0 0.0
        %2993 = vmatpush1.msra.mxu0 0.0
        %2994 = vmatprep.subr.mxu0 0.0
        %2995 = vmatpush1.msra.mxu0 0.0
        %2996 = vmatprep.subr.mxu0 0.0
        %2997 = vmatpush1.msra.mxu0 0.0
        %2998 = vmatprep.subr.mxu0 0.0
        %2999 = vmatpush1.msra.mxu0 0.0
        %3000 = vmatprep.subr.mxu0 0.0
        %3001 = vmatpush1.msra.mxu0 0.0
        %3002 = vmatprep.subr.mxu0 0.0
        %3003 = vmatpush1.msra.mxu0 0.0
        %3004 = vmatprep.subr.mxu0 0.0
        %3005 = vmatpush1.msra.mxu0 0.0
        %3006 = vmatprep.subr.mxu0 0.0
        %3007 = vmatpush1.msra.mxu0 0.0
        %3008 = vmatprep.subr.mxu0 0.0
        %3009 = vmatpush1.msra.mxu0 0.0
        %3010 = vmatprep.subr.mxu0 0.0
        %3011 = vmatpush1.msra.mxu0 0.0
        %3012 = vmatprep.subr.mxu0 0.0
        %3013 = vmatpush1.msra.mxu0 0.0
        %3014 = vmatprep.subr.mxu0 0.0
        %3015 = vmatpush1.msra.mxu0 0.0
        %3016 = vmatprep.subr.mxu0 0.0
        %3017 = vmatpush1.msra.mxu0 0.0
        %3018 = vmatprep.subr.mxu0 0.0
        %3019 = vmatpush1.msra.mxu0 0.0
        %3020 = vmatprep.subr.mxu0 0.0
        %3021 = vmatpush1.msra.mxu0 0.0
        %3022 = vmatprep.subr.mxu0 0.0
        %3023 = vmatpush1.msra.mxu0 0.0
        %3024 = vmatprep.subr.mxu0 0.0
        %3025 = vmatpush1.msra.mxu0 0.0
        %3026 = vmatprep.subr.mxu0 0.0
        %3027 = vmatpush1.msra.mxu0 0.0
        %3028 = vmatprep.subr.mxu0 0.0
        %3029 = vmatpush1.msra.mxu0 0.0
        %3030 = vmatprep.mubr.f32.mxu0 0.0
        %3031 = vmatmul.mubr.f32.gmra.mrb[0].mxu0 %v2964
        %v3032 = vpop.f32.mrb[0].mxu0
        %v3033 = vadd.f32 %v2961, %v3032
        %v3034 = vpop.f32.mrb[0].mxu0
        %3035 = vdwg.mxu0
        %v3036 = vmul.f32 %v3033, 0.5
        %v3037 = vmul.f32 %v3033, 0.044715
        %v3038 = vmul.f32 %v3037, %v3033
        %v3039 = vmul.f32 %v3038, %v3033
        %v3040 = vadd.f32 %v3033, %v3039
        %v3041 = vmul.f32 %v3040, 0.7978846
        %v3042 = vtanh.pop %v3041
        %v3043 = vadd.f32 %v3042, 1.0
        %v3044 = vmul.f32 %v3036, %v3043
        %v3046 = vlaneseq
        %v3047 = vshrl.u32 %v3046, 7
        %v3048 = vsub.s32 0, %v3047
        %v3049 = vrot.slane %v2174, %v3048
        %v3052 = vsel %vm894, %v3044, 0
        %3054 = vmatprep.subr.mxu0 0.0
        %3055 = vmatpush1.msra.mxu0 %v2170
        %3056 = vmatprep.subr.mxu0 0.0
        %3057 = vmatpush1.msra.mxu0 %v2171
        %3058 = vmatprep.subr.mxu0 0.0
        %3059 = vmatpush1.msra.mxu0 %v2172
        %3060 = vmatprep.subr.mxu0 0.0
        %3061 = vmatpush1.msra.mxu0 %v2173
        %3062 = vmatprep.subr.mxu0 0.0
        %3063 = vmatpush1.msra.mxu0 0.0
        %3064 = vmatprep.subr.mxu0 0.0
        %3065 = vmatpush1.msra.mxu0 0.0
        %3066 = vmatprep.subr.mxu0 0.0
        %3067 = vmatpush1.msra.mxu0 0.0
        %3068 = vmatprep.subr.mxu0 0.0
        %3069 = vmatpush1.msra.mxu0 0.0
        %3070 = vmatprep.subr.mxu0 0.0
        %3071 = vmatpush1.msra.mxu0 0.0
        %3072 = vmatprep.subr.mxu0 0.0
        %3073 = vmatpush1.msra.mxu0 0.0
        %3074 = vmatprep.subr.mxu0 0.0
        %3075 = vmatpush1.msra.mxu0 0.0
        %3076 = vmatprep.subr.mxu0 0.0
        %3077 = vmatpush1.msra.mxu0 0.0
        %3078 = vmatprep.subr.mxu0 0.0
        %3079 = vmatpush1.msra.mxu0 0.0
        %3080 = vmatprep.subr.mxu0 0.0
        %3081 = vmatpush1.msra.mxu0 0.0
        %3082 = vmatprep.subr.mxu0 0.0
        %3083 = vmatpush1.msra.mxu0 0.0
        %3084 = vmatprep.subr.mxu0 0.0
        %3085 = vmatpush1.msra.mxu0 0.0
        %3086 = vmatprep.subr.mxu0 0.0
        %3087 = vmatpush1.msra.mxu0 0.0
        %3088 = vmatprep.subr.mxu0 0.0
        %3089 = vmatpush1.msra.mxu0 0.0
        %3090 = vmatprep.subr.mxu0 0.0
        %3091 = vmatpush1.msra.mxu0 0.0
        %3092 = vmatprep.subr.mxu0 0.0
        %3093 = vmatpush1.msra.mxu0 0.0
        %3094 = vmatprep.subr.mxu0 0.0
        %3095 = vmatpush1.msra.mxu0 0.0
        %3096 = vmatprep.subr.mxu0 0.0
        %3097 = vmatpush1.msra.mxu0 0.0
        %3098 = vmatprep.subr.mxu0 0.0
        %3099 = vmatpush1.msra.mxu0 0.0
        %3100 = vmatprep.subr.mxu0 0.0
        %3101 = vmatpush1.msra.mxu0 0.0
        %3102 = vmatprep.subr.mxu0 0.0
        %3103 = vmatpush1.msra.mxu0 0.0
        %3104 = vmatprep.subr.mxu0 0.0
        %3105 = vmatpush1.msra.mxu0 0.0
        %3106 = vmatprep.subr.mxu0 0.0
        %3107 = vmatpush1.msra.mxu0 0.0
        %3108 = vmatprep.subr.mxu0 0.0
        %3109 = vmatpush1.msra.mxu0 0.0
        %3110 = vmatprep.subr.mxu0 0.0
        %3111 = vmatpush1.msra.mxu0 0.0
        %3112 = vmatprep.subr.mxu0 0.0
        %3113 = vmatpush1.msra.mxu0 0.0
        %3114 = vmatprep.subr.mxu0 0.0
        %3115 = vmatpush1.msra.mxu0 0.0
        %3116 = vmatprep.subr.mxu0 0.0
        %3117 = vmatpush1.msra.mxu0 0.0
        %3118 = vmatprep.mubr.f32.mxu0 0.0
        %3119 = vmatmul.mubr.f32.gmra.mrb[0].mxu0 %v3052
        %v3120 = vpop.f32.mrb[0].mxu0
        %v3121 = vadd.f32 %v3049, %v3120
        %v3122 = vpop.f32.mrb[0].mxu0
        %3123 = vdwg.mxu0
        %v3124 = vadd.f32 %v2956, %v3121
        %v3125 = vsel %vm894, %v3124, 0.0
        %3126 = vadd.xlane.f32.xlu0 %v3125
        %v3127 = vpop.xlane.xlu0 %3126
        %v3128 = vmul.f32 %v3127, %v898
        %v3129 = vsub.f32 %v3124, %v3128
        %v3130 = vmul.f32 %v3129, %v3129
        %v3131 = vsel %vm894, %v3130, 0.0
        %3132 = vadd.xlane.f32.xlu0 %v3131
        %v3133 = vpop.xlane.xlu0 %3132
        %v3134 = vmul.f32 %v3133, %v898
        %v3135 = vadd.f32 %v3134, 1e-05
        %v3136 = vrsqrt.pop %v3135
        %v3137 = vmul.f32 %v3129, %v3136
        %v3139 = vlaneseq
        %v3140 = vshrl.u32 %v3139, 7
        %v3141 = vsub.s32 0, %v3140
        %v3142 = vrot.slane %v2177, %v3141
        %v3144 = vmul.f32 %v3137, %v3142
        %v3146 = vlaneseq
        %v3147 = vshrl.u32 %v3146, 7
        %v3148 = vsub.s32 0, %v3147
        %v3149 = vrot.slane %v2178, %v3148
        %v3151 = vadd.f32 %v3144, %v3149
        %v3152 = vsel %vm894, %v3151, 0.0
        %v3153 = vrot.slane %v3152, 4
        %v3154 = vadd.f32 %v3152, %v3153
        %v3155 = vrot.slane %v3154, 2
        %v3156 = vadd.f32 %v3154, %v3155
        %v3157 = vrot.slane %v3156, 1
        %v3158 = vadd.f32 %v3156, %v3157
        %v3159 = vmul.f32 %v3158, %v2004
        %3161 = vrot.lane.b32.xlu0 %v3159, 32
        %v3162 = vpop.permute.xlu0 %3161
        %v3164 = vsel %vm894, %v2005, %v3162
        %vm3165 = vcmask 516096
        %3166 = vst.msk [vmem:[%s882] sm:$0x1] %vm3165, %v3164
        %s3167 = sand.u32 %s608, 1
        %s3168 = scalar_lea.sflag [#allocation4], %s3167
        %s3169 = sand.u32 %s608, 1
        %s3170 = scalar_lea.vmem [#allocation14], %s3169
        // Predicated region
        $region153: #{text_image_transformer.1} parent=123 // pred_check
          %p3171 = pneg %p618
        $region154: #{text_image_transformer.1} parent=123 // pred_check_branch
          %3173 = sbr.rel (%p3171) target = $region156
        $region155: #{text_image_transformer.1} parent=123 // pred_region
          %s3175 = ssub.s32 16, 16
          %3176 = vsyncadd %s3168, %s3175
          %s3177 = smul.addr %s44, 16
          %s3178 = scalar_lea.hbm %s26, %s3177
          %s3180 = sshll.u32 %s3170, 4
          %s3181 = int_to_ptr.vmem [resolvable:$true] %s3180
          %3183 = dma.vmem_to_hbm [thread:$0]  %s3181, 16, %s3178, %s3168
        $region156: #{text_image_transformer.1} parent=123 // pred_fallthru
          _
      $region124: #{text_image_transformer.1} parent=5 // pred_fallthru
        _
      %p3184 = scmp.le.s32.totalorder 2, %s39
      // Predicated region
      $region157: #{text_image_transformer.1} parent=5 // pred_check
        %p3185 = pneg %p3184
      $region158: #{text_image_transformer.1} parent=5 // pred_check_branch
        %3187 = sbr.rel (%p3185) target = $region160
      $region159: #{text_image_transformer.1} parent=5 // pred_region
        %s3188 = ssub.s32 %s39, 2
        // Predicated region
        $region161: #{text_image_transformer.1} parent=159 // pred_check
          %p3189 = pneg %p624
        $region162: #{text_image_transformer.1} parent=159 // pred_check_branch
          %3191 = sbr.rel (%p3189) target = $region164
        $region163: #{text_image_transformer.1} parent=159 // pred_region
          %s3192 = sand.u32 %s609, 1
          %s3193 = scalar_lea.sflag [#allocation4], %s3192
          %s3194 = sand.u32 %s609, 1
          %s3195 = scalar_lea.vmem [#allocation14], %s3194
          %3196 = dma.done %s3193, 16
        $region164: #{text_image_transformer.1} parent=159 // pred_fallthru
          _
      $region160: #{text_image_transformer.1} parent=5 // pred_fallthru
        _
    $region6: #{text_image_transformer.1} parent=1 // loop_footer
      %s43 = sadd.s32 1, %s39
    $region7: #{text_image_transformer.1} parent=1 // loop_footer_branch
      %38 = sbr.rel target = $region3
    $region8: #{text_image_transformer.1} parent=1 // loop_exit
      _
    %3197 = vsyncpa [#allocation3], 1
    %s3198 = scalar_lea.sflag [#allocation3], 1
    %3199 = vsyncpa %s3198, 1
    %3200 = vsyncpa [#allocation6], 1
    %3201 = vsyncpa [#allocation9], 1
    %3202 = vsyncpa [#allocation12], 1
    %3203 = vsyncpa [#allocation4], 1
    %s3204 = scalar_lea.sflag [#allocation4], 1
    %3205 = vsyncpa %s3204, 1

</llo_original>
